<compile_context>
chip_gen: v7x
topology: tpu7x:2x2x1
jax: 0.10.0
libtpu: 0.0.40
codegen_flags: <defaults>
</compile_context>

<pallas_src>
import functools

import jax
import jax.numpy as jnp
from jax import lax
from jax.experimental import pallas as pl
from jax.experimental.pallas import tpu as pltpu

BN_EPS = 1e-5


# ----------------------------- Pallas kernel ------------------------------- #

def _conv_kernel(xprev_ref, xctr_ref, xnext_ref, scale_ref, shift_ref, bias_ref,
                 w_ref, out_ref, *rest, apply_act, emit_stats, td, h):
    """One grid step: TD output depth slices of a 3x3x3 'same' conv (+ fused BN/ReLU).

    xprev_ref : (1, 1, H, W*Cin)    depth plane d0-1 (clamped; zeroed in-kernel when d0==0)
    xctr_ref  : (1, TD, H, W*Cin)   depth planes d0 .. d0+TD-1
    xnext_ref : (1, 1, H, W*Cin)    depth plane d0+TD (clamped; zeroed at volume end)
    scale_ref : (1, W*Cin)          folded per-lane BN scale  (unused unless apply_act)
    shift_ref : (1, W*Cin)          folded per-lane BN shift  (unused unless apply_act)
    bias_ref  : (1, W*Cout)         folded conv bias
    w_ref     : (9, W*Cin, W*Cout)  Toeplitz-banded weights, one (kd, kh) tap per leading idx
    out_ref   : (1, TD, H, W*Cout)  output depth slices (folded, lane-dense)
    stats_ref : (1, 1, 2, W*Cout)   per-step [sum; sum-of-squares] of the output (conv1 only)
    xpad_ref  : (TD+2, H+2, W*Cin)  VMEM halo scratch (h-padding rows + depth halo planes)
    """
    if emit_stats:
        stats_ref, xpad_ref = rest
    else:
        (xpad_ref,) = rest

    db = pl.program_id(1)
    nblk = pl.num_programs(1)
    kin = xctr_ref.shape[-1]
    kout = w_ref.shape[-1]

    if apply_act:
        scale = scale_ref[...]                       # (1, kin) broadcasts over rows
        shift = shift_ref[...]
        act = lambda p: jnp.maximum(p * scale + shift, 0.0)
    else:
        act = lambda p: p

    zrow = jnp.zeros((1, 1, kin), jnp.float32)

    def store_plane(idx, val):                       # val: (H, kin); idx static
        # Only the two h-padding rows are zeroed -- never the whole scratch.
        xpad_ref[idx:idx + 1, 0:1, :] = zrow
        xpad_ref[idx:idx + 1, h + 1:h + 2, :] = zrow
        xpad_ref[idx:idx + 1, 1:h + 1, :] = val.reshape(1, h, kin)

    # Depth halo planes.  Out-of-volume planes must be exactly zero ('same' padding of the
    # *post-activation* tensor), so zero AFTER the affine+ReLU, not before.
    xc = xctr_ref[...]                               # (1, td, h, kin)
    prev = act(xprev_ref[...].reshape(h, kin))
    store_plane(0, jnp.where(db > 0, prev, jnp.zeros_like(prev)))
    for t in range(td):
        store_plane(1 + t, act(xc[0, t]))
    nxt = act(xnext_ref[...].reshape(h, kin))
    store_plane(td + 1, jnp.where(db < nblk - 1, nxt, jnp.zeros_like(nxt)))

    # 9 lane-dense tap matmuls straight from the halo slab (no im2col scratch).  The banded
    # weight folds the 3 kw taps + width padding into K, so kw needs no data movement at all.
    acc = jnp.zeros((td * h, kout), jnp.float32)
    for kd in range(3):
        for kh in range(3):
            lhs = xpad_ref[kd:kd + td, kh:kh + h, :].reshape(td * h, kin)
            acc = acc + jnp.dot(lhs, w_ref[kd * 3 + kh],
                                preferred_element_type=jnp.float32)

    y = acc + bias_ref[...]                          # (td*h, kout)
    out_ref[...] = y.reshape(1, td, h, kout).astype(out_ref.dtype)

    if emit_stats:
        # Fused BatchNorm statistics: per-lane partials over this block; the tiny (W, Cout)
        # fold + mean/var finish happen in plain XLA (no extra pass over y in HBM).
        stats_ref[0:1, 0:1, 0:1, :] = jnp.sum(y, axis=0, keepdims=True).reshape(1, 1, 1, kout)
        stats_ref[0:1, 0:1, 1:2, :] = jnp.sum(y * y, axis=0, keepdims=True).reshape(1, 1, 1, kout)


# ------------------------------- wrappers ----------------------------------- #

def _fold_weights(w_pt, w_len):
    """(Cout, Cin, 3, 3, 3) PyTorch weights -> (9, W*Cin, W*Cout) Toeplitz-banded weights.

    wbig[kd*3+kh, w_in*Cin+ci, w_out*Cout+co] = w_pt[co, ci, kd, kh, w_in - w_out + 1]
    when |w_in - w_out| <= 1 (else 0), folding the kw taps and the width-direction 'same'
    zero padding into the matmul contraction.
    """
    cout, cin = w_pt.shape[0], w_pt.shape[1]
    w_t = jnp.transpose(w_pt.astype(jnp.float32), (2, 3, 4, 1, 0))    # (kd, kh, kw, Cin, Cout)
    w_in = jnp.arange(w_len)[:, None, None]
    w_out = jnp.arange(w_len)[None, :, None]
    kw = jnp.arange(3)[None, None, :]
    band = (w_in == w_out + kw - 1).astype(jnp.float32)               # (W, W, 3)
    wbig = jnp.einsum('vwk,dhkio->dhviwo', band, w_t)                 # (3,3,W,Cin,W,Cout)
    return wbig.reshape(9, w_len * cin, w_len * cout)


def _conv3d_folded(x_f, w_pt, b, scale=None, shift=None, emit_stats=False):
    """(optional fused per-channel affine + ReLU) -> Conv3d(k=3, 'same'), folded layout.

    x_f  : (N, D, H, W*Cin) float32, lane-folded channels-last
    w_pt : (Cout, Cin, 3, 3, 3) PyTorch conv weight layout;  b : (Cout,)
    scale/shift : optional (Cin,) affine applied with ReLU before the conv (fused BN+ReLU)
    returns (N, D, H, W*Cout) [, stats (N, D//TD, 2, W*Cout)]
    """
    n, dd, hh, kin = x_f.shape
    cout, cin = w_pt.shape[0], w_pt.shape[1]
    assert kin % cin == 0
    w_len = kin // cin
    kout = w_len * cout

    td = next(t for t in (4, 2, 1) if dd % t == 0)                    # depth block size
    nblk = dd // td

    apply_act = scale is not None
    if scale is None:
        scale = jnp.ones((cin,), jnp.float32)
        shift = jnp.zeros((cin,), jnp.float32)
    scale_f = jnp.tile(scale.astype(jnp.float32), w_len).reshape(1, kin)
    shift_f = jnp.tile(shift.astype(jnp.float32), w_len).reshape(1, kin)
    bias_f = jnp.tile(b.astype(jnp.float32), w_len).reshape(1, kout)
    w_big = _fold_weights(w_pt, w_len)                                # (9, kin, kout)

    ctr_map = lambda ni, di: (ni, di, 0, 0)
    prev_map = lambda ni, di: (ni, jnp.maximum(di * td - 1, 0), 0, 0)
    next_map = lambda ni, di: (ni, jnp.minimum(di * td + td, dd - 1), 0, 0)

    out_shape = [jax.ShapeDtypeStruct((n, dd, hh, kout), jnp.float32)]
    out_specs = [pl.BlockSpec((1, td, hh, kout), lambda ni, di: (ni, di, 0, 0))]
    if emit_stats:
        out_shape.append(jax.ShapeDtypeStruct((n, nblk, 2, kout), jnp.float32))
        out_specs.append(pl.BlockSpec((1, 1, 2, kout), lambda ni, di: (ni, di, 0, 0)))

    kernel = functools.partial(_conv_kernel, apply_act=apply_act,
                               emit_stats=emit_stats, td=td, h=hh)

    res = pl.pallas_call(
        kernel,
        out_shape=tuple(out_shape),
        grid=(n, nblk),
        in_specs=[
            pl.BlockSpec((1, 1, hh, kin), prev_map),      # clamped prev depth plane
            pl.BlockSpec((1, td, hh, kin), ctr_map),      # TD center depth planes
            pl.BlockSpec((1, 1, hh, kin), next_map),      # clamped next depth plane
            pl.BlockSpec((1, kin), lambda ni, di: (0, 0)),
            pl.BlockSpec((1, kin), lambda ni, di: (0, 0)),
            pl.BlockSpec((1, kout), lambda ni, di: (0, 0)),
            pl.BlockSpec((9, kin, kout), lambda ni, di: (0, 0, 0)),
        ],
        out_specs=tuple(out_specs),
        scratch_shapes=[pltpu.VMEM((td + 2, hh + 2, kin), jnp.float32)],
        compiler_params=pltpu.CompilerParams(
            dimension_semantics=("parallel", "parallel")),
    )(x_f, x_f, x_f, scale_f, shift_f, bias_f, w_big)

    if emit_stats:
        return res[0], res[1]
    return res[0]


def std_conv_block_skip(x_ncdhw, conv1_params, bn_params, conv2_params):
    """StdConvBlockSkip forward: conv1 -> BN(batch stats) -> ReLU -> conv2 (NCDHW in/out)."""
    w1, b1 = conv1_params
    gamma, beta = bn_params
    w2, b2 = conv2_params

    n, cin, dd, hh, ww = x_ncdhw.shape
    c1 = w1.shape[0]
    c2 = w2.shape[0]

    # NCDHW -> folded lane-dense (N, D, H, W*Cin); done once, both convs stay folded.
    x_f = jnp.transpose(x_ncdhw, (0, 2, 3, 4, 1)).reshape(n, dd, hh, ww * cin)

    # Block 1 (ConvBlock): conv only; BN partial sums come out of the same kernel.
    y_f, stats = _conv3d_folded(x_f, w1, b1, emit_stats=True)

    # Finish the (training-mode, biased-variance) BatchNorm statistics in plain XLA.
    count = n * dd * hh * ww
    ssum = stats[:, :, 0, :].sum(axis=(0, 1)).reshape(ww, c1).sum(axis=0)
    ssq = stats[:, :, 1, :].sum(axis=(0, 1)).reshape(ww, c1).sum(axis=0)
    mean = ssum / count
    var = jnp.maximum(ssq / count - mean * mean, 0.0)
    scale = gamma * lax.rsqrt(var + BN_EPS)
    shift = beta - mean * scale

    # Block 2 (StdSingleConvBlock): BN affine + ReLU fused into the conv kernel.
    z_f = _conv3d_folded(y_f, w2, b2, scale=scale, shift=shift)

    z = z_f.reshape(n, dd, hh, ww, c2)
    return jnp.transpose(z, (0, 4, 1, 2, 3))                          # NDHWC -> NCDHW


# --------------------------- pure-JAX reference ------------------------------ #

def _ref_forward(x_ncdhw, conv1_params, bn_params, conv2_params):
    w1, b1 = conv1_params
    gamma, beta = bn_params
    w2, b2 = conv2_params

    def conv(y, w, b):
        wd = jnp.transpose(w, (2, 3, 4, 1, 0))                        # DHWIO
        out = lax.conv_general_dilated(
            y, wd, window_strides=(1, 1, 1), padding="SAME",
            dimension_numbers=("NDHWC", "DHWIO", "NDHWC"))
        return out + b

    x = jnp.transpose(x_ncdhw, (0, 2, 3, 4, 1))
    y = conv(x, w1, b1)
    mean = jnp.mean(y, axis=(0, 1, 2, 3))
    var = jnp.var(y, axis=(0, 1, 2, 3))
    y = jnp.maximum((y - mean) * lax.rsqrt(var + BN_EPS) * gamma + beta, 0.0)
    z = conv(y, w2, b2)
    return jnp.transpose(z, (0, 4, 1, 2, 3))


# ---------------------------------- main ------------------------------------- #

def _conv_params(key, cin, cout):
    # PyTorch init: kaiming_normal_ (fan_in = cin*27, gain=sqrt(2)), bias zeroed.
    std = (2.0 / (cin * 27)) ** 0.5
    w = std * jax.random.normal(key, (cout, cin, 3, 3, 3), jnp.float32)
    return w, jnp.zeros((cout,), jnp.float32)


if __name__ == "__main__":
    key = jax.random.PRNGKey(0)
    k_x, k_w1, k_w2 = jax.random.split(key, 3)

    in_channels, out_channels = 4, 8
    N, D, H, W = 2, 16, 16, 16
    x = jax.random.normal(k_x, (N, in_channels, D, H, W), jnp.float32)   # NCDHW

    conv1 = _conv_params(k_w1, in_channels, out_channels)
    conv2 = _conv_params(k_w2, out_channels, out_channels)
    # Fresh BatchNorm3d: gamma=1, beta=0 (training mode -> batch statistics).
    bn = (jnp.ones((out_channels,), jnp.float32),
          jnp.zeros((out_channels,), jnp.float32))

    fwd = jax.jit(std_conv_block_skip)
    out = jax.block_until_ready(fwd(x, conv1, bn, conv2))

    ref = _ref_forward(x, conv1, bn, conv2)
    if out.shape != (N, out_channels, D, H, W):
        raise AssertionError(f"bad output shape {out.shape}")
    max_err = float(jnp.max(jnp.abs(out - ref)))
    if not bool(jnp.allclose(out, ref, atol=1e-3, rtol=1e-3)):
        raise AssertionError(f"mismatch vs reference, max abs err = {max_err}")
    print("KERNEL_OK")
</pallas_src>

<mosaic_0001>
module attributes {stable_mosaic.version = 11 : i64} {
  func.func @_conv_kernel(%arg0: i32, %arg1: i32, %arg2: memref<1x1x16x64xf32, #tpu.memory_space<vmem>>, %arg3: memref<1x4x16x64xf32, #tpu.memory_space<vmem>>, %arg4: memref<1x1x16x64xf32, #tpu.memory_space<vmem>>, %arg5: memref<1x64xf32, #tpu.memory_space<vmem>>, %arg6: memref<1x64xf32, #tpu.memory_space<vmem>>, %arg7: memref<1x128xf32, #tpu.memory_space<vmem>>, %arg8: memref<9x64x128xf32, #tpu.memory_space<vmem>>, %arg9: memref<1x4x16x128xf32, #tpu.memory_space<vmem>>, %arg10: memref<1x1x2x128xf32, #tpu.memory_space<vmem>>, %arg11: memref<6x18x64xf32, #tpu.memory_space<vmem>>) attributes {dimension_semantics = [#tpu.dimension_semantics<parallel>, #tpu.dimension_semantics<parallel>], iteration_bounds = array<i64: 2, 4>, scalar_prefetch = 0 : i64, scratch_operands = 1 : i64, tpu.core_type = #tpu.core_type<tc>, window_params = [{transform_indices = @transform_0, window_bounds = array<i64: 1, 1, 16, 64>}, {transform_indices = @transform_1, window_bounds = array<i64: 1, 4, 16, 64>}, {transform_indices = @transform_2, window_bounds = array<i64: 1, 1, 16, 64>}, {pipeline_mode = #tpu.pipeline_mode<synchronous>, transform_indices = @transform_3, window_bounds = array<i64: 1, 64>}, {pipeline_mode = #tpu.pipeline_mode<synchronous>, transform_indices = @transform_4, window_bounds = array<i64: 1, 64>}, {pipeline_mode = #tpu.pipeline_mode<synchronous>, transform_indices = @transform_5, window_bounds = array<i64: 1, 128>}, {pipeline_mode = #tpu.pipeline_mode<synchronous>, transform_indices = @transform_6, window_bounds = array<i64: 9, 64, 128>}, {transform_indices = @transform_7, window_bounds = array<i64: 1, 4, 16, 128>}, {transform_indices = @transform_8, window_bounds = array<i64: 1, 1, 2, 128>}]} {
    %cst = arith.constant 0.000000e+00 : f32
    %0 = vector.broadcast %cst : f32 to vector<1x1x64xf32>
    %c0 = arith.constant 0 : index
    %c0_0 = arith.constant 0 : index
    %c0_1 = arith.constant 0 : index
    %c0_2 = arith.constant 0 : index
    %1 = vector.load %arg3[%c0, %c0_0, %c0_1, %c0_2] : memref<1x4x16x64xf32, #tpu.memory_space<vmem>>, vector<1x4x16x64xf32>
    %c0_3 = arith.constant 0 : index
    %c0_4 = arith.constant 0 : index
    %c0_5 = arith.constant 0 : index
    %c0_6 = arith.constant 0 : index
    %2 = vector.load %arg2[%c0_3, %c0_4, %c0_5, %c0_6] : memref<1x1x16x64xf32, #tpu.memory_space<vmem>>, vector<1x1x16x64xf32>
    %3 = vector.shape_cast %2 : vector<1x1x16x64xf32> to vector<16x64xf32>
    %c0_i32 = arith.constant 0 : i32
    %4 = arith.cmpi sgt, %arg1, %c0_i32 : i32
    %cst_7 = arith.constant 0.000000e+00 : f32
    %5 = vector.broadcast %cst_7 : f32 to vector<16x64xf32>
    %6 = arith.select %4, %3, %5 : vector<16x64xf32>
    %c0_8 = arith.constant 0 : index
    %c0_9 = arith.constant 0 : index
    %c0_10 = arith.constant 0 : index
    %7 = vector.load %arg11[%c0_8, %c0_9, %c0_10] : memref<6x18x64xf32, #tpu.memory_space<vmem>>, vector<1x1x64xf32>
    tpu.vector_store %arg11[%c0_8, %c0_9, %c0_10], %0 {strides = array<i32>} : memref<6x18x64xf32, #tpu.memory_space<vmem>>, vector<1x1x64xf32>,
    %c0_11 = arith.constant 0 : index
    %c17 = arith.constant 17 : index
    %c0_12 = arith.constant 0 : index
    %8 = vector.load %arg11[%c0_11, %c17, %c0_12] : memref<6x18x64xf32, #tpu.memory_space<vmem>>, vector<1x1x64xf32>
    tpu.vector_store %arg11[%c0_11, %c17, %c0_12], %0 {strides = array<i32>} : memref<6x18x64xf32, #tpu.memory_space<vmem>>, vector<1x1x64xf32>,
    %9 = vector.shape_cast %6 : vector<16x64xf32> to vector<1x16x64xf32>
    %c0_13 = arith.constant 0 : index
    %c1 = arith.constant 1 : index
    %c0_14 = arith.constant 0 : index
    %10 = vector.load %arg11[%c0_13, %c1, %c0_14] : memref<6x18x64xf32, #tpu.memory_space<vmem>>, vector<1x16x64xf32>
    tpu.vector_store %arg11[%c0_13, %c1, %c0_14], %9 {strides = array<i32>} : memref<6x18x64xf32, #tpu.memory_space<vmem>>, vector<1x16x64xf32>,
    %11 = vector.extract_strided_slice %1 {offsets = [0, 0, 0, 0], sizes = [1, 1, 16, 64], strides = [1, 1, 1, 1]} : vector<1x4x16x64xf32> to vector<1x1x16x64xf32>
    %12 = vector.shape_cast %11 : vector<1x1x16x64xf32> to vector<16x64xf32>
    %c1_15 = arith.constant 1 : index
    %c0_16 = arith.constant 0 : index
    %c0_17 = arith.constant 0 : index
    %13 = vector.load %arg11[%c1_15, %c0_16, %c0_17] : memref<6x18x64xf32, #tpu.memory_space<vmem>>, vector<1x1x64xf32>
    tpu.vector_store %arg11[%c1_15, %c0_16, %c0_17], %0 {strides = array<i32>} : memref<6x18x64xf32, #tpu.memory_space<vmem>>, vector<1x1x64xf32>,
    %c1_18 = arith.constant 1 : index
    %c17_19 = arith.constant 17 : index
    %c0_20 = arith.constant 0 : index
    %14 = vector.load %arg11[%c1_18, %c17_19, %c0_20] : memref<6x18x64xf32, #tpu.memory_space<vmem>>, vector<1x1x64xf32>
    tpu.vector_store %arg11[%c1_18, %c17_19, %c0_20], %0 {strides = array<i32>} : memref<6x18x64xf32, #tpu.memory_space<vmem>>, vector<1x1x64xf32>,
    %15 = vector.shape_cast %12 : vector<16x64xf32> to vector<1x16x64xf32>
    %c1_21 = arith.constant 1 : index
    %c1_22 = arith.constant 1 : index
    %c0_23 = arith.constant 0 : index
    %16 = vector.load %arg11[%c1_21, %c1_22, %c0_23] : memref<6x18x64xf32, #tpu.memory_space<vmem>>, vector<1x16x64xf32>
    tpu.vector_store %arg11[%c1_21, %c1_22, %c0_23], %15 {strides = array<i32>} : memref<6x18x64xf32, #tpu.memory_space<vmem>>, vector<1x16x64xf32>,
    %17 = vector.extract_strided_slice %1 {offsets = [0, 1, 0, 0], sizes = [1, 1, 16, 64], strides = [1, 1, 1, 1]} : vector<1x4x16x64xf32> to vector<1x1x16x64xf32>
    %18 = vector.shape_cast %17 : vector<1x1x16x64xf32> to vector<16x64xf32>
    %c2 = arith.constant 2 : index
    %c0_24 = arith.constant 0 : index
    %c0_25 = arith.constant 0 : index
    %19 = vector.load %arg11[%c2, %c0_24, %c0_25] : memref<6x18x64xf32, #tpu.memory_space<vmem>>, vector<1x1x64xf32>
    tpu.vector_store %arg11[%c2, %c0_24, %c0_25], %0 {strides = array<i32>} : memref<6x18x64xf32, #tpu.memory_space<vmem>>, vector<1x1x64xf32>,
    %c2_26 = arith.constant 2 : index
    %c17_27 = arith.constant 17 : index
    %c0_28 = arith.constant 0 : index
    %20 = vector.load %arg11[%c2_26, %c17_27, %c0_28] : memref<6x18x64xf32, #tpu.memory_space<vmem>>, vector<1x1x64xf32>
    tpu.vector_store %arg11[%c2_26, %c17_27, %c0_28], %0 {strides = array<i32>} : memref<6x18x64xf32, #tpu.memory_space<vmem>>, vector<1x1x64xf32>,
    %21 = vector.shape_cast %18 : vector<16x64xf32> to vector<1x16x64xf32>
    %c2_29 = arith.constant 2 : index
    %c1_30 = arith.constant 1 : index
    %c0_31 = arith.constant 0 : index
    %22 = vector.load %arg11[%c2_29, %c1_30, %c0_31] : memref<6x18x64xf32, #tpu.memory_space<vmem>>, vector<1x16x64xf32>
    tpu.vector_store %arg11[%c2_29, %c1_30, %c0_31], %21 {strides = array<i32>} : memref<6x18x64xf32, #tpu.memory_space<vmem>>, vector<1x16x64xf32>,
    %23 = vector.extract_strided_slice %1 {offsets = [0, 2, 0, 0], sizes = [1, 1, 16, 64], strides = [1, 1, 1, 1]} : vector<1x4x16x64xf32> to vector<1x1x16x64xf32>
    %24 = vector.shape_cast %23 : vector<1x1x16x64xf32> to vector<16x64xf32>
    %c3 = arith.constant 3 : index
    %c0_32 = arith.constant 0 : index
    %c0_33 = arith.constant 0 : index
    %25 = vector.load %arg11[%c3, %c0_32, %c0_33] : memref<6x18x64xf32, #tpu.memory_space<vmem>>, vector<1x1x64xf32>
    tpu.vector_store %arg11[%c3, %c0_32, %c0_33], %0 {strides = array<i32>} : memref<6x18x64xf32, #tpu.memory_space<vmem>>, vector<1x1x64xf32>,
    %c3_34 = arith.constant 3 : index
    %c17_35 = arith.constant 17 : index
    %c0_36 = arith.constant 0 : index
    %26 = vector.load %arg11[%c3_34, %c17_35, %c0_36] : memref<6x18x64xf32, #tpu.memory_space<vmem>>, vector<1x1x64xf32>
    tpu.vector_store %arg11[%c3_34, %c17_35, %c0_36], %0 {strides = array<i32>} : memref<6x18x64xf32, #tpu.memory_space<vmem>>, vector<1x1x64xf32>,
    %27 = vector.shape_cast %24 : vector<16x64xf32> to vector<1x16x64xf32>
    %c3_37 = arith.constant 3 : index
    %c1_38 = arith.constant 1 : index
    %c0_39 = arith.constant 0 : index
    %28 = vector.load %arg11[%c3_37, %c1_38, %c0_39] : memref<6x18x64xf32, #tpu.memory_space<vmem>>, vector<1x16x64xf32>
    tpu.vector_store %arg11[%c3_37, %c1_38, %c0_39], %27 {strides = array<i32>} : memref<6x18x64xf32, #tpu.memory_space<vmem>>, vector<1x16x64xf32>,
    %29 = vector.extract_strided_slice %1 {offsets = [0, 3, 0, 0], sizes = [1, 1, 16, 64], strides = [1, 1, 1, 1]} : vector<1x4x16x64xf32> to vector<1x1x16x64xf32>
    %30 = vector.shape_cast %29 : vector<1x1x16x64xf32> to vector<16x64xf32>
    %c4 = arith.constant 4 : index
    %c0_40 = arith.constant 0 : index
    %c0_41 = arith.constant 0 : index
    %31 = vector.load %arg11[%c4, %c0_40, %c0_41] : memref<6x18x64xf32, #tpu.memory_space<vmem>>, vector<1x1x64xf32>
    tpu.vector_store %arg11[%c4, %c0_40, %c0_41], %0 {strides = array<i32>} : memref<6x18x64xf32, #tpu.memory_space<vmem>>, vector<1x1x64xf32>,
    %c4_42 = arith.constant 4 : index
    %c17_43 = arith.constant 17 : index
    %c0_44 = arith.constant 0 : index
    %32 = vector.load %arg11[%c4_42, %c17_43, %c0_44] : memref<6x18x64xf32, #tpu.memory_space<vmem>>, vector<1x1x64xf32>
    tpu.vector_store %arg11[%c4_42, %c17_43, %c0_44], %0 {strides = array<i32>} : memref<6x18x64xf32, #tpu.memory_space<vmem>>, vector<1x1x64xf32>,
    %33 = vector.shape_cast %30 : vector<16x64xf32> to vector<1x16x64xf32>
    %c4_45 = arith.constant 4 : index
    %c1_46 = arith.constant 1 : index
    %c0_47 = arith.constant 0 : index
    %34 = vector.load %arg11[%c4_45, %c1_46, %c0_47] : memref<6x18x64xf32, #tpu.memory_space<vmem>>, vector<1x16x64xf32>
    tpu.vector_store %arg11[%c4_45, %c1_46, %c0_47], %33 {strides = array<i32>} : memref<6x18x64xf32, #tpu.memory_space<vmem>>, vector<1x16x64xf32>,
    %c0_48 = arith.constant 0 : index
    %c0_49 = arith.constant 0 : index
    %c0_50 = arith.constant 0 : index
    %c0_51 = arith.constant 0 : index
    %35 = vector.load %arg4[%c0_48, %c0_49, %c0_50, %c0_51] : memref<1x1x16x64xf32, #tpu.memory_space<vmem>>, vector<1x1x16x64xf32>
    %36 = vector.shape_cast %35 : vector<1x1x16x64xf32> to vector<16x64xf32>
    %c3_i32 = arith.constant 3 : i32
    %37 = arith.cmpi slt, %arg1, %c3_i32 : i32
    %cst_52 = arith.constant 0.000000e+00 : f32
    %38 = vector.broadcast %cst_52 : f32 to vector<16x64xf32>
    %39 = arith.select %37, %36, %38 : vector<16x64xf32>
    %c5 = arith.constant 5 : index
    %c0_53 = arith.constant 0 : index
    %c0_54 = arith.constant 0 : index
    %40 = vector.load %arg11[%c5, %c0_53, %c0_54] : memref<6x18x64xf32, #tpu.memory_space<vmem>>, vector<1x1x64xf32>
    tpu.vector_store %arg11[%c5, %c0_53, %c0_54], %0 {strides = array<i32>} : memref<6x18x64xf32, #tpu.memory_space<vmem>>, vector<1x1x64xf32>,
    %c5_55 = arith.constant 5 : index
    %c17_56 = arith.constant 17 : index
    %c0_57 = arith.constant 0 : index
    %41 = vector.load %arg11[%c5_55, %c17_56, %c0_57] : memref<6x18x64xf32, #tpu.memory_space<vmem>>, vector<1x1x64xf32>
    tpu.vector_store %arg11[%c5_55, %c17_56, %c0_57], %0 {strides = array<i32>} : memref<6x18x64xf32, #tpu.memory_space<vmem>>, vector<1x1x64xf32>,
    %42 = vector.shape_cast %39 : vector<16x64xf32> to vector<1x16x64xf32>
    %c5_58 = arith.constant 5 : index
    %c1_59 = arith.constant 1 : index
    %c0_60 = arith.constant 0 : index
    %43 = vector.load %arg11[%c5_58, %c1_59, %c0_60] : memref<6x18x64xf32, #tpu.memory_space<vmem>>, vector<1x16x64xf32>
    tpu.vector_store %arg11[%c5_58, %c1_59, %c0_60], %42 {strides = array<i32>} : memref<6x18x64xf32, #tpu.memory_space<vmem>>, vector<1x16x64xf32>,
    %cst_61 = arith.constant 0.000000e+00 : f32
    %44 = vector.broadcast %cst_61 : f32 to vector<64x128xf32>
    %c0_62 = arith.constant 0 : index
    %c0_63 = arith.constant 0 : index
    %c0_64 = arith.constant 0 : index
    %45 = vector.load %arg11[%c0_62, %c0_63, %c0_64] : memref<6x18x64xf32, #tpu.memory_space<vmem>>, vector<4x16x64xf32>
    %46 = vector.shape_cast %45 : vector<4x16x64xf32> to vector<64x64xf32>
    %c0_65 = arith.constant 0 : index
    %c0_66 = arith.constant 0 : index
    %c0_67 = arith.constant 0 : index
    %47 = vector.load %arg8[%c0_65, %c0_66, %c0_67] : memref<9x64x128xf32, #tpu.memory_space<vmem>>, vector<1x64x128xf32>
    %48 = vector.shape_cast %47 : vector<1x64x128xf32> to vector<64x128xf32>
    %cst_68 = arith.constant dense<0.000000e+00> : vector<64x128xf32>
    %49 = tpu.matmul %46, %48, %cst_68 {dimension_numbers = #tpu.dot_dimension_numbers<[1], [0], [0], [1], [0, 0, 1, 1], [], []>} : vector<64x64xf32>, vector<64x128xf32>, vector<64x128xf32> -> vector<64x128xf32>
    %50 = arith.addf %44, %49 : vector<64x128xf32>
    %c0_69 = arith.constant 0 : index
    %c1_70 = arith.constant 1 : index
    %c0_71 = arith.constant 0 : index
    %51 = vector.load %arg11[%c0_69, %c1_70, %c0_71] : memref<6x18x64xf32, #tpu.memory_space<vmem>>, vector<4x16x64xf32>
    %52 = vector.shape_cast %51 : vector<4x16x64xf32> to vector<64x64xf32>
    %c1_72 = arith.constant 1 : index
    %c0_73 = arith.constant 0 : index
    %c0_74 = arith.constant 0 : index
    %53 = vector.load %arg8[%c1_72, %c0_73, %c0_74] : memref<9x64x128xf32, #tpu.memory_space<vmem>>, vector<1x64x128xf32>
    %54 = vector.shape_cast %53 : vector<1x64x128xf32> to vector<64x128xf32>
    %cst_75 = arith.constant dense<0.000000e+00> : vector<64x128xf32>
    %55 = tpu.matmul %52, %54, %cst_75 {dimension_numbers = #tpu.dot_dimension_numbers<[1], [0], [0], [1], [0, 0, 1, 1], [], []>} : vector<64x64xf32>, vector<64x128xf32>, vector<64x128xf32> -> vector<64x128xf32>
    %56 = arith.addf %50, %55 : vector<64x128xf32>
    %c0_76 = arith.constant 0 : index
    %c2_77 = arith.constant 2 : index
    %c0_78 = arith.constant 0 : index
    %57 = vector.load %arg11[%c0_76, %c2_77, %c0_78] : memref<6x18x64xf32, #tpu.memory_space<vmem>>, vector<4x16x64xf32>
    %58 = vector.shape_cast %57 : vector<4x16x64xf32> to vector<64x64xf32>
    %c2_79 = arith.constant 2 : index
    %c0_80 = arith.constant 0 : index
    %c0_81 = arith.constant 0 : index
    %59 = vector.load %arg8[%c2_79, %c0_80, %c0_81] : memref<9x64x128xf32, #tpu.memory_space<vmem>>, vector<1x64x128xf32>
    %60 = vector.shape_cast %59 : vector<1x64x128xf32> to vector<64x128xf32>
    %cst_82 = arith.constant dense<0.000000e+00> : vector<64x128xf32>
    %61 = tpu.matmul %58, %60, %cst_82 {dimension_numbers = #tpu.dot_dimension_numbers<[1], [0], [0], [1], [0, 0, 1, 1], [], []>} : vector<64x64xf32>, vector<64x128xf32>, vector<64x128xf32> -> vector<64x128xf32>
    %62 = arith.addf %56, %61 : vector<64x128xf32>
    %c1_83 = arith.constant 1 : index
    %c0_84 = arith.constant 0 : index
    %c0_85 = arith.constant 0 : index
    %63 = vector.load %arg11[%c1_83, %c0_84, %c0_85] : memref<6x18x64xf32, #tpu.memory_space<vmem>>, vector<4x16x64xf32>
    %64 = vector.shape_cast %63 : vector<4x16x64xf32> to vector<64x64xf32>
    %c3_86 = arith.constant 3 : index
    %c0_87 = arith.constant 0 : index
    %c0_88 = arith.constant 0 : index
    %65 = vector.load %arg8[%c3_86, %c0_87, %c0_88] : memref<9x64x128xf32, #tpu.memory_space<vmem>>, vector<1x64x128xf32>
    %66 = vector.shape_cast %65 : vector<1x64x128xf32> to vector<64x128xf32>
    %cst_89 = arith.constant dense<0.000000e+00> : vector<64x128xf32>
    %67 = tpu.matmul %64, %66, %cst_89 {dimension_numbers = #tpu.dot_dimension_numbers<[1], [0], [0], [1], [0, 0, 1, 1], [], []>} : vector<64x64xf32>, vector<64x128xf32>, vector<64x128xf32> -> vector<64x128xf32>
    %68 = arith.addf %62, %67 : vector<64x128xf32>
    %c1_90 = arith.constant 1 : index
    %c1_91 = arith.constant 1 : index
    %c0_92 = arith.constant 0 : index
    %69 = vector.load %arg11[%c1_90, %c1_91, %c0_92] : memref<6x18x64xf32, #tpu.memory_space<vmem>>, vector<4x16x64xf32>
    %70 = vector.shape_cast %69 : vector<4x16x64xf32> to vector<64x64xf32>
    %c4_93 = arith.constant 4 : index
    %c0_94 = arith.constant 0 : index
    %c0_95 = arith.constant 0 : index
    %71 = vector.load %arg8[%c4_93, %c0_94, %c0_95] : memref<9x64x128xf32, #tpu.memory_space<vmem>>, vector<1x64x128xf32>
    %72 = vector.shape_cast %71 : vector<1x64x128xf32> to vector<64x128xf32>
    %cst_96 = arith.constant dense<0.000000e+00> : vector<64x128xf32>
    %73 = tpu.matmul %70, %72, %cst_96 {dimension_numbers = #tpu.dot_dimension_numbers<[1], [0], [0], [1], [0, 0, 1, 1], [], []>} : vector<64x64xf32>, vector<64x128xf32>, vector<64x128xf32> -> vector<64x128xf32>
    %74 = arith.addf %68, %73 : vector<64x128xf32>
    %c1_97 = arith.constant 1 : index
    %c2_98 = arith.constant 2 : index
    %c0_99 = arith.constant 0 : index
    %75 = vector.load %arg11[%c1_97, %c2_98, %c0_99] : memref<6x18x64xf32, #tpu.memory_space<vmem>>, vector<4x16x64xf32>
    %76 = vector.shape_cast %75 : vector<4x16x64xf32> to vector<64x64xf32>
    %c5_100 = arith.constant 5 : index
    %c0_101 = arith.constant 0 : index
    %c0_102 = arith.constant 0 : index
    %77 = vector.load %arg8[%c5_100, %c0_101, %c0_102] : memref<9x64x128xf32, #tpu.memory_space<vmem>>, vector<1x64x128xf32>
    %78 = vector.shape_cast %77 : vector<1x64x128xf32> to vector<64x128xf32>
    %cst_103 = arith.constant dense<0.000000e+00> : vector<64x128xf32>
    %79 = tpu.matmul %76, %78, %cst_103 {dimension_numbers = #tpu.dot_dimension_numbers<[1], [0], [0], [1], [0, 0, 1, 1], [], []>} : vector<64x64xf32>, vector<64x128xf32>, vector<64x128xf32> -> vector<64x128xf32>
    %80 = arith.addf %74, %79 : vector<64x128xf32>
    %c2_104 = arith.constant 2 : index
    %c0_105 = arith.constant 0 : index
    %c0_106 = arith.constant 0 : index
    %81 = vector.load %arg11[%c2_104, %c0_105, %c0_106] : memref<6x18x64xf32, #tpu.memory_space<vmem>>, vector<4x16x64xf32>
    %82 = vector.shape_cast %81 : vector<4x16x64xf32> to vector<64x64xf32>
    %c6 = arith.constant 6 : index
    %c0_107 = arith.constant 0 : index
    %c0_108 = arith.constant 0 : index
    %83 = vector.load %arg8[%c6, %c0_107, %c0_108] : memref<9x64x128xf32, #tpu.memory_space<vmem>>, vector<1x64x128xf32>
    %84 = vector.shape_cast %83 : vector<1x64x128xf32> to vector<64x128xf32>
    %cst_109 = arith.constant dense<0.000000e+00> : vector<64x128xf32>
    %85 = tpu.matmul %82, %84, %cst_109 {dimension_numbers = #tpu.dot_dimension_numbers<[1], [0], [0], [1], [0, 0, 1, 1], [], []>} : vector<64x64xf32>, vector<64x128xf32>, vector<64x128xf32> -> vector<64x128xf32>
    %86 = arith.addf %80, %85 : vector<64x128xf32>
    %c2_110 = arith.constant 2 : index
    %c1_111 = arith.constant 1 : index
    %c0_112 = arith.constant 0 : index
    %87 = vector.load %arg11[%c2_110, %c1_111, %c0_112] : memref<6x18x64xf32, #tpu.memory_space<vmem>>, vector<4x16x64xf32>
    %88 = vector.shape_cast %87 : vector<4x16x64xf32> to vector<64x64xf32>
    %c7 = arith.constant 7 : index
    %c0_113 = arith.constant 0 : index
    %c0_114 = arith.constant 0 : index
    %89 = vector.load %arg8[%c7, %c0_113, %c0_114] : memref<9x64x128xf32, #tpu.memory_space<vmem>>, vector<1x64x128xf32>
    %90 = vector.shape_cast %89 : vector<1x64x128xf32> to vector<64x128xf32>
    %cst_115 = arith.constant dense<0.000000e+00> : vector<64x128xf32>
    %91 = tpu.matmul %88, %90, %cst_115 {dimension_numbers = #tpu.dot_dimension_numbers<[1], [0], [0], [1], [0, 0, 1, 1], [], []>} : vector<64x64xf32>, vector<64x128xf32>, vector<64x128xf32> -> vector<64x128xf32>
    %92 = arith.addf %86, %91 : vector<64x128xf32>
    %c2_116 = arith.constant 2 : index
    %c2_117 = arith.constant 2 : index
    %c0_118 = arith.constant 0 : index
    %93 = vector.load %arg11[%c2_116, %c2_117, %c0_118] : memref<6x18x64xf32, #tpu.memory_space<vmem>>, vector<4x16x64xf32>
    %94 = vector.shape_cast %93 : vector<4x16x64xf32> to vector<64x64xf32>
    %c8 = arith.constant 8 : index
    %c0_119 = arith.constant 0 : index
    %c0_120 = arith.constant 0 : index
    %95 = vector.load %arg8[%c8, %c0_119, %c0_120] : memref<9x64x128xf32, #tpu.memory_space<vmem>>, vector<1x64x128xf32>
    %96 = vector.shape_cast %95 : vector<1x64x128xf32> to vector<64x128xf32>
    %cst_121 = arith.constant dense<0.000000e+00> : vector<64x128xf32>
    %97 = tpu.matmul %94, %96, %cst_121 {dimension_numbers = #tpu.dot_dimension_numbers<[1], [0], [0], [1], [0, 0, 1, 1], [], []>} : vector<64x64xf32>, vector<64x128xf32>, vector<64x128xf32> -> vector<64x128xf32>
    %98 = arith.addf %92, %97 : vector<64x128xf32>
    %c0_122 = arith.constant 0 : index
    %c0_123 = arith.constant 0 : index
    %99 = vector.load %arg7[%c0_122, %c0_123] : memref<1x128xf32, #tpu.memory_space<vmem>>, vector<1x128xf32>
    %100 = vector.broadcast %99 : vector<1x128xf32> to vector<64x128xf32>
    %101 = arith.addf %98, %100 : vector<64x128xf32>
    %102 = vector.shape_cast %101 : vector<64x128xf32> to vector<1x4x16x128xf32>
    %c0_124 = arith.constant 0 : index
    %c0_125 = arith.constant 0 : index
    %c0_126 = arith.constant 0 : index
    %c0_127 = arith.constant 0 : index
    %103 = vector.load %arg9[%c0_124, %c0_125, %c0_126, %c0_127] : memref<1x4x16x128xf32, #tpu.memory_space<vmem>>, vector<1x4x16x128xf32>
    tpu.vector_store %arg9[%c0_124, %c0_125, %c0_126, %c0_127], %102 {strides = array<i32>} : memref<1x4x16x128xf32, #tpu.memory_space<vmem>>, vector<1x4x16x128xf32>,
    %cst_128 = arith.constant dense<0.000000e+00> : vector<128xf32>
    %104 = vector.multi_reduction <add>, %101, %cst_128 [0] : vector<64x128xf32> to vector<128xf32>
    %105 = vector.shape_cast %104 : vector<128xf32> to vector<1x128xf32>
    %106 = vector.shape_cast %105 : vector<1x128xf32> to vector<1x1x1x128xf32>
    %c0_129 = arith.constant 0 : index
    %c0_130 = arith.constant 0 : index
    %c0_131 = arith.constant 0 : index
    %c0_132 = arith.constant 0 : index
    %107 = vector.load %arg10[%c0_129, %c0_130, %c0_131, %c0_132] : memref<1x1x2x128xf32, #tpu.memory_space<vmem>>, vector<1x1x1x128xf32>
    tpu.vector_store %arg10[%c0_129, %c0_130, %c0_131, %c0_132], %106 {strides = array<i32>} : memref<1x1x2x128xf32, #tpu.memory_space<vmem>>, vector<1x1x1x128xf32>,
    %108 = arith.mulf %101, %101 : vector<64x128xf32>
    %cst_133 = arith.constant dense<0.000000e+00> : vector<128xf32>
    %109 = vector.multi_reduction <add>, %108, %cst_133 [0] : vector<64x128xf32> to vector<128xf32>
    %110 = vector.shape_cast %109 : vector<128xf32> to vector<1x128xf32>
    %111 = vector.shape_cast %110 : vector<1x128xf32> to vector<1x1x1x128xf32>
    %c0_134 = arith.constant 0 : index
    %c0_135 = arith.constant 0 : index
    %c1_136 = arith.constant 1 : index
    %c0_137 = arith.constant 0 : index
    %112 = vector.load %arg10[%c0_134, %c0_135, %c1_136, %c0_137] : memref<1x1x2x128xf32, #tpu.memory_space<vmem>>, vector<1x1x1x128xf32>
    tpu.vector_store %arg10[%c0_134, %c0_135, %c1_136, %c0_137], %111 {strides = array<i32>} : memref<1x1x2x128xf32, #tpu.memory_space<vmem>>, vector<1x1x1x128xf32>,
    return
  }
  func.func @transform_0(%arg0: i32, %arg1: i32) -> (i32, i32, i32, i32) {
    %c4_i32 = arith.constant 4 : i32
    %0 = arith.muli %arg1, %c4_i32 : i32
    %c1_i32 = arith.constant 1 : i32
    %1 = arith.subi %0, %c1_i32 : i32
    %c0_i32 = arith.constant 0 : i32
    %2 = arith.maxsi %1, %c0_i32 : i32
    %c0_i32_0 = arith.constant 0 : i32
    %c0_i32_1 = arith.constant 0 : i32
    %c0_i32_2 = arith.constant 0 : i32
    return %arg0, %2, %c0_i32_0, %c0_i32_1 : i32, i32, i32, i32
  }
  func.func @transform_1(%arg0: i32, %arg1: i32) -> (i32, i32, i32, i32) {
    %c0_i32 = arith.constant 0 : i32
    %c0_i32_0 = arith.constant 0 : i32
    %c0_i32_1 = arith.constant 0 : i32
    return %arg0, %arg1, %c0_i32, %c0_i32_0 : i32, i32, i32, i32
  }
  func.func @transform_2(%arg0: i32, %arg1: i32) -> (i32, i32, i32, i32) {
    %c4_i32 = arith.constant 4 : i32
    %0 = arith.muli %arg1, %c4_i32 : i32
    %c4_i32_0 = arith.constant 4 : i32
    %1 = arith.addi %0, %c4_i32_0 : i32
    %c15_i32 = arith.constant 15 : i32
    %2 = arith.minsi %1, %c15_i32 : i32
    %c0_i32 = arith.constant 0 : i32
    %c0_i32_1 = arith.constant 0 : i32
    %c0_i32_2 = arith.constant 0 : i32
    return %arg0, %2, %c0_i32, %c0_i32_1 : i32, i32, i32, i32
  }
  func.func @transform_3(%arg0: i32, %arg1: i32) -> (i32, i32) {
    %c0_i32 = arith.constant 0 : i32
    %c0_i32_0 = arith.constant 0 : i32
    %c0_i32_1 = arith.constant 0 : i32
    return %c0_i32, %c0_i32_0 : i32, i32
  }
  func.func @transform_4(%arg0: i32, %arg1: i32) -> (i32, i32) {
    %c0_i32 = arith.constant 0 : i32
    %c0_i32_0 = arith.constant 0 : i32
    %c0_i32_1 = arith.constant 0 : i32
    return %c0_i32, %c0_i32_0 : i32, i32
  }
  func.func @transform_5(%arg0: i32, %arg1: i32) -> (i32, i32) {
    %c0_i32 = arith.constant 0 : i32
    %c0_i32_0 = arith.constant 0 : i32
    %c0_i32_1 = arith.constant 0 : i32
    return %c0_i32, %c0_i32_0 : i32, i32
  }
  func.func @transform_6(%arg0: i32, %arg1: i32) -> (i32, i32, i32) {
    %c0_i32 = arith.constant 0 : i32
    %c0_i32_0 = arith.constant 0 : i32
    %c0_i32_1 = arith.constant 0 : i32
    %c0_i32_2 = arith.constant 0 : i32
    return %c0_i32, %c0_i32_0, %c0_i32_1 : i32, i32, i32
  }
  func.func @transform_7(%arg0: i32, %arg1: i32) -> (i32, i32, i32, i32) {
    %c0_i32 = arith.constant 0 : i32
    %c0_i32_0 = arith.constant 0 : i32
    %c0_i32_1 = arith.constant 0 : i32
    return %arg0, %arg1, %c0_i32, %c0_i32_0 : i32, i32, i32, i32
  }
  func.func @transform_8(%arg0: i32, %arg1: i32) -> (i32, i32, i32, i32) {
    %c0_i32 = arith.constant 0 : i32
    %c0_i32_0 = arith.constant 0 : i32
    %c0_i32_1 = arith.constant 0 : i32
    return %arg0, %arg1, %c0_i32, %c0_i32_0 : i32, i32, i32, i32
  }
}

module attributes {stable_mosaic.version = 11 : i64} {
  func.func @_conv_kernel(%arg0: i32, %arg1: i32, %arg2: memref<1x1x16x128xf32, #tpu.memory_space<vmem>>, %arg3: memref<1x4x16x128xf32, #tpu.memory_space<vmem>>, %arg4: memref<1x1x16x128xf32, #tpu.memory_space<vmem>>, %arg5: memref<1x128xf32, #tpu.memory_space<vmem>>, %arg6: memref<1x128xf32, #tpu.memory_space<vmem>>, %arg7: memref<1x128xf32, #tpu.memory_space<vmem>>, %arg8: memref<9x128x128xf32, #tpu.memory_space<vmem>>, %arg9: memref<1x4x16x128xf32, #tpu.memory_space<vmem>>, %arg10: memref<6x18x128xf32, #tpu.memory_space<vmem>>) attributes {dimension_semantics = [#tpu.dimension_semantics<parallel>, #tpu.dimension_semantics<parallel>], iteration_bounds = array<i64: 2, 4>, scalar_prefetch = 0 : i64, scratch_operands = 1 : i64, tpu.core_type = #tpu.core_type<tc>, window_params = [{transform_indices = @transform_0, window_bounds = array<i64: 1, 1, 16, 128>}, {transform_indices = @transform_1, window_bounds = array<i64: 1, 4, 16, 128>}, {transform_indices = @transform_2, window_bounds = array<i64: 1, 1, 16, 128>}, {pipeline_mode = #tpu.pipeline_mode<synchronous>, transform_indices = @transform_3, window_bounds = array<i64: 1, 128>}, {pipeline_mode = #tpu.pipeline_mode<synchronous>, transform_indices = @transform_4, window_bounds = array<i64: 1, 128>}, {pipeline_mode = #tpu.pipeline_mode<synchronous>, transform_indices = @transform_5, window_bounds = array<i64: 1, 128>}, {pipeline_mode = #tpu.pipeline_mode<synchronous>, transform_indices = @transform_6, window_bounds = array<i64: 9, 128, 128>}, {transform_indices = @transform_7, window_bounds = array<i64: 1, 4, 16, 128>}]} {
    %c0 = arith.constant 0 : index
    %c0_0 = arith.constant 0 : index
    %0 = vector.load %arg5[%c0, %c0_0] : memref<1x128xf32, #tpu.memory_space<vmem>>, vector<1x128xf32>
    %c0_1 = arith.constant 0 : index
    %c0_2 = arith.constant 0 : index
    %1 = vector.load %arg6[%c0_1, %c0_2] : memref<1x128xf32, #tpu.memory_space<vmem>>, vector<1x128xf32>
    %cst = arith.constant 0.000000e+00 : f32
    %2 = vector.broadcast %cst : f32 to vector<1x1x128xf32>
    %c0_3 = arith.constant 0 : index
    %c0_4 = arith.constant 0 : index
    %c0_5 = arith.constant 0 : index
    %c0_6 = arith.constant 0 : index
    %3 = vector.load %arg3[%c0_3, %c0_4, %c0_5, %c0_6] : memref<1x4x16x128xf32, #tpu.memory_space<vmem>>, vector<1x4x16x128xf32>
    %c0_7 = arith.constant 0 : index
    %c0_8 = arith.constant 0 : index
    %c0_9 = arith.constant 0 : index
    %c0_10 = arith.constant 0 : index
    %4 = vector.load %arg2[%c0_7, %c0_8, %c0_9, %c0_10] : memref<1x1x16x128xf32, #tpu.memory_space<vmem>>, vector<1x1x16x128xf32>
    %5 = vector.shape_cast %4 : vector<1x1x16x128xf32> to vector<16x128xf32>
    %6 = vector.broadcast %0 : vector<1x128xf32> to vector<16x128xf32>
    %7 = arith.mulf %5, %6 : vector<16x128xf32>
    %8 = vector.broadcast %1 : vector<1x128xf32> to vector<16x128xf32>
    %9 = arith.addf %7, %8 : vector<16x128xf32>
    %cst_11 = arith.constant 0.000000e+00 : f32
    %10 = vector.broadcast %cst_11 : f32 to vector<16x128xf32>
    %11 = arith.maximumf %9, %10 : vector<16x128xf32>
    %c0_i32 = arith.constant 0 : i32
    %12 = arith.cmpi sgt, %arg1, %c0_i32 : i32
    %cst_12 = arith.constant 0.000000e+00 : f32
    %13 = vector.broadcast %cst_12 : f32 to vector<16x128xf32>
    %14 = arith.select %12, %11, %13 : vector<16x128xf32>
    %c0_13 = arith.constant 0 : index
    %c0_14 = arith.constant 0 : index
    %c0_15 = arith.constant 0 : index
    %15 = vector.load %arg10[%c0_13, %c0_14, %c0_15] : memref<6x18x128xf32, #tpu.memory_space<vmem>>, vector<1x1x128xf32>
    tpu.vector_store %arg10[%c0_13, %c0_14, %c0_15], %2 {strides = array<i32>} : memref<6x18x128xf32, #tpu.memory_space<vmem>>, vector<1x1x128xf32>,
    %c0_16 = arith.constant 0 : index
    %c17 = arith.constant 17 : index
    %c0_17 = arith.constant 0 : index
    %16 = vector.load %arg10[%c0_16, %c17, %c0_17] : memref<6x18x128xf32, #tpu.memory_space<vmem>>, vector<1x1x128xf32>
    tpu.vector_store %arg10[%c0_16, %c17, %c0_17], %2 {strides = array<i32>} : memref<6x18x128xf32, #tpu.memory_space<vmem>>, vector<1x1x128xf32>,
    %17 = vector.shape_cast %14 : vector<16x128xf32> to vector<1x16x128xf32>
    %c0_18 = arith.constant 0 : index
    %c1 = arith.constant 1 : index
    %c0_19 = arith.constant 0 : index
    %18 = vector.load %arg10[%c0_18, %c1, %c0_19] : memref<6x18x128xf32, #tpu.memory_space<vmem>>, vector<1x16x128xf32>
    tpu.vector_store %arg10[%c0_18, %c1, %c0_19], %17 {strides = array<i32>} : memref<6x18x128xf32, #tpu.memory_space<vmem>>, vector<1x16x128xf32>,
    %19 = vector.extract_strided_slice %3 {offsets = [0, 0, 0, 0], sizes = [1, 1, 16, 128], strides = [1, 1, 1, 1]} : vector<1x4x16x128xf32> to vector<1x1x16x128xf32>
    %20 = vector.shape_cast %19 : vector<1x1x16x128xf32> to vector<16x128xf32>
    %21 = vector.broadcast %0 : vector<1x128xf32> to vector<16x128xf32>
    %22 = arith.mulf %20, %21 : vector<16x128xf32>
    %23 = vector.broadcast %1 : vector<1x128xf32> to vector<16x128xf32>
    %24 = arith.addf %22, %23 : vector<16x128xf32>
    %cst_20 = arith.constant 0.000000e+00 : f32
    %25 = vector.broadcast %cst_20 : f32 to vector<16x128xf32>
    %26 = arith.maximumf %24, %25 : vector<16x128xf32>
    %c1_21 = arith.constant 1 : index
    %c0_22 = arith.constant 0 : index
    %c0_23 = arith.constant 0 : index
    %27 = vector.load %arg10[%c1_21, %c0_22, %c0_23] : memref<6x18x128xf32, #tpu.memory_space<vmem>>, vector<1x1x128xf32>
    tpu.vector_store %arg10[%c1_21, %c0_22, %c0_23], %2 {strides = array<i32>} : memref<6x18x128xf32, #tpu.memory_space<vmem>>, vector<1x1x128xf32>,
    %c1_24 = arith.constant 1 : index
    %c17_25 = arith.constant 17 : index
    %c0_26 = arith.constant 0 : index
    %28 = vector.load %arg10[%c1_24, %c17_25, %c0_26] : memref<6x18x128xf32, #tpu.memory_space<vmem>>, vector<1x1x128xf32>
    tpu.vector_store %arg10[%c1_24, %c17_25, %c0_26], %2 {strides = array<i32>} : memref<6x18x128xf32, #tpu.memory_space<vmem>>, vector<1x1x128xf32>,
    %29 = vector.shape_cast %26 : vector<16x128xf32> to vector<1x16x128xf32>
    %c1_27 = arith.constant 1 : index
    %c1_28 = arith.constant 1 : index
    %c0_29 = arith.constant 0 : index
    %30 = vector.load %arg10[%c1_27, %c1_28, %c0_29] : memref<6x18x128xf32, #tpu.memory_space<vmem>>, vector<1x16x128xf32>
    tpu.vector_store %arg10[%c1_27, %c1_28, %c0_29], %29 {strides = array<i32>} : memref<6x18x128xf32, #tpu.memory_space<vmem>>, vector<1x16x128xf32>,
    %31 = vector.extract_strided_slice %3 {offsets = [0, 1, 0, 0], sizes = [1, 1, 16, 128], strides = [1, 1, 1, 1]} : vector<1x4x16x128xf32> to vector<1x1x16x128xf32>
    %32 = vector.shape_cast %31 : vector<1x1x16x128xf32> to vector<16x128xf32>
    %33 = vector.broadcast %0 : vector<1x128xf32> to vector<16x128xf32>
    %34 = arith.mulf %32, %33 : vector<16x128xf32>
    %35 = vector.broadcast %1 : vector<1x128xf32> to vector<16x128xf32>
    %36 = arith.addf %34, %35 : vector<16x128xf32>
    %cst_30 = arith.constant 0.000000e+00 : f32
    %37 = vector.broadcast %cst_30 : f32 to vector<16x128xf32>
    %38 = arith.maximumf %36, %37 : vector<16x128xf32>
    %c2 = arith.constant 2 : index
    %c0_31 = arith.constant 0 : index
    %c0_32 = arith.constant 0 : index
    %39 = vector.load %arg10[%c2, %c0_31, %c0_32] : memref<6x18x128xf32, #tpu.memory_space<vmem>>, vector<1x1x128xf32>
    tpu.vector_store %arg10[%c2, %c0_31, %c0_32], %2 {strides = array<i32>} : memref<6x18x128xf32, #tpu.memory_space<vmem>>, vector<1x1x128xf32>,
    %c2_33 = arith.constant 2 : index
    %c17_34 = arith.constant 17 : index
    %c0_35 = arith.constant 0 : index
    %40 = vector.load %arg10[%c2_33, %c17_34, %c0_35] : memref<6x18x128xf32, #tpu.memory_space<vmem>>, vector<1x1x128xf32>
    tpu.vector_store %arg10[%c2_33, %c17_34, %c0_35], %2 {strides = array<i32>} : memref<6x18x128xf32, #tpu.memory_space<vmem>>, vector<1x1x128xf32>,
    %41 = vector.shape_cast %38 : vector<16x128xf32> to vector<1x16x128xf32>
    %c2_36 = arith.constant 2 : index
    %c1_37 = arith.constant 1 : index
    %c0_38 = arith.constant 0 : index
    %42 = vector.load %arg10[%c2_36, %c1_37, %c0_38] : memref<6x18x128xf32, #tpu.memory_space<vmem>>, vector<1x16x128xf32>
    tpu.vector_store %arg10[%c2_36, %c1_37, %c0_38], %41 {strides = array<i32>} : memref<6x18x128xf32, #tpu.memory_space<vmem>>, vector<1x16x128xf32>,
    %43 = vector.extract_strided_slice %3 {offsets = [0, 2, 0, 0], sizes = [1, 1, 16, 128], strides = [1, 1, 1, 1]} : vector<1x4x16x128xf32> to vector<1x1x16x128xf32>
    %44 = vector.shape_cast %43 : vector<1x1x16x128xf32> to vector<16x128xf32>
    %45 = vector.broadcast %0 : vector<1x128xf32> to vector<16x128xf32>
    %46 = arith.mulf %44, %45 : vector<16x128xf32>
    %47 = vector.broadcast %1 : vector<1x128xf32> to vector<16x128xf32>
    %48 = arith.addf %46, %47 : vector<16x128xf32>
    %cst_39 = arith.constant 0.000000e+00 : f32
    %49 = vector.broadcast %cst_39 : f32 to vector<16x128xf32>
    %50 = arith.maximumf %48, %49 : vector<16x128xf32>
    %c3 = arith.constant 3 : index
    %c0_40 = arith.constant 0 : index
    %c0_41 = arith.constant 0 : index
    %51 = vector.load %arg10[%c3, %c0_40, %c0_41] : memref<6x18x128xf32, #tpu.memory_space<vmem>>, vector<1x1x128xf32>
    tpu.vector_store %arg10[%c3, %c0_40, %c0_41], %2 {strides = array<i32>} : memref<6x18x128xf32, #tpu.memory_space<vmem>>, vector<1x1x128xf32>,
    %c3_42 = arith.constant 3 : index
    %c17_43 = arith.constant 17 : index
    %c0_44 = arith.constant 0 : index
    %52 = vector.load %arg10[%c3_42, %c17_43, %c0_44] : memref<6x18x128xf32, #tpu.memory_space<vmem>>, vector<1x1x128xf32>
    tpu.vector_store %arg10[%c3_42, %c17_43, %c0_44], %2 {strides = array<i32>} : memref<6x18x128xf32, #tpu.memory_space<vmem>>, vector<1x1x128xf32>,
    %53 = vector.shape_cast %50 : vector<16x128xf32> to vector<1x16x128xf32>
    %c3_45 = arith.constant 3 : index
    %c1_46 = arith.constant 1 : index
    %c0_47 = arith.constant 0 : index
    %54 = vector.load %arg10[%c3_45, %c1_46, %c0_47] : memref<6x18x128xf32, #tpu.memory_space<vmem>>, vector<1x16x128xf32>
    tpu.vector_store %arg10[%c3_45, %c1_46, %c0_47], %53 {strides = array<i32>} : memref<6x18x128xf32, #tpu.memory_space<vmem>>, vector<1x16x128xf32>,
    %55 = vector.extract_strided_slice %3 {offsets = [0, 3, 0, 0], sizes = [1, 1, 16, 128], strides = [1, 1, 1, 1]} : vector<1x4x16x128xf32> to vector<1x1x16x128xf32>
    %56 = vector.shape_cast %55 : vector<1x1x16x128xf32> to vector<16x128xf32>
    %57 = vector.broadcast %0 : vector<1x128xf32> to vector<16x128xf32>
    %58 = arith.mulf %56, %57 : vector<16x128xf32>
    %59 = vector.broadcast %1 : vector<1x128xf32> to vector<16x128xf32>
    %60 = arith.addf %58, %59 : vector<16x128xf32>
    %cst_48 = arith.constant 0.000000e+00 : f32
    %61 = vector.broadcast %cst_48 : f32 to vector<16x128xf32>
    %62 = arith.maximumf %60, %61 : vector<16x128xf32>
    %c4 = arith.constant 4 : index
    %c0_49 = arith.constant 0 : index
    %c0_50 = arith.constant 0 : index
    %63 = vector.load %arg10[%c4, %c0_49, %c0_50] : memref<6x18x128xf32, #tpu.memory_space<vmem>>, vector<1x1x128xf32>
    tpu.vector_store %arg10[%c4, %c0_49, %c0_50], %2 {strides = array<i32>} : memref<6x18x128xf32, #tpu.memory_space<vmem>>, vector<1x1x128xf32>,
    %c4_51 = arith.constant 4 : index
    %c17_52 = arith.constant 17 : index
    %c0_53 = arith.constant 0 : index
    %64 = vector.load %arg10[%c4_51, %c17_52, %c0_53] : memref<6x18x128xf32, #tpu.memory_space<vmem>>, vector<1x1x128xf32>
    tpu.vector_store %arg10[%c4_51, %c17_52, %c0_53], %2 {strides = array<i32>} : memref<6x18x128xf32, #tpu.memory_space<vmem>>, vector<1x1x128xf32>,
    %65 = vector.shape_cast %62 : vector<16x128xf32> to vector<1x16x128xf32>
    %c4_54 = arith.constant 4 : index
    %c1_55 = arith.constant 1 : index
    %c0_56 = arith.constant 0 : index
    %66 = vector.load %arg10[%c4_54, %c1_55, %c0_56] : memref<6x18x128xf32, #tpu.memory_space<vmem>>, vector<1x16x128xf32>
    tpu.vector_store %arg10[%c4_54, %c1_55, %c0_56], %65 {strides = array<i32>} : memref<6x18x128xf32, #tpu.memory_space<vmem>>, vector<1x16x128xf32>,
    %c0_57 = arith.constant 0 : index
    %c0_58 = arith.constant 0 : index
    %c0_59 = arith.constant 0 : index
    %c0_60 = arith.constant 0 : index
    %67 = vector.load %arg4[%c0_57, %c0_58, %c0_59, %c0_60] : memref<1x1x16x128xf32, #tpu.memory_space<vmem>>, vector<1x1x16x128xf32>
    %68 = vector.shape_cast %67 : vector<1x1x16x128xf32> to vector<16x128xf32>
    %69 = vector.broadcast %0 : vector<1x128xf32> to vector<16x128xf32>
    %70 = arith.mulf %68, %69 : vector<16x128xf32>
    %71 = vector.broadcast %1 : vector<1x128xf32> to vector<16x128xf32>
    %72 = arith.addf %70, %71 : vector<16x128xf32>
    %cst_61 = arith.constant 0.000000e+00 : f32
    %73 = vector.broadcast %cst_61 : f32 to vector<16x128xf32>
    %74 = arith.maximumf %72, %73 : vector<16x128xf32>
    %c3_i32 = arith.constant 3 : i32
    %75 = arith.cmpi slt, %arg1, %c3_i32 : i32
    %cst_62 = arith.constant 0.000000e+00 : f32
    %76 = vector.broadcast %cst_62 : f32 to vector<16x128xf32>
    %77 = arith.select %75, %74, %76 : vector<16x128xf32>
    %c5 = arith.constant 5 : index
    %c0_63 = arith.constant 0 : index
    %c0_64 = arith.constant 0 : index
    %78 = vector.load %arg10[%c5, %c0_63, %c0_64] : memref<6x18x128xf32, #tpu.memory_space<vmem>>, vector<1x1x128xf32>
    tpu.vector_store %arg10[%c5, %c0_63, %c0_64], %2 {strides = array<i32>} : memref<6x18x128xf32, #tpu.memory_space<vmem>>, vector<1x1x128xf32>,
    %c5_65 = arith.constant 5 : index
    %c17_66 = arith.constant 17 : index
    %c0_67 = arith.constant 0 : index
    %79 = vector.load %arg10[%c5_65, %c17_66, %c0_67] : memref<6x18x128xf32, #tpu.memory_space<vmem>>, vector<1x1x128xf32>
    tpu.vector_store %arg10[%c5_65, %c17_66, %c0_67], %2 {strides = array<i32>} : memref<6x18x128xf32, #tpu.memory_space<vmem>>, vector<1x1x128xf32>,
    %80 = vector.shape_cast %77 : vector<16x128xf32> to vector<1x16x128xf32>
    %c5_68 = arith.constant 5 : index
    %c1_69 = arith.constant 1 : index
    %c0_70 = arith.constant 0 : index
    %81 = vector.load %arg10[%c5_68, %c1_69, %c0_70] : memref<6x18x128xf32, #tpu.memory_space<vmem>>, vector<1x16x128xf32>
    tpu.vector_store %arg10[%c5_68, %c1_69, %c0_70], %80 {strides = array<i32>} : memref<6x18x128xf32, #tpu.memory_space<vmem>>, vector<1x16x128xf32>,
    %cst_71 = arith.constant 0.000000e+00 : f32
    %82 = vector.broadcast %cst_71 : f32 to vector<64x128xf32>
    %c0_72 = arith.constant 0 : index
    %c0_73 = arith.constant 0 : index
    %c0_74 = arith.constant 0 : index
    %83 = vector.load %arg10[%c0_72, %c0_73, %c0_74] : memref<6x18x128xf32, #tpu.memory_space<vmem>>, vector<4x16x128xf32>
    %84 = vector.shape_cast %83 : vector<4x16x128xf32> to vector<64x128xf32>
    %c0_75 = arith.constant 0 : index
    %c0_76 = arith.constant 0 : index
    %c0_77 = arith.constant 0 : index
    %85 = vector.load %arg8[%c0_75, %c0_76, %c0_77] : memref<9x128x128xf32, #tpu.memory_space<vmem>>, vector<1x128x128xf32>
    %86 = vector.shape_cast %85 : vector<1x128x128xf32> to vector<128x128xf32>
    %cst_78 = arith.constant dense<0.000000e+00> : vector<64x128xf32>
    %87 = tpu.matmul %84, %86, %cst_78 {dimension_numbers = #tpu.dot_dimension_numbers<[1], [0], [0], [1], [0, 0, 1, 1], [], []>} : vector<64x128xf32>, vector<128x128xf32>, vector<64x128xf32> -> vector<64x128xf32>
    %88 = arith.addf %82, %87 : vector<64x128xf32>
    %c0_79 = arith.constant 0 : index
    %c1_80 = arith.constant 1 : index
    %c0_81 = arith.constant 0 : index
    %89 = vector.load %arg10[%c0_79, %c1_80, %c0_81] : memref<6x18x128xf32, #tpu.memory_space<vmem>>, vector<4x16x128xf32>
    %90 = vector.shape_cast %89 : vector<4x16x128xf32> to vector<64x128xf32>
    %c1_82 = arith.constant 1 : index
    %c0_83 = arith.constant 0 : index
    %c0_84 = arith.constant 0 : index
    %91 = vector.load %arg8[%c1_82, %c0_83, %c0_84] : memref<9x128x128xf32, #tpu.memory_space<vmem>>, vector<1x128x128xf32>
    %92 = vector.shape_cast %91 : vector<1x128x128xf32> to vector<128x128xf32>
    %cst_85 = arith.constant dense<0.000000e+00> : vector<64x128xf32>
    %93 = tpu.matmul %90, %92, %cst_85 {dimension_numbers = #tpu.dot_dimension_numbers<[1], [0], [0], [1], [0, 0, 1, 1], [], []>} : vector<64x128xf32>, vector<128x128xf32>, vector<64x128xf32> -> vector<64x128xf32>
    %94 = arith.addf %88, %93 : vector<64x128xf32>
    %c0_86 = arith.constant 0 : index
    %c2_87 = arith.constant 2 : index
    %c0_88 = arith.constant 0 : index
    %95 = vector.load %arg10[%c0_86, %c2_87, %c0_88] : memref<6x18x128xf32, #tpu.memory_space<vmem>>, vector<4x16x128xf32>
    %96 = vector.shape_cast %95 : vector<4x16x128xf32> to vector<64x128xf32>
    %c2_89 = arith.constant 2 : index
    %c0_90 = arith.constant 0 : index
    %c0_91 = arith.constant 0 : index
    %97 = vector.load %arg8[%c2_89, %c0_90, %c0_91] : memref<9x128x128xf32, #tpu.memory_space<vmem>>, vector<1x128x128xf32>
    %98 = vector.shape_cast %97 : vector<1x128x128xf32> to vector<128x128xf32>
    %cst_92 = arith.constant dense<0.000000e+00> : vector<64x128xf32>
    %99 = tpu.matmul %96, %98, %cst_92 {dimension_numbers = #tpu.dot_dimension_numbers<[1], [0], [0], [1], [0, 0, 1, 1], [], []>} : vector<64x128xf32>, vector<128x128xf32>, vector<64x128xf32> -> vector<64x128xf32>
    %100 = arith.addf %94, %99 : vector<64x128xf32>
    %c1_93 = arith.constant 1 : index
    %c0_94 = arith.constant 0 : index
    %c0_95 = arith.constant 0 : index
    %101 = vector.load %arg10[%c1_93, %c0_94, %c0_95] : memref<6x18x128xf32, #tpu.memory_space<vmem>>, vector<4x16x128xf32>
    %102 = vector.shape_cast %101 : vector<4x16x128xf32> to vector<64x128xf32>
    %c3_96 = arith.constant 3 : index
    %c0_97 = arith.constant 0 : index
    %c0_98 = arith.constant 0 : index
    %103 = vector.load %arg8[%c3_96, %c0_97, %c0_98] : memref<9x128x128xf32, #tpu.memory_space<vmem>>, vector<1x128x128xf32>
    %104 = vector.shape_cast %103 : vector<1x128x128xf32> to vector<128x128xf32>
    %cst_99 = arith.constant dense<0.000000e+00> : vector<64x128xf32>
    %105 = tpu.matmul %102, %104, %cst_99 {dimension_numbers = #tpu.dot_dimension_numbers<[1], [0], [0], [1], [0, 0, 1, 1], [], []>} : vector<64x128xf32>, vector<128x128xf32>, vector<64x128xf32> -> vector<64x128xf32>
    %106 = arith.addf %100, %105 : vector<64x128xf32>
    %c1_100 = arith.constant 1 : index
    %c1_101 = arith.constant 1 : index
    %c0_102 = arith.constant 0 : index
    %107 = vector.load %arg10[%c1_100, %c1_101, %c0_102] : memref<6x18x128xf32, #tpu.memory_space<vmem>>, vector<4x16x128xf32>
    %108 = vector.shape_cast %107 : vector<4x16x128xf32> to vector<64x128xf32>
    %c4_103 = arith.constant 4 : index
    %c0_104 = arith.constant 0 : index
    %c0_105 = arith.constant 0 : index
    %109 = vector.load %arg8[%c4_103, %c0_104, %c0_105] : memref<9x128x128xf32, #tpu.memory_space<vmem>>, vector<1x128x128xf32>
    %110 = vector.shape_cast %109 : vector<1x128x128xf32> to vector<128x128xf32>
    %cst_106 = arith.constant dense<0.000000e+00> : vector<64x128xf32>
    %111 = tpu.matmul %108, %110, %cst_106 {dimension_numbers = #tpu.dot_dimension_numbers<[1], [0], [0], [1], [0, 0, 1, 1], [], []>} : vector<64x128xf32>, vector<128x128xf32>, vector<64x128xf32> -> vector<64x128xf32>
    %112 = arith.addf %106, %111 : vector<64x128xf32>
    %c1_107 = arith.constant 1 : index
    %c2_108 = arith.constant 2 : index
    %c0_109 = arith.constant 0 : index
    %113 = vector.load %arg10[%c1_107, %c2_108, %c0_109] : memref<6x18x128xf32, #tpu.memory_space<vmem>>, vector<4x16x128xf32>
    %114 = vector.shape_cast %113 : vector<4x16x128xf32> to vector<64x128xf32>
    %c5_110 = arith.constant 5 : index
    %c0_111 = arith.constant 0 : index
    %c0_112 = arith.constant 0 : index
    %115 = vector.load %arg8[%c5_110, %c0_111, %c0_112] : memref<9x128x128xf32, #tpu.memory_space<vmem>>, vector<1x128x128xf32>
    %116 = vector.shape_cast %115 : vector<1x128x128xf32> to vector<128x128xf32>
    %cst_113 = arith.constant dense<0.000000e+00> : vector<64x128xf32>
    %117 = tpu.matmul %114, %116, %cst_113 {dimension_numbers = #tpu.dot_dimension_numbers<[1], [0], [0], [1], [0, 0, 1, 1], [], []>} : vector<64x128xf32>, vector<128x128xf32>, vector<64x128xf32> -> vector<64x128xf32>
    %118 = arith.addf %112, %117 : vector<64x128xf32>
    %c2_114 = arith.constant 2 : index
    %c0_115 = arith.constant 0 : index
    %c0_116 = arith.constant 0 : index
    %119 = vector.load %arg10[%c2_114, %c0_115, %c0_116] : memref<6x18x128xf32, #tpu.memory_space<vmem>>, vector<4x16x128xf32>
    %120 = vector.shape_cast %119 : vector<4x16x128xf32> to vector<64x128xf32>
    %c6 = arith.constant 6 : index
    %c0_117 = arith.constant 0 : index
    %c0_118 = arith.constant 0 : index
    %121 = vector.load %arg8[%c6, %c0_117, %c0_118] : memref<9x128x128xf32, #tpu.memory_space<vmem>>, vector<1x128x128xf32>
    %122 = vector.shape_cast %121 : vector<1x128x128xf32> to vector<128x128xf32>
    %cst_119 = arith.constant dense<0.000000e+00> : vector<64x128xf32>
    %123 = tpu.matmul %120, %122, %cst_119 {dimension_numbers = #tpu.dot_dimension_numbers<[1], [0], [0], [1], [0, 0, 1, 1], [], []>} : vector<64x128xf32>, vector<128x128xf32>, vector<64x128xf32> -> vector<64x128xf32>
    %124 = arith.addf %118, %123 : vector<64x128xf32>
    %c2_120 = arith.constant 2 : index
    %c1_121 = arith.constant 1 : index
    %c0_122 = arith.constant 0 : index
    %125 = vector.load %arg10[%c2_120, %c1_121, %c0_122] : memref<6x18x128xf32, #tpu.memory_space<vmem>>, vector<4x16x128xf32>
    %126 = vector.shape_cast %125 : vector<4x16x128xf32> to vector<64x128xf32>
    %c7 = arith.constant 7 : index
    %c0_123 = arith.constant 0 : index
    %c0_124 = arith.constant 0 : index
    %127 = vector.load %arg8[%c7, %c0_123, %c0_124] : memref<9x128x128xf32, #tpu.memory_space<vmem>>, vector<1x128x128xf32>
    %128 = vector.shape_cast %127 : vector<1x128x128xf32> to vector<128x128xf32>
    %cst_125 = arith.constant dense<0.000000e+00> : vector<64x128xf32>
    %129 = tpu.matmul %126, %128, %cst_125 {dimension_numbers = #tpu.dot_dimension_numbers<[1], [0], [0], [1], [0, 0, 1, 1], [], []>} : vector<64x128xf32>, vector<128x128xf32>, vector<64x128xf32> -> vector<64x128xf32>
    %130 = arith.addf %124, %129 : vector<64x128xf32>
    %c2_126 = arith.constant 2 : index
    %c2_127 = arith.constant 2 : index
    %c0_128 = arith.constant 0 : index
    %131 = vector.load %arg10[%c2_126, %c2_127, %c0_128] : memref<6x18x128xf32, #tpu.memory_space<vmem>>, vector<4x16x128xf32>
    %132 = vector.shape_cast %131 : vector<4x16x128xf32> to vector<64x128xf32>
    %c8 = arith.constant 8 : index
    %c0_129 = arith.constant 0 : index
    %c0_130 = arith.constant 0 : index
    %133 = vector.load %arg8[%c8, %c0_129, %c0_130] : memref<9x128x128xf32, #tpu.memory_space<vmem>>, vector<1x128x128xf32>
    %134 = vector.shape_cast %133 : vector<1x128x128xf32> to vector<128x128xf32>
    %cst_131 = arith.constant dense<0.000000e+00> : vector<64x128xf32>
    %135 = tpu.matmul %132, %134, %cst_131 {dimension_numbers = #tpu.dot_dimension_numbers<[1], [0], [0], [1], [0, 0, 1, 1], [], []>} : vector<64x128xf32>, vector<128x128xf32>, vector<64x128xf32> -> vector<64x128xf32>
    %136 = arith.addf %130, %135 : vector<64x128xf32>
    %c0_132 = arith.constant 0 : index
    %c0_133 = arith.constant 0 : index
    %137 = vector.load %arg7[%c0_132, %c0_133] : memref<1x128xf32, #tpu.memory_space<vmem>>, vector<1x128xf32>
    %138 = vector.broadcast %137 : vector<1x128xf32> to vector<64x128xf32>
    %139 = arith.addf %136, %138 : vector<64x128xf32>
    %140 = vector.shape_cast %139 : vector<64x128xf32> to vector<1x4x16x128xf32>
    %c0_134 = arith.constant 0 : index
    %c0_135 = arith.constant 0 : index
    %c0_136 = arith.constant 0 : index
    %c0_137 = arith.constant 0 : index
    %141 = vector.load %arg9[%c0_134, %c0_135, %c0_136, %c0_137] : memref<1x4x16x128xf32, #tpu.memory_space<vmem>>, vector<1x4x16x128xf32>
    tpu.vector_store %arg9[%c0_134, %c0_135, %c0_136, %c0_137], %140 {strides = array<i32>} : memref<1x4x16x128xf32, #tpu.memory_space<vmem>>, vector<1x4x16x128xf32>,
    return
  }
  func.func @transform_0(%arg0: i32, %arg1: i32) -> (i32, i32, i32, i32) {
    %c4_i32 = arith.constant 4 : i32
    %0 = arith.muli %arg1, %c4_i32 : i32
    %c1_i32 = arith.constant 1 : i32
    %1 = arith.subi %0, %c1_i32 : i32
    %c0_i32 = arith.constant 0 : i32
    %2 = arith.maxsi %1, %c0_i32 : i32
    %c0_i32_0 = arith.constant 0 : i32
    %c0_i32_1 = arith.constant 0 : i32
    %c0_i32_2 = arith.constant 0 : i32
    return %arg0, %2, %c0_i32_0, %c0_i32_1 : i32, i32, i32, i32
  }
  func.func @transform_1(%arg0: i32, %arg1: i32) -> (i32, i32, i32, i32) {
    %c0_i32 = arith.constant 0 : i32
    %c0_i32_0 = arith.constant 0 : i32
    %c0_i32_1 = arith.constant 0 : i32
    return %arg0, %arg1, %c0_i32, %c0_i32_0 : i32, i32, i32, i32
  }
  func.func @transform_2(%arg0: i32, %arg1: i32) -> (i32, i32, i32, i32) {
    %c4_i32 = arith.constant 4 : i32
    %0 = arith.muli %arg1, %c4_i32 : i32
    %c4_i32_0 = arith.constant 4 : i32
    %1 = arith.addi %0, %c4_i32_0 : i32
    %c15_i32 = arith.constant 15 : i32
    %2 = arith.minsi %1, %c15_i32 : i32
    %c0_i32 = arith.constant 0 : i32
    %c0_i32_1 = arith.constant 0 : i32
    %c0_i32_2 = arith.constant 0 : i32
    return %arg0, %2, %c0_i32, %c0_i32_1 : i32, i32, i32, i32
  }
  func.func @transform_3(%arg0: i32, %arg1: i32) -> (i32, i32) {
    %c0_i32 = arith.constant 0 : i32
    %c0_i32_0 = arith.constant 0 : i32
    %c0_i32_1 = arith.constant 0 : i32
    return %c0_i32, %c0_i32_0 : i32, i32
  }
  func.func @transform_4(%arg0: i32, %arg1: i32) -> (i32, i32) {
    %c0_i32 = arith.constant 0 : i32
    %c0_i32_0 = arith.constant 0 : i32
    %c0_i32_1 = arith.constant 0 : i32
    return %c0_i32, %c0_i32_0 : i32, i32
  }
  func.func @transform_5(%arg0: i32, %arg1: i32) -> (i32, i32) {
    %c0_i32 = arith.constant 0 : i32
    %c0_i32_0 = arith.constant 0 : i32
    %c0_i32_1 = arith.constant 0 : i32
    return %c0_i32, %c0_i32_0 : i32, i32
  }
  func.func @transform_6(%arg0: i32, %arg1: i32) -> (i32, i32, i32) {
    %c0_i32 = arith.constant 0 : i32
    %c0_i32_0 = arith.constant 0 : i32
    %c0_i32_1 = arith.constant 0 : i32
    %c0_i32_2 = arith.constant 0 : i32
    return %c0_i32, %c0_i32_0, %c0_i32_1 : i32, i32, i32
  }
  func.func @transform_7(%arg0: i32, %arg1: i32) -> (i32, i32, i32, i32) {
    %c0_i32 = arith.constant 0 : i32
    %c0_i32_0 = arith.constant 0 : i32
    %c0_i32_1 = arith.constant 0 : i32
    return %arg0, %arg1, %c0_i32, %c0_i32_0 : i32, i32, i32, i32
  }
}

</mosaic_0001>

<llo_original>
// kernel: tile.27
$region0: #{tile.27}
  #allocation0 [shape = 's32[1]{0}', space=sflag, size = 0x4, scoped, tag = 'scoped memory for tile.27']
  %s0 = inlined_call_operand.vmem [shape: f32[8], index: 0, kind: input, shape index: {}]
  %s1 = inlined_call_operand.vmem [shape: f32[16,8], index: 1, kind: output, shape index: {}]
  // Predicated region
  $region2: #{tile.27} parent=0 // pred_check
    _
  $region3: #{tile.27} parent=0 // pred_check_branch
    %3 = sbr.rel (0) target = $region5
  $region4: #{tile.27} parent=0 // pred_region
    _
  $region5: #{tile.27} parent=0 // pred_fallthru
    _
  %v4 = vld [vmem:[%s0] ss:$0 sm:$0xff]
  %5 = vst [vmem:[%s1] sm:$0xff] %v4
  %s6 = scalar_lea.vmem %s1, 8
  %7 = vst [vmem:[%s6] sm:$0xff] %v4

// kernel: tile.28
$region0: #{tile.28}
  %s0 = inlined_call_operand.vmem [shape: f32[16,8], index: 0, kind: input, shape index: {}]
  %s1 = inlined_call_operand.vmem [shape: f32[1,128], index: 1, kind: output, shape index: {}]
  $region1: #{tile.28} parent=0
    #allocation0 [shape = 'u8[4096]{0}', space=vmem, size = 0x1000, scoped, tag = 'scoped mem for output reshape']
    %v2 = vld [vmem:[%s0] sm:$0x1]
    %vm3 = vcmask 64512
    %4 = vst.msk [vmem:[#allocation0] sm:$0x1] %vm3, %v2
    %s5 = scalar_lea.vmem %s0, 15
    %v6 = vld [vmem:[%s5] sm:$0x1]
    %7 = vrot.lane.b32.xlu0 %v6, 120
    %v8 = vpop.permute.xlu0 %7
    %vm9 = vcmask 1048512
    %10 = vst.msk [vmem:[#allocation0] sm:$0x1] %vm9, %v8
    %s11 = scalar_lea.vmem %s0, 14
    %v12 = vld [vmem:[%s11] sm:$0x1]
    %13 = vrot.lane.b32.xlu0 %v12, 112
    %v14 = vpop.permute.xlu0 %13
    %vm15 = vcmask 982912
    %16 = vst.msk [vmem:[#allocation0] sm:$0x1] %vm15, %v14
    %s17 = scalar_lea.vmem %s0, 13
    %v18 = vld [vmem:[%s17] sm:$0x1]
    %19 = vrot.lane.b32.xlu0 %v18, 104
    %v20 = vpop.permute.xlu0 %19
    %vm21 = vcmask 917312
    %22 = vst.msk [vmem:[#allocation0] sm:$0x1] %vm21, %v20
    %s23 = scalar_lea.vmem %s0, 12
    %v24 = vld [vmem:[%s23] sm:$0x1]
    %25 = vrot.lane.b32.xlu0 %v24, 96
    %v26 = vpop.permute.xlu0 %25
    %vm27 = vcmask 851712
    %28 = vst.msk [vmem:[#allocation0] sm:$0x1] %vm27, %v26
    %s29 = scalar_lea.vmem %s0, 11
    %v30 = vld [vmem:[%s29] sm:$0x1]
    %31 = vrot.lane.b32.xlu0 %v30, 88
    %v32 = vpop.permute.xlu0 %31
    %vm33 = vcmask 786112
    %34 = vst.msk [vmem:[#allocation0] sm:$0x1] %vm33, %v32
    %s35 = scalar_lea.vmem %s0, 10
    %v36 = vld [vmem:[%s35] sm:$0x1]
    %37 = vrot.lane.b32.xlu0 %v36, 80
    %v38 = vpop.permute.xlu0 %37
    %vm39 = vcmask 720512
    %40 = vst.msk [vmem:[#allocation0] sm:$0x1] %vm39, %v38
    %s41 = scalar_lea.vmem %s0, 9
    %v42 = vld [vmem:[%s41] sm:$0x1]
    %43 = vrot.lane.b32.xlu0 %v42, 72
    %v44 = vpop.permute.xlu0 %43
    %vm45 = vcmask 654912
    %46 = vst.msk [vmem:[#allocation0] sm:$0x1] %vm45, %v44
    %s47 = scalar_lea.vmem %s0, 8
    %v48 = vld [vmem:[%s47] sm:$0x1]
    %49 = vrot.lane.b32.xlu0 %v48, 64
    %v50 = vpop.permute.xlu0 %49
    %vm51 = vcmask 589312
    %52 = vst.msk [vmem:[#allocation0] sm:$0x1] %vm51, %v50
    %s53 = scalar_lea.vmem %s0, 7
    %v54 = vld [vmem:[%s53] sm:$0x1]
    %55 = vrot.lane.b32.xlu0 %v54, 56
    %v56 = vpop.permute.xlu0 %55
    %vm57 = vcmask 523712
    %58 = vst.msk [vmem:[#allocation0] sm:$0x1] %vm57, %v56
    %s59 = scalar_lea.vmem %s0, 6
    %v60 = vld [vmem:[%s59] sm:$0x1]
    %61 = vrot.lane.b32.xlu0 %v60, 48
    %v62 = vpop.permute.xlu0 %61
    %vm63 = vcmask 458112
    %64 = vst.msk [vmem:[#allocation0] sm:$0x1] %vm63, %v62
    %s65 = scalar_lea.vmem %s0, 5
    %v66 = vld [vmem:[%s65] sm:$0x1]
    %67 = vrot.lane.b32.xlu0 %v66, 40
    %v68 = vpop.permute.xlu0 %67
    %vm69 = vcmask 392512
    %70 = vst.msk [vmem:[#allocation0] sm:$0x1] %vm69, %v68
    %s71 = scalar_lea.vmem %s0, 4
    %v72 = vld [vmem:[%s71] sm:$0x1]
    %73 = vrot.lane.b32.xlu0 %v72, 32
    %v74 = vpop.permute.xlu0 %73
    %vm75 = vcmask 326912
    %76 = vst.msk [vmem:[#allocation0] sm:$0x1] %vm75, %v74
    %s77 = scalar_lea.vmem %s0, 3
    %v78 = vld [vmem:[%s77] sm:$0x1]
    %79 = vrot.lane.b32.xlu0 %v78, 24
    %v80 = vpop.permute.xlu0 %79
    %vm81 = vcmask 261312
    %82 = vst.msk [vmem:[#allocation0] sm:$0x1] %vm81, %v80
    %s83 = scalar_lea.vmem %s0, 2
    %v84 = vld [vmem:[%s83] sm:$0x1]
    %85 = vrot.lane.b32.xlu0 %v84, 16
    %v86 = vpop.permute.xlu0 %85
    %vm87 = vcmask 195712
    %88 = vst.msk [vmem:[#allocation0] sm:$0x1] %vm87, %v86
    %s89 = scalar_lea.vmem %s0, 1
    %v90 = vld [vmem:[%s89] sm:$0x1]
    %91 = vrot.lane.b32.xlu0 %v90, 8
    %v92 = vpop.permute.xlu0 %91
    %vm93 = vcmask 130112
    %94 = vst.msk [vmem:[#allocation0] sm:$0x1] %vm93, %v92
    %s96 = sshllo.u32 0, 1
    %v98 = vld [vmem:[#allocation0] sm:%s96]
    %s99 = sshllo.u32 0, 1
    %100 = vst [vmem:[%s1] sm:%s99] %v98

// kernel: tile.22
$region0: #{tile.22}
  #allocation0 [shape = 's32[1]{0}', space=sflag, size = 0x4, scoped, tag = 'scoped memory for tile.22']
  %s0 = inlined_call_operand.<no memory space> [shape: f32[], index: 0, kind: input, shape index: {}]
  %s1 = inlined_call_operand.vmem [shape: f32[1,64], index: 1, kind: output, shape index: {}]
  %v2 = vstv %s0
  %3 = vst [vmem:[%s1] sm:$0x1] %v2

// kernel: std_conv_block_skip.2
$region0: #{std_conv_block_skip.2}
  #allocation0 [shape = 'u32[]', space=smem, size = 0x4, offset = 0x4, fixed_abs, tag = 'smem constant byte address 0x4 - core index']
  #allocation1 [shape = 'u32[144,128]{1,0:T(1,128)}', space=vmem, size = 0x12000, scoped, tag = 'internal scratch']
  #allocation2 [shape = 'f32[6,18,64]{2,1,0:T(8,128)}', space=vmem, size = 0x12000, scoped, tag = 'scratch operand']
  %s0 = inlined_call_operand.vmem [shape: f32[2,16,16,64], index: 0, kind: input, shape index: {}, may-alias: {0,1,2}]
  %s1 = inlined_call_operand.vmem [shape: f32[2,16,16,64], index: 1, kind: input, shape index: {}, may-alias: {0,1,2}]
  %s2 = inlined_call_operand.vmem [shape: f32[2,16,16,64], index: 2, kind: input, shape index: {}, may-alias: {0,1,2}]
  %s3 = inlined_call_operand.vmem [shape: f32[1,64], index: 3, kind: input, shape index: {}]
  %s4 = inlined_call_operand.vmem [shape: f32[1,64], index: 4, kind: input, shape index: {}]
  %s5 = inlined_call_operand.vmem [shape: f32[1,128], index: 5, kind: input, shape index: {}]
  %s6 = inlined_call_operand.vmem [shape: f32[9,64,128], index: 6, kind: input, shape index: {}]
  %s7 = inlined_call_operand.vmem [shape: f32[2,16,16,128], index: 7, kind: output, shape index: {0}]
  %s8 = inlined_call_operand.vmem [shape: f32[2,4,2,128], index: 8, kind: output, shape index: {1}]
  %9 = xla_tuple %s7, %s8
  %s10 = sld [smem:[#allocation0]]
  $region69: #{std_conv_block_skip.2} parent=0
    _
  %s12 = ssub.s32 1, %s10
  %s13 = scalar_select 0, %s12, %s10
  loop: start=0, step=1, limit=10
  $region2: #{std_conv_block_skip.2} parent=0 // loop_pre_header
    _
  $region3: #{std_conv_block_skip.2} parent=0 // loop_header
    %s15 = sphi 0, %s19
    %p16 = scmp.ge.s32.totalorder %s15, 10
    %s22 = sphi 0, %s34
    %s23 = sphi 0, %s30
    %s24 = sphi 0, %s22
    %s25 = sphi 0, %s23
    %s26 = sphi 0, %s24
    %s27 = sphi 0, %s25
    %s47 = sphi 0, %s49
    %s50 = sphi 0, %s47
    %s51 = sphi 0, %s50
    %s67 = sphi 0, %s51
    %s75 = sphi 0, %s77
    %s78 = sphi 0, %s75
    %s79 = sphi 0, %s78
    %s95 = sphi 0, %s79
    %s111 = sphi 0, %s113
    %s114 = sphi 0, %s111
    %s115 = sphi 0, %s114
    %s131 = sphi 0, %s115
    %s135 = sphi 0, %s135
    %s137 = sphi 0, %s135
    %s138 = sphi 0, %s137
    %s152 = sphi 0, %s138
    %s156 = sphi 0, %s156
    %s158 = sphi 0, %s156
    %s159 = sphi 0, %s158
    %s173 = sphi 0, %s159
    %s177 = sphi 0, %s177
    %s179 = sphi 0, %s177
    %s180 = sphi 0, %s179
    %s194 = sphi 0, %s180
    %s198 = sphi 0, %s198
    %s200 = sphi 0, %s198
    %s201 = sphi 0, %s200
    %s215 = sphi 0, %s201
    %s223 = sphi 0, %s225
    %s226 = sphi 0, %s223
    %s227 = sphi 0, %s226
    %s243 = sphi 0, %s227
    %s251 = sphi 0, %s253
    %s254 = sphi 0, %s251
    %s255 = sphi 0, %s254
    %s271 = sphi 0, %s255
  $region4: #{std_conv_block_skip.2} parent=0 // loop_header_branch
    %18 = sbr.rel (%p16) target = $region8
  $region5: #{std_conv_block_skip.2} parent=0 // loop_body
    %s20 = ssub.s32 %s15, 1
    %s21 = ssub.s32 %s15, 2
    %s28 = sadd.s32 1, %s23
    %p29 = scmp.ge.s32.totalorder %s28, 4
    %s30 = scalar_select %p29, 0, %s28
    %s31 = sadd.s32 1, %s22
    %s32 = scalar_select %p29, %s31, %s22
    %p33 = scmp.ge.s32.totalorder %s32, 2
    %s34 = scalar_select %p33, 0, %s32
    %s35 = smul.u32 %s23, 4
    %s36 = ssub.s32 %s35, 1
    %p37 = scmp.gt.s32.totalorder %s36, 0
    %s38 = scalar_select %p37, %s36, 0
    %s39 = smul.u32 %s30, 4
    %s40 = ssub.s32 %s39, 1
    %p41 = scmp.gt.s32.totalorder %s40, 0
    %s42 = scalar_select %p41, %s40, 0
    %s43 = ssub.s32 %s22, %s34
    %s44 = ssub.s32 %s38, %s42
    %s45 = sor.u32 %s43, %s44
    %p46 = scmp.eq.s32.totalorder %s45, 0
    %s48 = sadd.s32 %s47, 1
    %s49 = scalar_select %p46, %s47, %s48
    %p52 = pneg %p46
    %p53 = scmp.eq.s32.totalorder %s15, 7
    %p54 = por %p52, %p53
    %p55 = scmp.ne.s32.totalorder %s47, %s50
    %p56 = scmp.eq.s32.totalorder %s15, 0
    %p57 = por %p55, %p56
    %p58 = scmp.ne.s32.totalorder %s47, %s50
    %p59 = scmp.eq.s32.totalorder %s20, 7
    %p60 = por %p58, %p59
    %p61 = scmp.ne.s32.totalorder %s50, %s51
    %p62 = scmp.eq.s32.totalorder %s20, 0
    %p63 = por %p61, %p62
    %p64 = scmp.ne.s32.totalorder %s50, %s51
    %p65 = scmp.eq.s32.totalorder %s21, 7
    %p66 = por %p64, %p65
    %p68 = scmp.ne.s32.totalorder %s51, %s67
    %p69 = scmp.eq.s32.totalorder %s21, 0
    %p70 = por %p68, %p69
    %s71 = ssub.s32 %s22, %s34
    %s72 = ssub.s32 %s23, %s30
    %s73 = sor.u32 %s71, %s72
    %p74 = scmp.eq.s32.totalorder %s73, 0
    %s76 = sadd.s32 %s75, 1
    %s77 = scalar_select %p74, %s75, %s76
    %p80 = pneg %p74
    %p81 = scmp.eq.s32.totalorder %s15, 7
    %p82 = por %p80, %p81
    %p83 = scmp.ne.s32.totalorder %s75, %s78
    %p84 = scmp.eq.s32.totalorder %s15, 0
    %p85 = por %p83, %p84
    %p86 = scmp.ne.s32.totalorder %s75, %s78
    %p87 = scmp.eq.s32.totalorder %s20, 7
    %p88 = por %p86, %p87
    %p89 = scmp.ne.s32.totalorder %s78, %s79
    %p90 = scmp.eq.s32.totalorder %s20, 0
    %p91 = por %p89, %p90
    %p92 = scmp.ne.s32.totalorder %s78, %s79
    %p93 = scmp.eq.s32.totalorder %s21, 7
    %p94 = por %p92, %p93
    %p96 = scmp.ne.s32.totalorder %s79, %s95
    %p97 = scmp.eq.s32.totalorder %s21, 0
    %p98 = por %p96, %p97
    %s99 = smul.u32 %s23, 4
    %s100 = sadd.s32 %s99, 4
    %p101 = scmp.lt.s32.totalorder %s100, 15
    %s102 = scalar_select %p101, %s100, 15
    %s103 = smul.u32 %s30, 4
    %s104 = sadd.s32 %s103, 4
    %p105 = scmp.lt.s32.totalorder %s104, 15
    %s106 = scalar_select %p105, %s104, 15
    %s107 = ssub.s32 %s22, %s34
    %s108 = ssub.s32 %s102, %s106
    %s109 = sor.u32 %s107, %s108
    %p110 = scmp.eq.s32.totalorder %s109, 0
    %s112 = sadd.s32 %s111, 1
    %s113 = scalar_select %p110, %s111, %s112
    %p116 = pneg %p110
    %p117 = scmp.eq.s32.totalorder %s15, 7
    %p118 = por %p116, %p117
    %p119 = scmp.ne.s32.totalorder %s111, %s114
    %p120 = scmp.eq.s32.totalorder %s15, 0
    %p121 = por %p119, %p120
    %p122 = scmp.ne.s32.totalorder %s111, %s114
    %p123 = scmp.eq.s32.totalorder %s20, 7
    %p124 = por %p122, %p123
    %p125 = scmp.ne.s32.totalorder %s114, %s115
    %p126 = scmp.eq.s32.totalorder %s20, 0
    %p127 = por %p125, %p126
    %p128 = scmp.ne.s32.totalorder %s114, %s115
    %p129 = scmp.eq.s32.totalorder %s21, 7
    %p130 = por %p128, %p129
    %p132 = scmp.ne.s32.totalorder %s115, %s131
    %p133 = scmp.eq.s32.totalorder %s21, 0
    %p134 = por %p132, %p133
    %s136 = sadd.s32 %s135, 1
    %p139 = scmp.eq.s32.totalorder %s15, 7
    %p140 = scmp.ne.s32.totalorder %s135, %s137
    %p141 = scmp.eq.s32.totalorder %s15, 0
    %p142 = por %p140, %p141
    %p143 = scmp.ne.s32.totalorder %s135, %s137
    %p144 = scmp.eq.s32.totalorder %s20, 7
    %p145 = por %p143, %p144
    %p146 = scmp.ne.s32.totalorder %s137, %s138
    %p147 = scmp.eq.s32.totalorder %s20, 0
    %p148 = por %p146, %p147
    %p149 = scmp.ne.s32.totalorder %s137, %s138
    %p150 = scmp.eq.s32.totalorder %s21, 7
    %p151 = por %p149, %p150
    %p153 = scmp.ne.s32.totalorder %s138, %s152
    %p154 = scmp.eq.s32.totalorder %s21, 0
    %p155 = por %p153, %p154
    %s157 = sadd.s32 %s156, 1
    %p160 = scmp.eq.s32.totalorder %s15, 7
    %p161 = scmp.ne.s32.totalorder %s156, %s158
    %p162 = scmp.eq.s32.totalorder %s15, 0
    %p163 = por %p161, %p162
    %p164 = scmp.ne.s32.totalorder %s156, %s158
    %p165 = scmp.eq.s32.totalorder %s20, 7
    %p166 = por %p164, %p165
    %p167 = scmp.ne.s32.totalorder %s158, %s159
    %p168 = scmp.eq.s32.totalorder %s20, 0
    %p169 = por %p167, %p168
    %p170 = scmp.ne.s32.totalorder %s158, %s159
    %p171 = scmp.eq.s32.totalorder %s21, 7
    %p172 = por %p170, %p171
    %p174 = scmp.ne.s32.totalorder %s159, %s173
    %p175 = scmp.eq.s32.totalorder %s21, 0
    %p176 = por %p174, %p175
    %s178 = sadd.s32 %s177, 1
    %p181 = scmp.eq.s32.totalorder %s15, 7
    %p182 = scmp.ne.s32.totalorder %s177, %s179
    %p183 = scmp.eq.s32.totalorder %s15, 0
    %p184 = por %p182, %p183
    %p185 = scmp.ne.s32.totalorder %s177, %s179
    %p186 = scmp.eq.s32.totalorder %s20, 7
    %p187 = por %p185, %p186
    %p188 = scmp.ne.s32.totalorder %s179, %s180
    %p189 = scmp.eq.s32.totalorder %s20, 0
    %p190 = por %p188, %p189
    %p191 = scmp.ne.s32.totalorder %s179, %s180
    %p192 = scmp.eq.s32.totalorder %s21, 7
    %p193 = por %p191, %p192
    %p195 = scmp.ne.s32.totalorder %s180, %s194
    %p196 = scmp.eq.s32.totalorder %s21, 0
    %p197 = por %p195, %p196
    %s199 = sadd.s32 %s198, 1
    %p202 = scmp.eq.s32.totalorder %s15, 7
    %p203 = scmp.ne.s32.totalorder %s198, %s200
    %p204 = scmp.eq.s32.totalorder %s15, 0
    %p205 = por %p203, %p204
    %p206 = scmp.ne.s32.totalorder %s198, %s200
    %p207 = scmp.eq.s32.totalorder %s20, 7
    %p208 = por %p206, %p207
    %p209 = scmp.ne.s32.totalorder %s200, %s201
    %p210 = scmp.eq.s32.totalorder %s20, 0
    %p211 = por %p209, %p210
    %p212 = scmp.ne.s32.totalorder %s200, %s201
    %p213 = scmp.eq.s32.totalorder %s21, 7
    %p214 = por %p212, %p213
    %p216 = scmp.ne.s32.totalorder %s201, %s215
    %p217 = scmp.eq.s32.totalorder %s21, 0
    %p218 = por %p216, %p217
    %s219 = ssub.s32 %s22, %s34
    %s220 = ssub.s32 %s23, %s30
    %s221 = sor.u32 %s219, %s220
    %p222 = scmp.eq.s32.totalorder %s221, 0
    %s224 = sadd.s32 %s223, 1
    %s225 = scalar_select %p222, %s223, %s224
    %p228 = pneg %p222
    %p229 = scmp.eq.s32.totalorder %s15, 7
    %p230 = por %p228, %p229
    %p231 = scmp.ne.s32.totalorder %s223, %s226
    %p232 = scmp.eq.s32.totalorder %s15, 0
    %p233 = por %p231, %p232
    %p234 = scmp.ne.s32.totalorder %s223, %s226
    %p235 = scmp.eq.s32.totalorder %s20, 7
    %p236 = por %p234, %p235
    %p237 = scmp.ne.s32.totalorder %s226, %s227
    %p238 = scmp.eq.s32.totalorder %s20, 0
    %p239 = por %p237, %p238
    %p240 = scmp.ne.s32.totalorder %s226, %s227
    %p241 = scmp.eq.s32.totalorder %s21, 7
    %p242 = por %p240, %p241
    %p244 = scmp.ne.s32.totalorder %s227, %s243
    %p245 = scmp.eq.s32.totalorder %s21, 0
    %p246 = por %p244, %p245
    %s247 = ssub.s32 %s22, %s34
    %s248 = ssub.s32 %s23, %s30
    %s249 = sor.u32 %s247, %s248
    %p250 = scmp.eq.s32.totalorder %s249, 0
    %s252 = sadd.s32 %s251, 1
    %s253 = scalar_select %p250, %s251, %s252
    %p256 = pneg %p250
    %p257 = scmp.eq.s32.totalorder %s15, 7
    %p258 = por %p256, %p257
    %p259 = scmp.ne.s32.totalorder %s251, %s254
    %p260 = scmp.eq.s32.totalorder %s15, 0
    %p261 = por %p259, %p260
    %p262 = scmp.ne.s32.totalorder %s251, %s254
    %p263 = scmp.eq.s32.totalorder %s20, 7
    %p264 = por %p262, %p263
    %p265 = scmp.ne.s32.totalorder %s254, %s255
    %p266 = scmp.eq.s32.totalorder %s20, 0
    %p267 = por %p265, %p266
    %p268 = scmp.ne.s32.totalorder %s254, %s255
    %p269 = scmp.eq.s32.totalorder %s21, 7
    %p270 = por %p268, %p269
    %p272 = scmp.ne.s32.totalorder %s255, %s271
    %p273 = scmp.eq.s32.totalorder %s21, 0
    %p274 = por %p272, %p273
    %p275 = scmp.le.s32.totalorder 1, %s15
    %p276 = scmp.lt.s32.totalorder %s15, 9
    %p277 = pnand %p275, %p276
    %p278 = pneg %p277
    // Predicated region
    $region9: #{std_conv_block_skip.2} parent=5 // pred_check
      _
    $region10: #{std_conv_block_skip.2} parent=5 // pred_check_branch
      %280 = sbr.rel (%p277) target = $region12
    $region11: #{std_conv_block_skip.2} parent=5 // pred_region
      %s281 = ssub.s32 %s15, 1
      // Predicated region
      $region13: #{std_conv_block_skip.2} parent=11 // pred_check
        %p282 = pneg %p148
      $region14: #{std_conv_block_skip.2} parent=11 // pred_check_branch
        %284 = sbr.rel (%p282) target = $region16
      $region15: #{std_conv_block_skip.2} parent=11 // pred_region
        _
      $region16: #{std_conv_block_skip.2} parent=11 // pred_fallthru
        _
      // Predicated region
      $region17: #{std_conv_block_skip.2} parent=11 // pred_check
        %p285 = pneg %p169
      $region18: #{std_conv_block_skip.2} parent=11 // pred_check_branch
        %287 = sbr.rel (%p285) target = $region20
      $region19: #{std_conv_block_skip.2} parent=11 // pred_region
        _
      $region20: #{std_conv_block_skip.2} parent=11 // pred_fallthru
        _
      // Predicated region
      $region21: #{std_conv_block_skip.2} parent=11 // pred_check
        %p288 = pneg %p190
      $region22: #{std_conv_block_skip.2} parent=11 // pred_check_branch
        %290 = sbr.rel (%p288) target = $region24
      $region23: #{std_conv_block_skip.2} parent=11 // pred_region
        _
      $region24: #{std_conv_block_skip.2} parent=11 // pred_fallthru
        _
      // Predicated region
      $region25: #{std_conv_block_skip.2} parent=11 // pred_check
        %p291 = pneg %p211
      $region26: #{std_conv_block_skip.2} parent=11 // pred_check_branch
        %293 = sbr.rel (%p291) target = $region28
      $region27: #{std_conv_block_skip.2} parent=11 // pred_region
        _
      $region28: #{std_conv_block_skip.2} parent=11 // pred_fallthru
        _
    $region12: #{std_conv_block_skip.2} parent=5 // pred_fallthru
      _
    %p294 = scmp.lt.s32.totalorder %s15, 8
    // Predicated region
    $region29: #{std_conv_block_skip.2} parent=5 // pred_check
      %p295 = pneg %p294
    $region30: #{std_conv_block_skip.2} parent=5 // pred_check_branch
      %297 = sbr.rel (%p295) target = $region32
    $region31: #{std_conv_block_skip.2} parent=5 // pred_region
      // Predicated region
      $region33: #{std_conv_block_skip.2} parent=31 // pred_check
        %p298 = pneg %p57
      $region34: #{std_conv_block_skip.2} parent=31 // pred_check_branch
        %300 = sbr.rel (%p298) target = $region36
      $region35: #{std_conv_block_skip.2} parent=31 // pred_region
        %s301 = smul.u32 %s23, 4
        %s302 = ssub.s32 %s301, 1
        %p303 = scmp.gt.s32.totalorder %s302, 0
        %s304 = scalar_select %p303, %s302, 0
        %p305 = scmp.lt.s32.totalorder %s22, 1
        %s306 = scalar_select %p305, %s22, 1
        %p307 = scmp.lt.s32.totalorder %s304, 15
        %s308 = scalar_select %p307, %s304, 15
        %s309 = smul.addr %s308, 2
        %s310 = smul.addr %s306, 32
        %s311 = sadd.s32 %s309, %s310
        %s312 = smul.addr %s311, 8
        %s313 = scalar_lea.vmem %s0, %s312
        %s314 = smul.u32 %s23, 4
        %s315 = ssub.s32 %s314, 1
        %p316 = scmp.gt.s32.totalorder %s315, 0
        %s317 = scalar_select %p316, %s315, 0
      $region36: #{std_conv_block_skip.2} parent=31 // pred_fallthru
        _
      // Predicated region
      $region37: #{std_conv_block_skip.2} parent=31 // pred_check
        %p318 = pneg %p85
      $region38: #{std_conv_block_skip.2} parent=31 // pred_check_branch
        %320 = sbr.rel (%p318) target = $region40
      $region39: #{std_conv_block_skip.2} parent=31 // pred_region
        %s321 = smul.u32 4, %s23
        %p322 = scmp.lt.s32.totalorder %s22, 1
        %s323 = scalar_select %p322, %s22, 1
        %p324 = scmp.lt.s32.totalorder %s321, 15
        %s325 = scalar_select %p324, %s321, 15
        %s326 = smul.addr %s325, 2
        %s327 = smul.addr %s323, 32
        %s328 = sadd.s32 %s326, %s327
        %s329 = smul.addr %s328, 8
        %s330 = scalar_lea.vmem %s1, %s329
        %s331 = smul.u32 4, %s23
      $region40: #{std_conv_block_skip.2} parent=31 // pred_fallthru
        _
      // Predicated region
      $region41: #{std_conv_block_skip.2} parent=31 // pred_check
        %p332 = pneg %p121
      $region42: #{std_conv_block_skip.2} parent=31 // pred_check_branch
        %334 = sbr.rel (%p332) target = $region44
      $region43: #{std_conv_block_skip.2} parent=31 // pred_region
        %s335 = smul.u32 %s23, 4
        %s336 = sadd.s32 %s335, 4
        %p337 = scmp.lt.s32.totalorder %s336, 15
        %s338 = scalar_select %p337, %s336, 15
        %p339 = scmp.lt.s32.totalorder %s22, 1
        %s340 = scalar_select %p339, %s22, 1
        %p341 = scmp.lt.s32.totalorder %s338, 15
        %s342 = scalar_select %p341, %s338, 15
        %s343 = smul.addr %s342, 2
        %s344 = smul.addr %s340, 32
        %s345 = sadd.s32 %s343, %s344
        %s346 = smul.addr %s345, 8
        %s347 = scalar_lea.vmem %s2, %s346
        %s348 = smul.u32 %s23, 4
        %s349 = sadd.s32 %s348, 4
        %p350 = scmp.lt.s32.totalorder %s349, 15
        %s351 = scalar_select %p350, %s349, 15
      $region44: #{std_conv_block_skip.2} parent=31 // pred_fallthru
        _
    $region32: #{std_conv_block_skip.2} parent=5 // pred_fallthru
      _
    %p352 = scmp.le.s32.totalorder 1, %s15
    %p353 = scmp.lt.s32.totalorder %s15, 9
    %p354 = pnand %p352, %p353
    %p355 = pneg %p354
    // Predicated region
    $region45: #{std_conv_block_skip.2} parent=5 // pred_check
      _
    $region46: #{std_conv_block_skip.2} parent=5 // pred_check_branch
      %357 = sbr.rel (%p354) target = $region48
    $region47: #{std_conv_block_skip.2} parent=5 // pred_region
      %s358 = ssub.s32 %s15, 1
      %s359 = smul.u32 %s25, 4
      %s360 = ssub.s32 %s359, 1
      %p361 = scmp.gt.s32.totalorder %s360, 0
      %s362 = scalar_select %p361, %s360, 0
      %p363 = scmp.lt.s32.totalorder %s24, 1
      %s364 = scalar_select %p363, %s24, 1
      %p365 = scmp.lt.s32.totalorder %s362, 15
      %s366 = scalar_select %p365, %s362, 15
      %s367 = smul.addr %s366, 2
      %s368 = smul.addr %s364, 32
      %s369 = sadd.s32 %s367, %s368
      %s370 = smul.addr %s369, 8
      %s371 = scalar_lea.vmem %s0, %s370
      %p372 = pneg %p63
      %p373 = pneg %p60
      %s374 = smul.u32 4, %s25
      %p375 = scmp.lt.s32.totalorder %s24, 1
      %s376 = scalar_select %p375, %s24, 1
      %p377 = scmp.lt.s32.totalorder %s374, 15
      %s378 = scalar_select %p377, %s374, 15
      %s379 = smul.addr %s378, 2
      %s380 = smul.addr %s376, 32
      %s381 = sadd.s32 %s379, %s380
      %s382 = smul.addr %s381, 8
      %s383 = scalar_lea.vmem %s1, %s382
      %p384 = pneg %p91
      %p385 = pneg %p88
      %s386 = smul.u32 %s25, 4
      %s387 = sadd.s32 %s386, 4
      %p388 = scmp.lt.s32.totalorder %s387, 15
      %s389 = scalar_select %p388, %s387, 15
      %p390 = scmp.lt.s32.totalorder %s24, 1
      %s391 = scalar_select %p390, %s24, 1
      %p392 = scmp.lt.s32.totalorder %s389, 15
      %s393 = scalar_select %p392, %s389, 15
      %s394 = smul.addr %s393, 2
      %s395 = smul.addr %s391, 32
      %s396 = sadd.s32 %s394, %s395
      %s397 = smul.addr %s396, 8
      %s398 = scalar_lea.vmem %s2, %s397
      %p399 = pneg %p127
      %p400 = pneg %p124
      %p401 = pneg %p148
      %p402 = pneg %p145
      %p403 = pneg %p169
      %p404 = pneg %p166
      %p405 = pneg %p190
      %p406 = pneg %p187
      %p407 = pneg %p211
      %p408 = pneg %p208
      %p409 = pneg %p239
      %p410 = pneg %p236
      %s411 = smul.u32 4, %s25
      %p412 = scmp.lt.s32.totalorder %s24, 1
      %s413 = scalar_select %p412, %s24, 1
      %p414 = scmp.lt.s32.totalorder %s411, 15
      %s415 = scalar_select %p414, %s411, 15
      %s416 = smul.addr %s415, 2
      %s417 = smul.addr %s413, 32
      %s418 = sadd.s32 %s416, %s417
      %s419 = smul.addr %s418, 8
      %s420 = scalar_lea.vmem %s7, %s419
      %p421 = pneg %p267
      %p422 = pneg %p264
      %p423 = scmp.lt.s32.totalorder %s24, 1
      %s424 = scalar_select %p423, %s24, 1
      %p425 = scmp.lt.s32.totalorder %s25, 3
      %s426 = scalar_select %p425, %s25, 3
      %s427 = smul.addr %s424, 4
      %s428 = sadd.s32 %s426, %s427
      %s429 = smul.addr %s428, 2
      %s430 = scalar_lea.vmem %s8, %s429
      %s431 = smul.u32 %s25, 4
      %s432 = ssub.s32 %s431, 1
      %p433 = scmp.gt.s32.totalorder %s432, 0
      %s434 = scalar_select %p433, %s432, 0
      %p435 = scmp.lt.s32.totalorder %s24, 1
      %s436 = scalar_select %p435, %s24, 1
      %p437 = scmp.lt.s32.totalorder %s434, 15
      %s438 = scalar_select %p437, %s434, 15
      %s439 = smul.addr %s438, 2
      %s440 = smul.addr %s436, 32
      %s441 = sadd.s32 %s439, %s440
      %s442 = smul.addr %s441, 8
      %s443 = scalar_lea.vmem %s0, %s442
      %s444 = smul.u32 %s25, 4
      %s445 = ssub.s32 %s444, 1
      %p446 = scmp.gt.s32.totalorder %s445, 0
      %s447 = scalar_select %p446, %s445, 0
      %s448 = smul.u32 4, %s25
      %p449 = scmp.lt.s32.totalorder %s24, 1
      %s450 = scalar_select %p449, %s24, 1
      %p451 = scmp.lt.s32.totalorder %s448, 15
      %s452 = scalar_select %p451, %s448, 15
      %s453 = smul.addr %s452, 2
      %s454 = smul.addr %s450, 32
      %s455 = sadd.s32 %s453, %s454
      %s456 = smul.addr %s455, 8
      %s457 = scalar_lea.vmem %s1, %s456
      %s458 = smul.u32 4, %s25
      %s459 = smul.u32 %s25, 4
      %s460 = sadd.s32 %s459, 4
      %p461 = scmp.lt.s32.totalorder %s460, 15
      %s462 = scalar_select %p461, %s460, 15
      %p463 = scmp.lt.s32.totalorder %s24, 1
      %s464 = scalar_select %p463, %s24, 1
      %p465 = scmp.lt.s32.totalorder %s462, 15
      %s466 = scalar_select %p465, %s462, 15
      %s467 = smul.addr %s466, 2
      %s468 = smul.addr %s464, 32
      %s469 = sadd.s32 %s467, %s468
      %s470 = smul.addr %s469, 8
      %s471 = scalar_lea.vmem %s2, %s470
      %s472 = smul.u32 %s25, 4
      %s473 = sadd.s32 %s472, 4
      %p474 = scmp.lt.s32.totalorder %s473, 15
      %s475 = scalar_select %p474, %s473, 15
      %s476 = smul.u32 4, %s25
      %p477 = scmp.lt.s32.totalorder %s24, 1
      %s478 = scalar_select %p477, %s24, 1
      %p479 = scmp.lt.s32.totalorder %s476, 15
      %s480 = scalar_select %p479, %s476, 15
      %s481 = smul.addr %s480, 2
      %s482 = smul.addr %s478, 32
      %s483 = sadd.s32 %s481, %s482
      %s484 = smul.addr %s483, 8
      %s485 = scalar_lea.vmem %s7, %s484
      %s486 = smul.u32 4, %s25
      %p487 = scmp.lt.s32.totalorder %s24, 1
      %s488 = scalar_select %p487, %s24, 1
      %p489 = scmp.lt.s32.totalorder %s25, 3
      %s490 = scalar_select %p489, %s25, 3
      %s491 = smul.addr %s488, 4
      %s492 = sadd.s32 %s490, %s491
      %s493 = smul.addr %s492, 2
      %s494 = scalar_lea.vmem %s8, %s493
      %v495 = vld [vmem:[%s457] sm:$0xff]
      %v496 = vld [vmem:[%s457 + $0x8] sm:$0xff]
      %v497 = vld [vmem:[%s457 + $0x10] sm:$0xff]
      %v498 = vld [vmem:[%s457 + $0x18] sm:$0xff]
      %v499 = vld [vmem:[%s457 + $0x20] sm:$0xff]
      %v500 = vld [vmem:[%s457 + $0x28] sm:$0xff]
      %v501 = vld [vmem:[%s457 + $0x30] sm:$0xff]
      %v502 = vld [vmem:[%s457 + $0x38] sm:$0xff]
      %v503 = vld [vmem:[%s443] sm:$0xff]
      %v504 = vld [vmem:[%s443 + $0x8] sm:$0xff]
      %p505 = scmp.gt.s32.totalorder %s25, 0
      %s506 = scalar_select %p505, 1, 0
      %v507 = vstv %s506
      %vm508 = vcmp.eq.s32.totalorder %v507, 1
      %v509 = vsel %vm508, %v503, 0.0
      %v510 = vsel %vm508, %v504, 0.0
      %vm511 = vcmask 516096
      %512 = vst.msk [vmem:[#allocation2] sm:$0x1] %vm511, 0.0
      %513 = vst.msk [vmem:[#allocation2 + $0x11] sm:$0x1] %vm511, 0.0
      %vm514 = vcmask 523264
      %515 = vst.msk [vmem:[#allocation2 + $0x1] sm:$0xff] %vm514, %v509
      %516 = vst.msk [vmem:[#allocation2 + $0x9] sm:$0xff] %vm514, %v510
      %s517 = scalar_lea.vmem [#allocation2], 24
      %518 = vst.msk [vmem:[%s517] sm:$0x1] %vm511, 0.0
      %519 = vst.msk [vmem:[%s517 + $0x11] sm:$0x1] %vm511, 0.0
      %520 = vst.msk [vmem:[%s517 + $0x1] sm:$0xff] %vm514, %v495
      %521 = vst.msk [vmem:[%s517 + $0x9] sm:$0xff] %vm514, %v496
      %s522 = scalar_lea.vmem [#allocation2], 48
      %523 = vst.msk [vmem:[%s522] sm:$0x1] %vm511, 0.0
      %524 = vst.msk [vmem:[%s522 + $0x11] sm:$0x1] %vm511, 0.0
      %525 = vst.msk [vmem:[%s522 + $0x1] sm:$0xff] %vm514, %v497
      %526 = vst.msk [vmem:[%s522 + $0x9] sm:$0xff] %vm514, %v498
      %s527 = scalar_lea.vmem [#allocation2], 72
      %528 = vst.msk [vmem:[%s527] sm:$0x1] %vm511, 0.0
      %529 = vst.msk [vmem:[%s527 + $0x11] sm:$0x1] %vm511, 0.0
      %530 = vst.msk [vmem:[%s527 + $0x1] sm:$0xff] %vm514, %v499
      %531 = vst.msk [vmem:[%s527 + $0x9] sm:$0xff] %vm514, %v500
      %s532 = scalar_lea.vmem [#allocation2], 96
      %533 = vst.msk [vmem:[%s532] sm:$0x1] %vm511, 0.0
      %534 = vst.msk [vmem:[%s532 + $0x11] sm:$0x1] %vm511, 0.0
      %535 = vst.msk [vmem:[%s532 + $0x1] sm:$0xff] %vm514, %v501
      %536 = vst.msk [vmem:[%s532 + $0x9] sm:$0xff] %vm514, %v502
      %v537 = vld [vmem:[%s471] sm:$0xff]
      %v538 = vld [vmem:[%s471 + $0x8] sm:$0xff]
      %p539 = scmp.lt.s32.totalorder %s25, 3
      %s540 = scalar_select %p539, 1, 0
      %v541 = vstv %s540
      %vm542 = vcmp.eq.s32.totalorder %v541, 1
      %v543 = vsel %vm542, %v537, 0.0
      %v544 = vsel %vm542, %v538, 0.0
      %s545 = scalar_lea.vmem [#allocation2], 120
      %546 = vst.msk [vmem:[%s545] sm:$0x1] %vm511, 0.0
      %547 = vst.msk [vmem:[%s545 + $0x11] sm:$0x1] %vm511, 0.0
      %548 = vst.msk [vmem:[%s545 + $0x1] sm:$0xff] %vm514, %v543
      %549 = vst.msk [vmem:[%s545 + $0x9] sm:$0xff] %vm514, %v544
      %v550 = vld [vmem:[#allocation2] sm:$0xff]
      %v551 = vld [vmem:[#allocation2 + $0x8] sm:$0xff]
      %v552 = vld [vmem:[#allocation2 + $0x18] sm:$0xff]
      %v553 = vld [vmem:[#allocation2 + $0x20] sm:$0xff]
      %v554 = vld [vmem:[#allocation2 + $0x30] sm:$0xff]
      %v555 = vld [vmem:[#allocation2 + $0x38] sm:$0xff]
      %v556 = vld [vmem:[#allocation2 + $0x48] sm:$0xff]
      %v557 = vld [vmem:[#allocation2 + $0x50] sm:$0xff]
      %v558 = vld [vmem:[%s6] sm:$0xff]
      %v559 = vld [vmem:[%s6 + $0x8] sm:$0xff]
      %v560 = vld [vmem:[%s6 + $0x10] sm:$0xff]
      %v561 = vld [vmem:[%s6 + $0x18] sm:$0xff]
      %v562 = vld [vmem:[%s6 + $0x20] sm:$0xff]
      %v563 = vld [vmem:[%s6 + $0x28] sm:$0xff]
      %v564 = vld [vmem:[%s6 + $0x30] sm:$0xff]
      %v565 = vld [vmem:[%s6 + $0x38] sm:$0xff]
      %v566 = vld [vmem:[#allocation2 + $0x1] sm:$0xff]
      %v567 = vld [vmem:[#allocation2 + $0x9] sm:$0xff]
      %v568 = vld [vmem:[#allocation2 + $0x19] sm:$0xff]
      %v569 = vld [vmem:[#allocation2 + $0x21] sm:$0xff]
      %v570 = vld [vmem:[#allocation2 + $0x31] sm:$0xff]
      %v571 = vld [vmem:[#allocation2 + $0x39] sm:$0xff]
      %v572 = vld [vmem:[#allocation2 + $0x49] sm:$0xff]
      %v573 = vld [vmem:[#allocation2 + $0x51] sm:$0xff]
      %s574 = scalar_lea.vmem %s6, 64
      %v575 = vld [vmem:[%s574] sm:$0xff]
      %v576 = vld [vmem:[%s574 + $0x8] sm:$0xff]
      %v577 = vld [vmem:[%s574 + $0x10] sm:$0xff]
      %v578 = vld [vmem:[%s574 + $0x18] sm:$0xff]
      %v579 = vld [vmem:[%s574 + $0x20] sm:$0xff]
      %v580 = vld [vmem:[%s574 + $0x28] sm:$0xff]
      %v581 = vld [vmem:[%s574 + $0x30] sm:$0xff]
      %v582 = vld [vmem:[%s574 + $0x38] sm:$0xff]
      %v584 = vsel %vm514, %v566, 0
      %v587 = vsel %vm514, %v567, 0
      %v590 = vsel %vm514, %v568, 0
      %v593 = vsel %vm514, %v569, 0
      %v596 = vsel %vm514, %v570, 0
      %v599 = vsel %vm514, %v571, 0
      %v602 = vsel %vm514, %v572, 0
      %v605 = vsel %vm514, %v573, 0
      %607 = vmatprep.subr.mxu0 0.0
      %608 = vmatpush1.msra.mxu0 %v575
      %609 = vmatprep.subr.mxu0 0.0
      %610 = vmatpush1.msra.mxu0 %v576
      %611 = vmatprep.subr.mxu0 0.0
      %612 = vmatpush1.msra.mxu0 %v577
      %613 = vmatprep.subr.mxu0 0.0
      %614 = vmatpush1.msra.mxu0 %v578
      %615 = vmatprep.subr.mxu0 0.0
      %616 = vmatpush1.msra.mxu0 %v579
      %617 = vmatprep.subr.mxu0 0.0
      %618 = vmatpush1.msra.mxu0 %v580
      %619 = vmatprep.subr.mxu0 0.0
      %620 = vmatpush1.msra.mxu0 %v581
      %621 = vmatprep.subr.mxu0 0.0
      %622 = vmatpush1.msra.mxu0 %v582
      %623 = vmatprep.subr.mxu0 0.0
      %624 = vmatpush1.msra.mxu0 0.0
      %625 = vmatprep.subr.mxu0 0.0
      %626 = vmatpush1.msra.mxu0 0.0
      %627 = vmatprep.subr.mxu0 0.0
      %628 = vmatpush1.msra.mxu0 0.0
      %629 = vmatprep.subr.mxu0 0.0
      %630 = vmatpush1.msra.mxu0 0.0
      %631 = vmatprep.subr.mxu0 0.0
      %632 = vmatpush1.msra.mxu0 0.0
      %633 = vmatprep.subr.mxu0 0.0
      %634 = vmatpush1.msra.mxu0 0.0
      %635 = vmatprep.subr.mxu0 0.0
      %636 = vmatpush1.msra.mxu0 0.0
      %637 = vmatprep.subr.mxu0 0.0
      %638 = vmatpush1.msra.mxu0 0.0
      %639 = vmatprep.subr.mxu0 0.0
      %640 = vmatpush1.msra.mxu0 0.0
      %641 = vmatprep.subr.mxu0 0.0
      %642 = vmatpush1.msra.mxu0 0.0
      %643 = vmatprep.subr.mxu0 0.0
      %644 = vmatpush1.msra.mxu0 0.0
      %645 = vmatprep.subr.mxu0 0.0
      %646 = vmatpush1.msra.mxu0 0.0
      %647 = vmatprep.subr.mxu0 0.0
      %648 = vmatpush1.msra.mxu0 0.0
      %649 = vmatprep.subr.mxu0 0.0
      %650 = vmatpush1.msra.mxu0 0.0
      %651 = vmatprep.subr.mxu0 0.0
      %652 = vmatpush1.msra.mxu0 0.0
      %653 = vmatprep.subr.mxu0 0.0
      %654 = vmatpush1.msra.mxu0 0.0
      %655 = vmatprep.subr.mxu0 0.0
      %656 = vmatpush1.msra.mxu0 0.0
      %657 = vmatprep.subr.mxu0 0.0
      %658 = vmatpush1.msra.mxu0 0.0
      %659 = vmatprep.subr.mxu0 0.0
      %660 = vmatpush1.msra.mxu0 0.0
      %661 = vmatprep.subr.mxu0 0.0
      %662 = vmatpush1.msra.mxu0 0.0
      %663 = vmatprep.subr.mxu0 0.0
      %664 = vmatpush1.msra.mxu0 0.0
      %665 = vmatprep.subr.mxu0 0.0
      %666 = vmatpush1.msra.mxu0 0.0
      %667 = vmatprep.subr.mxu0 0.0
      %668 = vmatpush1.msra.mxu0 0.0
      %669 = vmatprep.subr.mxu0 0.0
      %670 = vmatpush1.msra.mxu0 0.0
      %671 = vmatprep.mubr.f32.mxu0 0.0
      %672 = vmatmul.mubr.f32.gmra.mrb[0].mxu0 %v584
      %v673 = vpop.f32.mrb[0].mxu0
      %v674 = vadd.f32 0.0, %v673
      %v675 = vpop.f32.mrb[0].mxu0
      %676 = vmatprep.mubr.f32.mxu0 0.0
      %677 = vmatmul.mubr.f32.gmra.mrb[0].mxu0 %v587
      %v678 = vpop.f32.mrb[0].mxu0
      %v679 = vadd.f32 0.0, %v678
      %v680 = vpop.f32.mrb[0].mxu0
      %681 = vmatprep.mubr.f32.mxu0 0.0
      %682 = vmatmul.mubr.f32.gmra.mrb[0].mxu0 %v590
      %v683 = vpop.f32.mrb[0].mxu0
      %v684 = vadd.f32 0.0, %v683
      %v685 = vpop.f32.mrb[0].mxu0
      %686 = vmatprep.mubr.f32.mxu0 0.0
      %687 = vmatmul.mubr.f32.gmra.mrb[0].mxu0 %v593
      %v688 = vpop.f32.mrb[0].mxu0
      %v689 = vadd.f32 0.0, %v688
      %v690 = vpop.f32.mrb[0].mxu0
      %691 = vmatprep.mubr.f32.mxu0 0.0
      %692 = vmatmul.mubr.f32.gmra.mrb[0].mxu0 %v596
      %v693 = vpop.f32.mrb[0].mxu0
      %v694 = vadd.f32 0.0, %v693
      %v695 = vpop.f32.mrb[0].mxu0
      %696 = vmatprep.mubr.f32.mxu0 0.0
      %697 = vmatmul.mubr.f32.gmra.mrb[0].mxu0 %v599
      %v698 = vpop.f32.mrb[0].mxu0
      %v699 = vadd.f32 0.0, %v698
      %v700 = vpop.f32.mrb[0].mxu0
      %701 = vmatprep.mubr.f32.mxu0 0.0
      %702 = vmatmul.mubr.f32.gmra.mrb[0].mxu0 %v602
      %v703 = vpop.f32.mrb[0].mxu0
      %v704 = vadd.f32 0.0, %v703
      %v705 = vpop.f32.mrb[0].mxu0
      %706 = vmatprep.mubr.f32.mxu0 0.0
      %707 = vmatmul.mubr.f32.gmra.mrb[0].mxu0 %v605
      %v708 = vpop.f32.mrb[0].mxu0
      %v709 = vadd.f32 0.0, %v708
      %v710 = vpop.f32.mrb[0].mxu0
      %711 = vdwg.mxu0
      %v713 = vsel %vm514, %v550, 0
      %v716 = vsel %vm514, %v551, 0
      %v719 = vsel %vm514, %v552, 0
      %v722 = vsel %vm514, %v553, 0
      %v725 = vsel %vm514, %v554, 0
      %v728 = vsel %vm514, %v555, 0
      %v731 = vsel %vm514, %v556, 0
      %v734 = vsel %vm514, %v557, 0
      %736 = vmatprep.subr.mxu0 0.0
      %737 = vmatpush1.msra.mxu0 %v558
      %738 = vmatprep.subr.mxu0 0.0
      %739 = vmatpush1.msra.mxu0 %v559
      %740 = vmatprep.subr.mxu0 0.0
      %741 = vmatpush1.msra.mxu0 %v560
      %742 = vmatprep.subr.mxu0 0.0
      %743 = vmatpush1.msra.mxu0 %v561
      %744 = vmatprep.subr.mxu0 0.0
      %745 = vmatpush1.msra.mxu0 %v562
      %746 = vmatprep.subr.mxu0 0.0
      %747 = vmatpush1.msra.mxu0 %v563
      %748 = vmatprep.subr.mxu0 0.0
      %749 = vmatpush1.msra.mxu0 %v564
      %750 = vmatprep.subr.mxu0 0.0
      %751 = vmatpush1.msra.mxu0 %v565
      %752 = vmatprep.subr.mxu0 0.0
      %753 = vmatpush1.msra.mxu0 0.0
      %754 = vmatprep.subr.mxu0 0.0
      %755 = vmatpush1.msra.mxu0 0.0
      %756 = vmatprep.subr.mxu0 0.0
      %757 = vmatpush1.msra.mxu0 0.0
      %758 = vmatprep.subr.mxu0 0.0
      %759 = vmatpush1.msra.mxu0 0.0
      %760 = vmatprep.subr.mxu0 0.0
      %761 = vmatpush1.msra.mxu0 0.0
      %762 = vmatprep.subr.mxu0 0.0
      %763 = vmatpush1.msra.mxu0 0.0
      %764 = vmatprep.subr.mxu0 0.0
      %765 = vmatpush1.msra.mxu0 0.0
      %766 = vmatprep.subr.mxu0 0.0
      %767 = vmatpush1.msra.mxu0 0.0
      %768 = vmatprep.subr.mxu0 0.0
      %769 = vmatpush1.msra.mxu0 0.0
      %770 = vmatprep.subr.mxu0 0.0
      %771 = vmatpush1.msra.mxu0 0.0
      %772 = vmatprep.subr.mxu0 0.0
      %773 = vmatpush1.msra.mxu0 0.0
      %774 = vmatprep.subr.mxu0 0.0
      %775 = vmatpush1.msra.mxu0 0.0
      %776 = vmatprep.subr.mxu0 0.0
      %777 = vmatpush1.msra.mxu0 0.0
      %778 = vmatprep.subr.mxu0 0.0
      %779 = vmatpush1.msra.mxu0 0.0
      %780 = vmatprep.subr.mxu0 0.0
      %781 = vmatpush1.msra.mxu0 0.0
      %782 = vmatprep.subr.mxu0 0.0
      %783 = vmatpush1.msra.mxu0 0.0
      %784 = vmatprep.subr.mxu0 0.0
      %785 = vmatpush1.msra.mxu0 0.0
      %786 = vmatprep.subr.mxu0 0.0
      %787 = vmatpush1.msra.mxu0 0.0
      %788 = vmatprep.subr.mxu0 0.0
      %789 = vmatpush1.msra.mxu0 0.0
      %790 = vmatprep.subr.mxu0 0.0
      %791 = vmatpush1.msra.mxu0 0.0
      %792 = vmatprep.subr.mxu0 0.0
      %793 = vmatpush1.msra.mxu0 0.0
      %794 = vmatprep.subr.mxu0 0.0
      %795 = vmatpush1.msra.mxu0 0.0
      %796 = vmatprep.subr.mxu0 0.0
      %797 = vmatpush1.msra.mxu0 0.0
      %798 = vmatprep.subr.mxu0 0.0
      %799 = vmatpush1.msra.mxu0 0.0
      %800 = vmatprep.mubr.f32.mxu0 0.0
      %801 = vmatmul.mubr.f32.gmra.mrb[0].mxu0 %v713
      %v802 = vpop.f32.mrb[0].mxu0
      %v803 = vadd.f32 %v674, %v802
      %v804 = vpop.f32.mrb[0].mxu0
      %805 = vmatprep.mubr.f32.mxu0 0.0
      %806 = vmatmul.mubr.f32.gmra.mrb[0].mxu0 %v716
      %v807 = vpop.f32.mrb[0].mxu0
      %v808 = vadd.f32 %v679, %v807
      %v809 = vpop.f32.mrb[0].mxu0
      %810 = vmatprep.mubr.f32.mxu0 0.0
      %811 = vmatmul.mubr.f32.gmra.mrb[0].mxu0 %v719
      %v812 = vpop.f32.mrb[0].mxu0
      %v813 = vadd.f32 %v684, %v812
      %v814 = vpop.f32.mrb[0].mxu0
      %815 = vmatprep.mubr.f32.mxu0 0.0
      %816 = vmatmul.mubr.f32.gmra.mrb[0].mxu0 %v722
      %v817 = vpop.f32.mrb[0].mxu0
      %v818 = vadd.f32 %v689, %v817
      %v819 = vpop.f32.mrb[0].mxu0
      %820 = vmatprep.mubr.f32.mxu0 0.0
      %821 = vmatmul.mubr.f32.gmra.mrb[0].mxu0 %v725
      %v822 = vpop.f32.mrb[0].mxu0
      %v823 = vadd.f32 %v694, %v822
      %v824 = vpop.f32.mrb[0].mxu0
      %825 = vmatprep.mubr.f32.mxu0 0.0
      %826 = vmatmul.mubr.f32.gmra.mrb[0].mxu0 %v728
      %v827 = vpop.f32.mrb[0].mxu0
      %v828 = vadd.f32 %v699, %v827
      %v829 = vpop.f32.mrb[0].mxu0
      %830 = vmatprep.mubr.f32.mxu0 0.0
      %831 = vmatmul.mubr.f32.gmra.mrb[0].mxu0 %v731
      %v832 = vpop.f32.mrb[0].mxu0
      %v833 = vadd.f32 %v704, %v832
      %v834 = vpop.f32.mrb[0].mxu0
      %835 = vmatprep.mubr.f32.mxu0 0.0
      %836 = vmatmul.mubr.f32.gmra.mrb[0].mxu0 %v734
      %v837 = vpop.f32.mrb[0].mxu0
      %v838 = vadd.f32 %v709, %v837
      %v839 = vpop.f32.mrb[0].mxu0
      %840 = vdwg.mxu0
      %v841 = vld [vmem:[#allocation2 + $0x2] sm:$0xff]
      %v842 = vld [vmem:[#allocation2 + $0xa] sm:$0xff]
      %v843 = vld [vmem:[#allocation2 + $0x1a] sm:$0xff]
      %v844 = vld [vmem:[#allocation2 + $0x22] sm:$0xff]
      %v845 = vld [vmem:[#allocation2 + $0x32] sm:$0xff]
      %v846 = vld [vmem:[#allocation2 + $0x3a] sm:$0xff]
      %v847 = vld [vmem:[#allocation2 + $0x4a] sm:$0xff]
      %v848 = vld [vmem:[#allocation2 + $0x52] sm:$0xff]
      %s849 = scalar_lea.vmem %s6, 128
      %v850 = vld [vmem:[%s849] sm:$0xff]
      %v851 = vld [vmem:[%s849 + $0x8] sm:$0xff]
      %v852 = vld [vmem:[%s849 + $0x10] sm:$0xff]
      %v853 = vld [vmem:[%s849 + $0x18] sm:$0xff]
      %v854 = vld [vmem:[%s849 + $0x20] sm:$0xff]
      %v855 = vld [vmem:[%s849 + $0x28] sm:$0xff]
      %v856 = vld [vmem:[%s849 + $0x30] sm:$0xff]
      %v857 = vld [vmem:[%s849 + $0x38] sm:$0xff]
      %v859 = vsel %vm514, %v841, 0
      %v862 = vsel %vm514, %v842, 0
      %v865 = vsel %vm514, %v843, 0
      %v868 = vsel %vm514, %v844, 0
      %v871 = vsel %vm514, %v845, 0
      %v874 = vsel %vm514, %v846, 0
      %v877 = vsel %vm514, %v847, 0
      %v880 = vsel %vm514, %v848, 0
      %882 = vmatprep.subr.mxu0 0.0
      %883 = vmatpush1.msra.mxu0 %v850
      %884 = vmatprep.subr.mxu0 0.0
      %885 = vmatpush1.msra.mxu0 %v851
      %886 = vmatprep.subr.mxu0 0.0
      %887 = vmatpush1.msra.mxu0 %v852
      %888 = vmatprep.subr.mxu0 0.0
      %889 = vmatpush1.msra.mxu0 %v853
      %890 = vmatprep.subr.mxu0 0.0
      %891 = vmatpush1.msra.mxu0 %v854
      %892 = vmatprep.subr.mxu0 0.0
      %893 = vmatpush1.msra.mxu0 %v855
      %894 = vmatprep.subr.mxu0 0.0
      %895 = vmatpush1.msra.mxu0 %v856
      %896 = vmatprep.subr.mxu0 0.0
      %897 = vmatpush1.msra.mxu0 %v857
      %898 = vmatprep.subr.mxu0 0.0
      %899 = vmatpush1.msra.mxu0 0.0
      %900 = vmatprep.subr.mxu0 0.0
      %901 = vmatpush1.msra.mxu0 0.0
      %902 = vmatprep.subr.mxu0 0.0
      %903 = vmatpush1.msra.mxu0 0.0
      %904 = vmatprep.subr.mxu0 0.0
      %905 = vmatpush1.msra.mxu0 0.0
      %906 = vmatprep.subr.mxu0 0.0
      %907 = vmatpush1.msra.mxu0 0.0
      %908 = vmatprep.subr.mxu0 0.0
      %909 = vmatpush1.msra.mxu0 0.0
      %910 = vmatprep.subr.mxu0 0.0
      %911 = vmatpush1.msra.mxu0 0.0
      %912 = vmatprep.subr.mxu0 0.0
      %913 = vmatpush1.msra.mxu0 0.0
      %914 = vmatprep.subr.mxu0 0.0
      %915 = vmatpush1.msra.mxu0 0.0
      %916 = vmatprep.subr.mxu0 0.0
      %917 = vmatpush1.msra.mxu0 0.0
      %918 = vmatprep.subr.mxu0 0.0
      %919 = vmatpush1.msra.mxu0 0.0
      %920 = vmatprep.subr.mxu0 0.0
      %921 = vmatpush1.msra.mxu0 0.0
      %922 = vmatprep.subr.mxu0 0.0
      %923 = vmatpush1.msra.mxu0 0.0
      %924 = vmatprep.subr.mxu0 0.0
      %925 = vmatpush1.msra.mxu0 0.0
      %926 = vmatprep.subr.mxu0 0.0
      %927 = vmatpush1.msra.mxu0 0.0
      %928 = vmatprep.subr.mxu0 0.0
      %929 = vmatpush1.msra.mxu0 0.0
      %930 = vmatprep.subr.mxu0 0.0
      %931 = vmatpush1.msra.mxu0 0.0
      %932 = vmatprep.subr.mxu0 0.0
      %933 = vmatpush1.msra.mxu0 0.0
      %934 = vmatprep.subr.mxu0 0.0
      %935 = vmatpush1.msra.mxu0 0.0
      %936 = vmatprep.subr.mxu0 0.0
      %937 = vmatpush1.msra.mxu0 0.0
      %938 = vmatprep.subr.mxu0 0.0
      %939 = vmatpush1.msra.mxu0 0.0
      %940 = vmatprep.subr.mxu0 0.0
      %941 = vmatpush1.msra.mxu0 0.0
      %942 = vmatprep.subr.mxu0 0.0
      %943 = vmatpush1.msra.mxu0 0.0
      %944 = vmatprep.subr.mxu0 0.0
      %945 = vmatpush1.msra.mxu0 0.0
      %946 = vmatprep.mubr.f32.mxu0 0.0
      %947 = vmatmul.mubr.f32.gmra.mrb[0].mxu0 %v859
      %v948 = vpop.f32.mrb[0].mxu0
      %v949 = vadd.f32 0.0, %v948
      %v950 = vpop.f32.mrb[0].mxu0
      %951 = vmatprep.mubr.f32.mxu0 0.0
      %952 = vmatmul.mubr.f32.gmra.mrb[0].mxu0 %v862
      %v953 = vpop.f32.mrb[0].mxu0
      %v954 = vadd.f32 0.0, %v953
      %v955 = vpop.f32.mrb[0].mxu0
      %956 = vmatprep.mubr.f32.mxu0 0.0
      %957 = vmatmul.mubr.f32.gmra.mrb[0].mxu0 %v865
      %v958 = vpop.f32.mrb[0].mxu0
      %v959 = vadd.f32 0.0, %v958
      %v960 = vpop.f32.mrb[0].mxu0
      %961 = vmatprep.mubr.f32.mxu0 0.0
      %962 = vmatmul.mubr.f32.gmra.mrb[0].mxu0 %v868
      %v963 = vpop.f32.mrb[0].mxu0
      %v964 = vadd.f32 0.0, %v963
      %v965 = vpop.f32.mrb[0].mxu0
      %966 = vmatprep.mubr.f32.mxu0 0.0
      %967 = vmatmul.mubr.f32.gmra.mrb[0].mxu0 %v871
      %v968 = vpop.f32.mrb[0].mxu0
      %v969 = vadd.f32 0.0, %v968
      %v970 = vpop.f32.mrb[0].mxu0
      %971 = vmatprep.mubr.f32.mxu0 0.0
      %972 = vmatmul.mubr.f32.gmra.mrb[0].mxu0 %v874
      %v973 = vpop.f32.mrb[0].mxu0
      %v974 = vadd.f32 0.0, %v973
      %v975 = vpop.f32.mrb[0].mxu0
      %976 = vmatprep.mubr.f32.mxu0 0.0
      %977 = vmatmul.mubr.f32.gmra.mrb[0].mxu0 %v877
      %v978 = vpop.f32.mrb[0].mxu0
      %v979 = vadd.f32 0.0, %v978
      %v980 = vpop.f32.mrb[0].mxu0
      %981 = vmatprep.mubr.f32.mxu0 0.0
      %982 = vmatmul.mubr.f32.gmra.mrb[0].mxu0 %v880
      %v983 = vpop.f32.mrb[0].mxu0
      %v984 = vadd.f32 0.0, %v983
      %v985 = vpop.f32.mrb[0].mxu0
      %986 = vdwg.mxu0
      %v987 = vadd.f32 %v803, %v949
      %v988 = vadd.f32 %v808, %v954
      %v989 = vadd.f32 %v813, %v959
      %v990 = vadd.f32 %v818, %v964
      %v991 = vadd.f32 %v823, %v969
      %v992 = vadd.f32 %v828, %v974
      %v993 = vadd.f32 %v833, %v979
      %v994 = vadd.f32 %v838, %v984
      %v995 = vld [vmem:[%s517] sm:$0xff]
      %v996 = vld [vmem:[%s517 + $0x8] sm:$0xff]
      %v997 = vld [vmem:[%s517 + $0x18] sm:$0xff]
      %v998 = vld [vmem:[%s517 + $0x20] sm:$0xff]
      %v999 = vld [vmem:[%s517 + $0x30] sm:$0xff]
      %v1000 = vld [vmem:[%s517 + $0x38] sm:$0xff]
      %v1001 = vld [vmem:[%s517 + $0x48] sm:$0xff]
      %v1002 = vld [vmem:[%s517 + $0x50] sm:$0xff]
      %s1003 = scalar_lea.vmem %s6, 192
      %v1004 = vld [vmem:[%s1003] sm:$0xff]
      %v1005 = vld [vmem:[%s1003 + $0x8] sm:$0xff]
      %v1006 = vld [vmem:[%s1003 + $0x10] sm:$0xff]
      %v1007 = vld [vmem:[%s1003 + $0x18] sm:$0xff]
      %v1008 = vld [vmem:[%s1003 + $0x20] sm:$0xff]
      %v1009 = vld [vmem:[%s1003 + $0x28] sm:$0xff]
      %v1010 = vld [vmem:[%s1003 + $0x30] sm:$0xff]
      %v1011 = vld [vmem:[%s1003 + $0x38] sm:$0xff]
      %v1013 = vsel %vm514, %v995, 0
      %v1016 = vsel %vm514, %v996, 0
      %v1019 = vsel %vm514, %v997, 0
      %v1022 = vsel %vm514, %v998, 0
      %v1025 = vsel %vm514, %v999, 0
      %v1028 = vsel %vm514, %v1000, 0
      %v1031 = vsel %vm514, %v1001, 0
      %v1034 = vsel %vm514, %v1002, 0
      %1036 = vmatprep.subr.mxu0 0.0
      %1037 = vmatpush1.msra.mxu0 %v1004
      %1038 = vmatprep.subr.mxu0 0.0
      %1039 = vmatpush1.msra.mxu0 %v1005
      %1040 = vmatprep.subr.mxu0 0.0
      %1041 = vmatpush1.msra.mxu0 %v1006
      %1042 = vmatprep.subr.mxu0 0.0
      %1043 = vmatpush1.msra.mxu0 %v1007
      %1044 = vmatprep.subr.mxu0 0.0
      %1045 = vmatpush1.msra.mxu0 %v1008
      %1046 = vmatprep.subr.mxu0 0.0
      %1047 = vmatpush1.msra.mxu0 %v1009
      %1048 = vmatprep.subr.mxu0 0.0
      %1049 = vmatpush1.msra.mxu0 %v1010
      %1050 = vmatprep.subr.mxu0 0.0
      %1051 = vmatpush1.msra.mxu0 %v1011
      %1052 = vmatprep.subr.mxu0 0.0
      %1053 = vmatpush1.msra.mxu0 0.0
      %1054 = vmatprep.subr.mxu0 0.0
      %1055 = vmatpush1.msra.mxu0 0.0
      %1056 = vmatprep.subr.mxu0 0.0
      %1057 = vmatpush1.msra.mxu0 0.0
      %1058 = vmatprep.subr.mxu0 0.0
      %1059 = vmatpush1.msra.mxu0 0.0
      %1060 = vmatprep.subr.mxu0 0.0
      %1061 = vmatpush1.msra.mxu0 0.0
      %1062 = vmatprep.subr.mxu0 0.0
      %1063 = vmatpush1.msra.mxu0 0.0
      %1064 = vmatprep.subr.mxu0 0.0
      %1065 = vmatpush1.msra.mxu0 0.0
      %1066 = vmatprep.subr.mxu0 0.0
      %1067 = vmatpush1.msra.mxu0 0.0
      %1068 = vmatprep.subr.mxu0 0.0
      %1069 = vmatpush1.msra.mxu0 0.0
      %1070 = vmatprep.subr.mxu0 0.0
      %1071 = vmatpush1.msra.mxu0 0.0
      %1072 = vmatprep.subr.mxu0 0.0
      %1073 = vmatpush1.msra.mxu0 0.0
      %1074 = vmatprep.subr.mxu0 0.0
      %1075 = vmatpush1.msra.mxu0 0.0
      %1076 = vmatprep.subr.mxu0 0.0
      %1077 = vmatpush1.msra.mxu0 0.0
      %1078 = vmatprep.subr.mxu0 0.0
      %1079 = vmatpush1.msra.mxu0 0.0
      %1080 = vmatprep.subr.mxu0 0.0
      %1081 = vmatpush1.msra.mxu0 0.0
      %1082 = vmatprep.subr.mxu0 0.0
      %1083 = vmatpush1.msra.mxu0 0.0
      %1084 = vmatprep.subr.mxu0 0.0
      %1085 = vmatpush1.msra.mxu0 0.0
      %1086 = vmatprep.subr.mxu0 0.0
      %1087 = vmatpush1.msra.mxu0 0.0
      %1088 = vmatprep.subr.mxu0 0.0
      %1089 = vmatpush1.msra.mxu0 0.0
      %1090 = vmatprep.subr.mxu0 0.0
      %1091 = vmatpush1.msra.mxu0 0.0
      %1092 = vmatprep.subr.mxu0 0.0
      %1093 = vmatpush1.msra.mxu0 0.0
      %1094 = vmatprep.subr.mxu0 0.0
      %1095 = vmatpush1.msra.mxu0 0.0
      %1096 = vmatprep.subr.mxu0 0.0
      %1097 = vmatpush1.msra.mxu0 0.0
      %1098 = vmatprep.subr.mxu0 0.0
      %1099 = vmatpush1.msra.mxu0 0.0
      %1100 = vmatprep.mubr.f32.mxu0 0.0
      %1101 = vmatmul.mubr.f32.gmra.mrb[0].mxu0 %v1013
      %v1102 = vpop.f32.mrb[0].mxu0
      %v1103 = vadd.f32 0.0, %v1102
      %v1104 = vpop.f32.mrb[0].mxu0
      %1105 = vmatprep.mubr.f32.mxu0 0.0
      %1106 = vmatmul.mubr.f32.gmra.mrb[0].mxu0 %v1016
      %v1107 = vpop.f32.mrb[0].mxu0
      %v1108 = vadd.f32 0.0, %v1107
      %v1109 = vpop.f32.mrb[0].mxu0
      %1110 = vmatprep.mubr.f32.mxu0 0.0
      %1111 = vmatmul.mubr.f32.gmra.mrb[0].mxu0 %v1019
      %v1112 = vpop.f32.mrb[0].mxu0
      %v1113 = vadd.f32 0.0, %v1112
      %v1114 = vpop.f32.mrb[0].mxu0
      %1115 = vmatprep.mubr.f32.mxu0 0.0
      %1116 = vmatmul.mubr.f32.gmra.mrb[0].mxu0 %v1022
      %v1117 = vpop.f32.mrb[0].mxu0
      %v1118 = vadd.f32 0.0, %v1117
      %v1119 = vpop.f32.mrb[0].mxu0
      %1120 = vmatprep.mubr.f32.mxu0 0.0
      %1121 = vmatmul.mubr.f32.gmra.mrb[0].mxu0 %v1025
      %v1122 = vpop.f32.mrb[0].mxu0
      %v1123 = vadd.f32 0.0, %v1122
      %v1124 = vpop.f32.mrb[0].mxu0
      %1125 = vmatprep.mubr.f32.mxu0 0.0
      %1126 = vmatmul.mubr.f32.gmra.mrb[0].mxu0 %v1028
      %v1127 = vpop.f32.mrb[0].mxu0
      %v1128 = vadd.f32 0.0, %v1127
      %v1129 = vpop.f32.mrb[0].mxu0
      %1130 = vmatprep.mubr.f32.mxu0 0.0
      %1131 = vmatmul.mubr.f32.gmra.mrb[0].mxu0 %v1031
      %v1132 = vpop.f32.mrb[0].mxu0
      %v1133 = vadd.f32 0.0, %v1132
      %v1134 = vpop.f32.mrb[0].mxu0
      %1135 = vmatprep.mubr.f32.mxu0 0.0
      %1136 = vmatmul.mubr.f32.gmra.mrb[0].mxu0 %v1034
      %v1137 = vpop.f32.mrb[0].mxu0
      %v1138 = vadd.f32 0.0, %v1137
      %v1139 = vpop.f32.mrb[0].mxu0
      %1140 = vdwg.mxu0
      %v1141 = vadd.f32 %v987, %v1103
      %v1142 = vadd.f32 %v988, %v1108
      %v1143 = vadd.f32 %v989, %v1113
      %v1144 = vadd.f32 %v990, %v1118
      %v1145 = vadd.f32 %v991, %v1123
      %v1146 = vadd.f32 %v992, %v1128
      %v1147 = vadd.f32 %v993, %v1133
      %v1148 = vadd.f32 %v994, %v1138
      %v1149 = vld [vmem:[%s517 + $0x1] sm:$0xff]
      %v1150 = vld [vmem:[%s517 + $0x9] sm:$0xff]
      %v1151 = vld [vmem:[%s517 + $0x19] sm:$0xff]
      %v1152 = vld [vmem:[%s517 + $0x21] sm:$0xff]
      %v1153 = vld [vmem:[%s517 + $0x31] sm:$0xff]
      %v1154 = vld [vmem:[%s517 + $0x39] sm:$0xff]
      %v1155 = vld [vmem:[%s517 + $0x49] sm:$0xff]
      %v1156 = vld [vmem:[%s517 + $0x51] sm:$0xff]
      %s1157 = scalar_lea.vmem %s6, 256
      %v1158 = vld [vmem:[%s1157] sm:$0xff]
      %v1159 = vld [vmem:[%s1157 + $0x8] sm:$0xff]
      %v1160 = vld [vmem:[%s1157 + $0x10] sm:$0xff]
      %v1161 = vld [vmem:[%s1157 + $0x18] sm:$0xff]
      %v1162 = vld [vmem:[%s1157 + $0x20] sm:$0xff]
      %v1163 = vld [vmem:[%s1157 + $0x28] sm:$0xff]
      %v1164 = vld [vmem:[%s1157 + $0x30] sm:$0xff]
      %v1165 = vld [vmem:[%s1157 + $0x38] sm:$0xff]
      %v1167 = vsel %vm514, %v1149, 0
      %v1170 = vsel %vm514, %v1150, 0
      %v1173 = vsel %vm514, %v1151, 0
      %v1176 = vsel %vm514, %v1152, 0
      %v1179 = vsel %vm514, %v1153, 0
      %v1182 = vsel %vm514, %v1154, 0
      %v1185 = vsel %vm514, %v1155, 0
      %v1188 = vsel %vm514, %v1156, 0
      %1190 = vmatprep.subr.mxu0 0.0
      %1191 = vmatpush1.msra.mxu0 %v1158
      %1192 = vmatprep.subr.mxu0 0.0
      %1193 = vmatpush1.msra.mxu0 %v1159
      %1194 = vmatprep.subr.mxu0 0.0
      %1195 = vmatpush1.msra.mxu0 %v1160
      %1196 = vmatprep.subr.mxu0 0.0
      %1197 = vmatpush1.msra.mxu0 %v1161
      %1198 = vmatprep.subr.mxu0 0.0
      %1199 = vmatpush1.msra.mxu0 %v1162
      %1200 = vmatprep.subr.mxu0 0.0
      %1201 = vmatpush1.msra.mxu0 %v1163
      %1202 = vmatprep.subr.mxu0 0.0
      %1203 = vmatpush1.msra.mxu0 %v1164
      %1204 = vmatprep.subr.mxu0 0.0
      %1205 = vmatpush1.msra.mxu0 %v1165
      %1206 = vmatprep.subr.mxu0 0.0
      %1207 = vmatpush1.msra.mxu0 0.0
      %1208 = vmatprep.subr.mxu0 0.0
      %1209 = vmatpush1.msra.mxu0 0.0
      %1210 = vmatprep.subr.mxu0 0.0
      %1211 = vmatpush1.msra.mxu0 0.0
      %1212 = vmatprep.subr.mxu0 0.0
      %1213 = vmatpush1.msra.mxu0 0.0
      %1214 = vmatprep.subr.mxu0 0.0
      %1215 = vmatpush1.msra.mxu0 0.0
      %1216 = vmatprep.subr.mxu0 0.0
      %1217 = vmatpush1.msra.mxu0 0.0
      %1218 = vmatprep.subr.mxu0 0.0
      %1219 = vmatpush1.msra.mxu0 0.0
      %1220 = vmatprep.subr.mxu0 0.0
      %1221 = vmatpush1.msra.mxu0 0.0
      %1222 = vmatprep.subr.mxu0 0.0
      %1223 = vmatpush1.msra.mxu0 0.0
      %1224 = vmatprep.subr.mxu0 0.0
      %1225 = vmatpush1.msra.mxu0 0.0
      %1226 = vmatprep.subr.mxu0 0.0
      %1227 = vmatpush1.msra.mxu0 0.0
      %1228 = vmatprep.subr.mxu0 0.0
      %1229 = vmatpush1.msra.mxu0 0.0
      %1230 = vmatprep.subr.mxu0 0.0
      %1231 = vmatpush1.msra.mxu0 0.0
      %1232 = vmatprep.subr.mxu0 0.0
      %1233 = vmatpush1.msra.mxu0 0.0
      %1234 = vmatprep.subr.mxu0 0.0
      %1235 = vmatpush1.msra.mxu0 0.0
      %1236 = vmatprep.subr.mxu0 0.0
      %1237 = vmatpush1.msra.mxu0 0.0
      %1238 = vmatprep.subr.mxu0 0.0
      %1239 = vmatpush1.msra.mxu0 0.0
      %1240 = vmatprep.subr.mxu0 0.0
      %1241 = vmatpush1.msra.mxu0 0.0
      %1242 = vmatprep.subr.mxu0 0.0
      %1243 = vmatpush1.msra.mxu0 0.0
      %1244 = vmatprep.subr.mxu0 0.0
      %1245 = vmatpush1.msra.mxu0 0.0
      %1246 = vmatprep.subr.mxu0 0.0
      %1247 = vmatpush1.msra.mxu0 0.0
      %1248 = vmatprep.subr.mxu0 0.0
      %1249 = vmatpush1.msra.mxu0 0.0
      %1250 = vmatprep.subr.mxu0 0.0
      %1251 = vmatpush1.msra.mxu0 0.0
      %1252 = vmatprep.subr.mxu0 0.0
      %1253 = vmatpush1.msra.mxu0 0.0
      %1254 = vmatprep.mubr.f32.mxu0 0.0
      %1255 = vmatmul.mubr.f32.gmra.mrb[0].mxu0 %v1167
      %v1256 = vpop.f32.mrb[0].mxu0
      %v1257 = vadd.f32 0.0, %v1256
      %v1258 = vpop.f32.mrb[0].mxu0
      %1259 = vmatprep.mubr.f32.mxu0 0.0
      %1260 = vmatmul.mubr.f32.gmra.mrb[0].mxu0 %v1170
      %v1261 = vpop.f32.mrb[0].mxu0
      %v1262 = vadd.f32 0.0, %v1261
      %v1263 = vpop.f32.mrb[0].mxu0
      %1264 = vmatprep.mubr.f32.mxu0 0.0
      %1265 = vmatmul.mubr.f32.gmra.mrb[0].mxu0 %v1173
      %v1266 = vpop.f32.mrb[0].mxu0
      %v1267 = vadd.f32 0.0, %v1266
      %v1268 = vpop.f32.mrb[0].mxu0
      %1269 = vmatprep.mubr.f32.mxu0 0.0
      %1270 = vmatmul.mubr.f32.gmra.mrb[0].mxu0 %v1176
      %v1271 = vpop.f32.mrb[0].mxu0
      %v1272 = vadd.f32 0.0, %v1271
      %v1273 = vpop.f32.mrb[0].mxu0
      %1274 = vmatprep.mubr.f32.mxu0 0.0
      %1275 = vmatmul.mubr.f32.gmra.mrb[0].mxu0 %v1179
      %v1276 = vpop.f32.mrb[0].mxu0
      %v1277 = vadd.f32 0.0, %v1276
      %v1278 = vpop.f32.mrb[0].mxu0
      %1279 = vmatprep.mubr.f32.mxu0 0.0
      %1280 = vmatmul.mubr.f32.gmra.mrb[0].mxu0 %v1182
      %v1281 = vpop.f32.mrb[0].mxu0
      %v1282 = vadd.f32 0.0, %v1281
      %v1283 = vpop.f32.mrb[0].mxu0
      %1284 = vmatprep.mubr.f32.mxu0 0.0
      %1285 = vmatmul.mubr.f32.gmra.mrb[0].mxu0 %v1185
      %v1286 = vpop.f32.mrb[0].mxu0
      %v1287 = vadd.f32 0.0, %v1286
      %v1288 = vpop.f32.mrb[0].mxu0
      %1289 = vmatprep.mubr.f32.mxu0 0.0
      %1290 = vmatmul.mubr.f32.gmra.mrb[0].mxu0 %v1188
      %v1291 = vpop.f32.mrb[0].mxu0
      %v1292 = vadd.f32 0.0, %v1291
      %v1293 = vpop.f32.mrb[0].mxu0
      %1294 = vdwg.mxu0
      %v1295 = vadd.f32 %v1141, %v1257
      %v1296 = vadd.f32 %v1142, %v1262
      %v1297 = vadd.f32 %v1143, %v1267
      %v1298 = vadd.f32 %v1144, %v1272
      %v1299 = vadd.f32 %v1145, %v1277
      %v1300 = vadd.f32 %v1146, %v1282
      %v1301 = vadd.f32 %v1147, %v1287
      %v1302 = vadd.f32 %v1148, %v1292
      %v1303 = vld [vmem:[%s517 + $0x2] sm:$0xff]
      %v1304 = vld [vmem:[%s517 + $0xa] sm:$0xff]
      %v1305 = vld [vmem:[%s517 + $0x1a] sm:$0xff]
      %v1306 = vld [vmem:[%s517 + $0x22] sm:$0xff]
      %v1307 = vld [vmem:[%s517 + $0x32] sm:$0xff]
      %v1308 = vld [vmem:[%s517 + $0x3a] sm:$0xff]
      %v1309 = vld [vmem:[%s517 + $0x4a] sm:$0xff]
      %v1310 = vld [vmem:[%s517 + $0x52] sm:$0xff]
      %s1311 = scalar_lea.vmem %s6, 320
      %v1312 = vld [vmem:[%s1311] sm:$0xff]
      %v1313 = vld [vmem:[%s1311 + $0x8] sm:$0xff]
      %v1314 = vld [vmem:[%s1311 + $0x10] sm:$0xff]
      %v1315 = vld [vmem:[%s1311 + $0x18] sm:$0xff]
      %v1316 = vld [vmem:[%s1311 + $0x20] sm:$0xff]
      %v1317 = vld [vmem:[%s1311 + $0x28] sm:$0xff]
      %v1318 = vld [vmem:[%s1311 + $0x30] sm:$0xff]
      %v1319 = vld [vmem:[%s1311 + $0x38] sm:$0xff]
      %v1321 = vsel %vm514, %v1303, 0
      %v1324 = vsel %vm514, %v1304, 0
      %v1327 = vsel %vm514, %v1305, 0
      %v1330 = vsel %vm514, %v1306, 0
      %v1333 = vsel %vm514, %v1307, 0
      %v1336 = vsel %vm514, %v1308, 0
      %v1339 = vsel %vm514, %v1309, 0
      %v1342 = vsel %vm514, %v1310, 0
      %1344 = vmatprep.subr.mxu0 0.0
      %1345 = vmatpush1.msra.mxu0 %v1312
      %1346 = vmatprep.subr.mxu0 0.0
      %1347 = vmatpush1.msra.mxu0 %v1313
      %1348 = vmatprep.subr.mxu0 0.0
      %1349 = vmatpush1.msra.mxu0 %v1314
      %1350 = vmatprep.subr.mxu0 0.0
      %1351 = vmatpush1.msra.mxu0 %v1315
      %1352 = vmatprep.subr.mxu0 0.0
      %1353 = vmatpush1.msra.mxu0 %v1316
      %1354 = vmatprep.subr.mxu0 0.0
      %1355 = vmatpush1.msra.mxu0 %v1317
      %1356 = vmatprep.subr.mxu0 0.0
      %1357 = vmatpush1.msra.mxu0 %v1318
      %1358 = vmatprep.subr.mxu0 0.0
      %1359 = vmatpush1.msra.mxu0 %v1319
      %1360 = vmatprep.subr.mxu0 0.0
      %1361 = vmatpush1.msra.mxu0 0.0
      %1362 = vmatprep.subr.mxu0 0.0
      %1363 = vmatpush1.msra.mxu0 0.0
      %1364 = vmatprep.subr.mxu0 0.0
      %1365 = vmatpush1.msra.mxu0 0.0
      %1366 = vmatprep.subr.mxu0 0.0
      %1367 = vmatpush1.msra.mxu0 0.0
      %1368 = vmatprep.subr.mxu0 0.0
      %1369 = vmatpush1.msra.mxu0 0.0
      %1370 = vmatprep.subr.mxu0 0.0
      %1371 = vmatpush1.msra.mxu0 0.0
      %1372 = vmatprep.subr.mxu0 0.0
      %1373 = vmatpush1.msra.mxu0 0.0
      %1374 = vmatprep.subr.mxu0 0.0
      %1375 = vmatpush1.msra.mxu0 0.0
      %1376 = vmatprep.subr.mxu0 0.0
      %1377 = vmatpush1.msra.mxu0 0.0
      %1378 = vmatprep.subr.mxu0 0.0
      %1379 = vmatpush1.msra.mxu0 0.0
      %1380 = vmatprep.subr.mxu0 0.0
      %1381 = vmatpush1.msra.mxu0 0.0
      %1382 = vmatprep.subr.mxu0 0.0
      %1383 = vmatpush1.msra.mxu0 0.0
      %1384 = vmatprep.subr.mxu0 0.0
      %1385 = vmatpush1.msra.mxu0 0.0
      %1386 = vmatprep.subr.mxu0 0.0
      %1387 = vmatpush1.msra.mxu0 0.0
      %1388 = vmatprep.subr.mxu0 0.0
      %1389 = vmatpush1.msra.mxu0 0.0
      %1390 = vmatprep.subr.mxu0 0.0
      %1391 = vmatpush1.msra.mxu0 0.0
      %1392 = vmatprep.subr.mxu0 0.0
      %1393 = vmatpush1.msra.mxu0 0.0
      %1394 = vmatprep.subr.mxu0 0.0
      %1395 = vmatpush1.msra.mxu0 0.0
      %1396 = vmatprep.subr.mxu0 0.0
      %1397 = vmatpush1.msra.mxu0 0.0
      %1398 = vmatprep.subr.mxu0 0.0
      %1399 = vmatpush1.msra.mxu0 0.0
      %1400 = vmatprep.subr.mxu0 0.0
      %1401 = vmatpush1.msra.mxu0 0.0
      %1402 = vmatprep.subr.mxu0 0.0
      %1403 = vmatpush1.msra.mxu0 0.0
      %1404 = vmatprep.subr.mxu0 0.0
      %1405 = vmatpush1.msra.mxu0 0.0
      %1406 = vmatprep.subr.mxu0 0.0
      %1407 = vmatpush1.msra.mxu0 0.0
      %1408 = vmatprep.mubr.f32.mxu0 0.0
      %1409 = vmatmul.mubr.f32.gmra.mrb[0].mxu0 %v1321
      %v1410 = vpop.f32.mrb[0].mxu0
      %v1411 = vadd.f32 0.0, %v1410
      %v1412 = vpop.f32.mrb[0].mxu0
      %1413 = vmatprep.mubr.f32.mxu0 0.0
      %1414 = vmatmul.mubr.f32.gmra.mrb[0].mxu0 %v1324
      %v1415 = vpop.f32.mrb[0].mxu0
      %v1416 = vadd.f32 0.0, %v1415
      %v1417 = vpop.f32.mrb[0].mxu0
      %1418 = vmatprep.mubr.f32.mxu0 0.0
      %1419 = vmatmul.mubr.f32.gmra.mrb[0].mxu0 %v1327
      %v1420 = vpop.f32.mrb[0].mxu0
      %v1421 = vadd.f32 0.0, %v1420
      %v1422 = vpop.f32.mrb[0].mxu0
      %1423 = vmatprep.mubr.f32.mxu0 0.0
      %1424 = vmatmul.mubr.f32.gmra.mrb[0].mxu0 %v1330
      %v1425 = vpop.f32.mrb[0].mxu0
      %v1426 = vadd.f32 0.0, %v1425
      %v1427 = vpop.f32.mrb[0].mxu0
      %1428 = vmatprep.mubr.f32.mxu0 0.0
      %1429 = vmatmul.mubr.f32.gmra.mrb[0].mxu0 %v1333
      %v1430 = vpop.f32.mrb[0].mxu0
      %v1431 = vadd.f32 0.0, %v1430
      %v1432 = vpop.f32.mrb[0].mxu0
      %1433 = vmatprep.mubr.f32.mxu0 0.0
      %1434 = vmatmul.mubr.f32.gmra.mrb[0].mxu0 %v1336
      %v1435 = vpop.f32.mrb[0].mxu0
      %v1436 = vadd.f32 0.0, %v1435
      %v1437 = vpop.f32.mrb[0].mxu0
      %1438 = vmatprep.mubr.f32.mxu0 0.0
      %1439 = vmatmul.mubr.f32.gmra.mrb[0].mxu0 %v1339
      %v1440 = vpop.f32.mrb[0].mxu0
      %v1441 = vadd.f32 0.0, %v1440
      %v1442 = vpop.f32.mrb[0].mxu0
      %1443 = vmatprep.mubr.f32.mxu0 0.0
      %1444 = vmatmul.mubr.f32.gmra.mrb[0].mxu0 %v1342
      %v1445 = vpop.f32.mrb[0].mxu0
      %v1446 = vadd.f32 0.0, %v1445
      %v1447 = vpop.f32.mrb[0].mxu0
      %1448 = vdwg.mxu0
      %v1449 = vadd.f32 %v1295, %v1411
      %v1450 = vadd.f32 %v1296, %v1416
      %v1451 = vadd.f32 %v1297, %v1421
      %v1452 = vadd.f32 %v1298, %v1426
      %v1453 = vadd.f32 %v1299, %v1431
      %v1454 = vadd.f32 %v1300, %v1436
      %v1455 = vadd.f32 %v1301, %v1441
      %v1456 = vadd.f32 %v1302, %v1446
      %v1457 = vld [vmem:[%s522] sm:$0xff]
      %v1458 = vld [vmem:[%s522 + $0x8] sm:$0xff]
      %v1459 = vld [vmem:[%s522 + $0x18] sm:$0xff]
      %v1460 = vld [vmem:[%s522 + $0x20] sm:$0xff]
      %v1461 = vld [vmem:[%s522 + $0x30] sm:$0xff]
      %v1462 = vld [vmem:[%s522 + $0x38] sm:$0xff]
      %v1463 = vld [vmem:[%s522 + $0x48] sm:$0xff]
      %v1464 = vld [vmem:[%s522 + $0x50] sm:$0xff]
      %s1465 = scalar_lea.vmem %s6, 384
      %v1466 = vld [vmem:[%s1465] sm:$0xff]
      %v1467 = vld [vmem:[%s1465 + $0x8] sm:$0xff]
      %v1468 = vld [vmem:[%s1465 + $0x10] sm:$0xff]
      %v1469 = vld [vmem:[%s1465 + $0x18] sm:$0xff]
      %v1470 = vld [vmem:[%s1465 + $0x20] sm:$0xff]
      %v1471 = vld [vmem:[%s1465 + $0x28] sm:$0xff]
      %v1472 = vld [vmem:[%s1465 + $0x30] sm:$0xff]
      %v1473 = vld [vmem:[%s1465 + $0x38] sm:$0xff]
      %v1475 = vsel %vm514, %v1457, 0
      %v1478 = vsel %vm514, %v1458, 0
      %v1481 = vsel %vm514, %v1459, 0
      %v1484 = vsel %vm514, %v1460, 0
      %v1487 = vsel %vm514, %v1461, 0
      %v1490 = vsel %vm514, %v1462, 0
      %v1493 = vsel %vm514, %v1463, 0
      %v1496 = vsel %vm514, %v1464, 0
      %1498 = vmatprep.subr.mxu0 0.0
      %1499 = vmatpush1.msra.mxu0 %v1466
      %1500 = vmatprep.subr.mxu0 0.0
      %1501 = vmatpush1.msra.mxu0 %v1467
      %1502 = vmatprep.subr.mxu0 0.0
      %1503 = vmatpush1.msra.mxu0 %v1468
      %1504 = vmatprep.subr.mxu0 0.0
      %1505 = vmatpush1.msra.mxu0 %v1469
      %1506 = vmatprep.subr.mxu0 0.0
      %1507 = vmatpush1.msra.mxu0 %v1470
      %1508 = vmatprep.subr.mxu0 0.0
      %1509 = vmatpush1.msra.mxu0 %v1471
      %1510 = vmatprep.subr.mxu0 0.0
      %1511 = vmatpush1.msra.mxu0 %v1472
      %1512 = vmatprep.subr.mxu0 0.0
      %1513 = vmatpush1.msra.mxu0 %v1473
      %1514 = vmatprep.subr.mxu0 0.0
      %1515 = vmatpush1.msra.mxu0 0.0
      %1516 = vmatprep.subr.mxu0 0.0
      %1517 = vmatpush1.msra.mxu0 0.0
      %1518 = vmatprep.subr.mxu0 0.0
      %1519 = vmatpush1.msra.mxu0 0.0
      %1520 = vmatprep.subr.mxu0 0.0
      %1521 = vmatpush1.msra.mxu0 0.0
      %1522 = vmatprep.subr.mxu0 0.0
      %1523 = vmatpush1.msra.mxu0 0.0
      %1524 = vmatprep.subr.mxu0 0.0
      %1525 = vmatpush1.msra.mxu0 0.0
      %1526 = vmatprep.subr.mxu0 0.0
      %1527 = vmatpush1.msra.mxu0 0.0
      %1528 = vmatprep.subr.mxu0 0.0
      %1529 = vmatpush1.msra.mxu0 0.0
      %1530 = vmatprep.subr.mxu0 0.0
      %1531 = vmatpush1.msra.mxu0 0.0
      %1532 = vmatprep.subr.mxu0 0.0
      %1533 = vmatpush1.msra.mxu0 0.0
      %1534 = vmatprep.subr.mxu0 0.0
      %1535 = vmatpush1.msra.mxu0 0.0
      %1536 = vmatprep.subr.mxu0 0.0
      %1537 = vmatpush1.msra.mxu0 0.0
      %1538 = vmatprep.subr.mxu0 0.0
      %1539 = vmatpush1.msra.mxu0 0.0
      %1540 = vmatprep.subr.mxu0 0.0
      %1541 = vmatpush1.msra.mxu0 0.0
      %1542 = vmatprep.subr.mxu0 0.0
      %1543 = vmatpush1.msra.mxu0 0.0
      %1544 = vmatprep.subr.mxu0 0.0
      %1545 = vmatpush1.msra.mxu0 0.0
      %1546 = vmatprep.subr.mxu0 0.0
      %1547 = vmatpush1.msra.mxu0 0.0
      %1548 = vmatprep.subr.mxu0 0.0
      %1549 = vmatpush1.msra.mxu0 0.0
      %1550 = vmatprep.subr.mxu0 0.0
      %1551 = vmatpush1.msra.mxu0 0.0
      %1552 = vmatprep.subr.mxu0 0.0
      %1553 = vmatpush1.msra.mxu0 0.0
      %1554 = vmatprep.subr.mxu0 0.0
      %1555 = vmatpush1.msra.mxu0 0.0
      %1556 = vmatprep.subr.mxu0 0.0
      %1557 = vmatpush1.msra.mxu0 0.0
      %1558 = vmatprep.subr.mxu0 0.0
      %1559 = vmatpush1.msra.mxu0 0.0
      %1560 = vmatprep.subr.mxu0 0.0
      %1561 = vmatpush1.msra.mxu0 0.0
      %1562 = vmatprep.mubr.f32.mxu0 0.0
      %1563 = vmatmul.mubr.f32.gmra.mrb[0].mxu0 %v1475
      %v1564 = vpop.f32.mrb[0].mxu0
      %v1565 = vadd.f32 0.0, %v1564
      %v1566 = vpop.f32.mrb[0].mxu0
      %1567 = vmatprep.mubr.f32.mxu0 0.0
      %1568 = vmatmul.mubr.f32.gmra.mrb[0].mxu0 %v1478
      %v1569 = vpop.f32.mrb[0].mxu0
      %v1570 = vadd.f32 0.0, %v1569
      %v1571 = vpop.f32.mrb[0].mxu0
      %1572 = vmatprep.mubr.f32.mxu0 0.0
      %1573 = vmatmul.mubr.f32.gmra.mrb[0].mxu0 %v1481
      %v1574 = vpop.f32.mrb[0].mxu0
      %v1575 = vadd.f32 0.0, %v1574
      %v1576 = vpop.f32.mrb[0].mxu0
      %1577 = vmatprep.mubr.f32.mxu0 0.0
      %1578 = vmatmul.mubr.f32.gmra.mrb[0].mxu0 %v1484
      %v1579 = vpop.f32.mrb[0].mxu0
      %v1580 = vadd.f32 0.0, %v1579
      %v1581 = vpop.f32.mrb[0].mxu0
      %1582 = vmatprep.mubr.f32.mxu0 0.0
      %1583 = vmatmul.mubr.f32.gmra.mrb[0].mxu0 %v1487
      %v1584 = vpop.f32.mrb[0].mxu0
      %v1585 = vadd.f32 0.0, %v1584
      %v1586 = vpop.f32.mrb[0].mxu0
      %1587 = vmatprep.mubr.f32.mxu0 0.0
      %1588 = vmatmul.mubr.f32.gmra.mrb[0].mxu0 %v1490
      %v1589 = vpop.f32.mrb[0].mxu0
      %v1590 = vadd.f32 0.0, %v1589
      %v1591 = vpop.f32.mrb[0].mxu0
      %1592 = vmatprep.mubr.f32.mxu0 0.0
      %1593 = vmatmul.mubr.f32.gmra.mrb[0].mxu0 %v1493
      %v1594 = vpop.f32.mrb[0].mxu0
      %v1595 = vadd.f32 0.0, %v1594
      %v1596 = vpop.f32.mrb[0].mxu0
      %1597 = vmatprep.mubr.f32.mxu0 0.0
      %1598 = vmatmul.mubr.f32.gmra.mrb[0].mxu0 %v1496
      %v1599 = vpop.f32.mrb[0].mxu0
      %v1600 = vadd.f32 0.0, %v1599
      %v1601 = vpop.f32.mrb[0].mxu0
      %1602 = vdwg.mxu0
      %v1603 = vadd.f32 %v1449, %v1565
      %v1604 = vadd.f32 %v1450, %v1570
      %v1605 = vadd.f32 %v1451, %v1575
      %v1606 = vadd.f32 %v1452, %v1580
      %v1607 = vadd.f32 %v1453, %v1585
      %v1608 = vadd.f32 %v1454, %v1590
      %v1609 = vadd.f32 %v1455, %v1595
      %v1610 = vadd.f32 %v1456, %v1600
      %v1611 = vld [vmem:[%s522 + $0x1] sm:$0xff]
      %v1612 = vld [vmem:[%s522 + $0x9] sm:$0xff]
      %v1613 = vld [vmem:[%s522 + $0x19] sm:$0xff]
      %v1614 = vld [vmem:[%s522 + $0x21] sm:$0xff]
      %v1615 = vld [vmem:[%s522 + $0x31] sm:$0xff]
      %v1616 = vld [vmem:[%s522 + $0x39] sm:$0xff]
      %v1617 = vld [vmem:[%s522 + $0x49] sm:$0xff]
      %v1618 = vld [vmem:[%s522 + $0x51] sm:$0xff]
      %s1619 = scalar_lea.vmem %s6, 448
      %v1620 = vld [vmem:[%s1619] sm:$0xff]
      %v1621 = vld [vmem:[%s1619 + $0x8] sm:$0xff]
      %v1622 = vld [vmem:[%s1619 + $0x10] sm:$0xff]
      %v1623 = vld [vmem:[%s1619 + $0x18] sm:$0xff]
      %v1624 = vld [vmem:[%s1619 + $0x20] sm:$0xff]
      %v1625 = vld [vmem:[%s1619 + $0x28] sm:$0xff]
      %v1626 = vld [vmem:[%s1619 + $0x30] sm:$0xff]
      %v1627 = vld [vmem:[%s1619 + $0x38] sm:$0xff]
      %v1629 = vsel %vm514, %v1611, 0
      %v1632 = vsel %vm514, %v1612, 0
      %v1635 = vsel %vm514, %v1613, 0
      %v1638 = vsel %vm514, %v1614, 0
      %v1641 = vsel %vm514, %v1615, 0
      %v1644 = vsel %vm514, %v1616, 0
      %v1647 = vsel %vm514, %v1617, 0
      %v1650 = vsel %vm514, %v1618, 0
      %1652 = vmatprep.subr.mxu0 0.0
      %1653 = vmatpush1.msra.mxu0 %v1620
      %1654 = vmatprep.subr.mxu0 0.0
      %1655 = vmatpush1.msra.mxu0 %v1621
      %1656 = vmatprep.subr.mxu0 0.0
      %1657 = vmatpush1.msra.mxu0 %v1622
      %1658 = vmatprep.subr.mxu0 0.0
      %1659 = vmatpush1.msra.mxu0 %v1623
      %1660 = vmatprep.subr.mxu0 0.0
      %1661 = vmatpush1.msra.mxu0 %v1624
      %1662 = vmatprep.subr.mxu0 0.0
      %1663 = vmatpush1.msra.mxu0 %v1625
      %1664 = vmatprep.subr.mxu0 0.0
      %1665 = vmatpush1.msra.mxu0 %v1626
      %1666 = vmatprep.subr.mxu0 0.0
      %1667 = vmatpush1.msra.mxu0 %v1627
      %1668 = vmatprep.subr.mxu0 0.0
      %1669 = vmatpush1.msra.mxu0 0.0
      %1670 = vmatprep.subr.mxu0 0.0
      %1671 = vmatpush1.msra.mxu0 0.0
      %1672 = vmatprep.subr.mxu0 0.0
      %1673 = vmatpush1.msra.mxu0 0.0
      %1674 = vmatprep.subr.mxu0 0.0
      %1675 = vmatpush1.msra.mxu0 0.0
      %1676 = vmatprep.subr.mxu0 0.0
      %1677 = vmatpush1.msra.mxu0 0.0
      %1678 = vmatprep.subr.mxu0 0.0
      %1679 = vmatpush1.msra.mxu0 0.0
      %1680 = vmatprep.subr.mxu0 0.0
      %1681 = vmatpush1.msra.mxu0 0.0
      %1682 = vmatprep.subr.mxu0 0.0
      %1683 = vmatpush1.msra.mxu0 0.0
      %1684 = vmatprep.subr.mxu0 0.0
      %1685 = vmatpush1.msra.mxu0 0.0
      %1686 = vmatprep.subr.mxu0 0.0
      %1687 = vmatpush1.msra.mxu0 0.0
      %1688 = vmatprep.subr.mxu0 0.0
      %1689 = vmatpush1.msra.mxu0 0.0
      %1690 = vmatprep.subr.mxu0 0.0
      %1691 = vmatpush1.msra.mxu0 0.0
      %1692 = vmatprep.subr.mxu0 0.0
      %1693 = vmatpush1.msra.mxu0 0.0
      %1694 = vmatprep.subr.mxu0 0.0
      %1695 = vmatpush1.msra.mxu0 0.0
      %1696 = vmatprep.subr.mxu0 0.0
      %1697 = vmatpush1.msra.mxu0 0.0
      %1698 = vmatprep.subr.mxu0 0.0
      %1699 = vmatpush1.msra.mxu0 0.0
      %1700 = vmatprep.subr.mxu0 0.0
      %1701 = vmatpush1.msra.mxu0 0.0
      %1702 = vmatprep.subr.mxu0 0.0
      %1703 = vmatpush1.msra.mxu0 0.0
      %1704 = vmatprep.subr.mxu0 0.0
      %1705 = vmatpush1.msra.mxu0 0.0
      %1706 = vmatprep.subr.mxu0 0.0
      %1707 = vmatpush1.msra.mxu0 0.0
      %1708 = vmatprep.subr.mxu0 0.0
      %1709 = vmatpush1.msra.mxu0 0.0
      %1710 = vmatprep.subr.mxu0 0.0
      %1711 = vmatpush1.msra.mxu0 0.0
      %1712 = vmatprep.subr.mxu0 0.0
      %1713 = vmatpush1.msra.mxu0 0.0
      %1714 = vmatprep.subr.mxu0 0.0
      %1715 = vmatpush1.msra.mxu0 0.0
      %1716 = vmatprep.mubr.f32.mxu0 0.0
      %1717 = vmatmul.mubr.f32.gmra.mrb[0].mxu0 %v1629
      %v1718 = vpop.f32.mrb[0].mxu0
      %v1719 = vadd.f32 0.0, %v1718
      %v1720 = vpop.f32.mrb[0].mxu0
      %1721 = vmatprep.mubr.f32.mxu0 0.0
      %1722 = vmatmul.mubr.f32.gmra.mrb[0].mxu0 %v1632
      %v1723 = vpop.f32.mrb[0].mxu0
      %v1724 = vadd.f32 0.0, %v1723
      %v1725 = vpop.f32.mrb[0].mxu0
      %1726 = vmatprep.mubr.f32.mxu0 0.0
      %1727 = vmatmul.mubr.f32.gmra.mrb[0].mxu0 %v1635
      %v1728 = vpop.f32.mrb[0].mxu0
      %v1729 = vadd.f32 0.0, %v1728
      %v1730 = vpop.f32.mrb[0].mxu0
      %1731 = vmatprep.mubr.f32.mxu0 0.0
      %1732 = vmatmul.mubr.f32.gmra.mrb[0].mxu0 %v1638
      %v1733 = vpop.f32.mrb[0].mxu0
      %v1734 = vadd.f32 0.0, %v1733
      %v1735 = vpop.f32.mrb[0].mxu0
      %1736 = vmatprep.mubr.f32.mxu0 0.0
      %1737 = vmatmul.mubr.f32.gmra.mrb[0].mxu0 %v1641
      %v1738 = vpop.f32.mrb[0].mxu0
      %v1739 = vadd.f32 0.0, %v1738
      %v1740 = vpop.f32.mrb[0].mxu0
      %1741 = vmatprep.mubr.f32.mxu0 0.0
      %1742 = vmatmul.mubr.f32.gmra.mrb[0].mxu0 %v1644
      %v1743 = vpop.f32.mrb[0].mxu0
      %v1744 = vadd.f32 0.0, %v1743
      %v1745 = vpop.f32.mrb[0].mxu0
      %1746 = vmatprep.mubr.f32.mxu0 0.0
      %1747 = vmatmul.mubr.f32.gmra.mrb[0].mxu0 %v1647
      %v1748 = vpop.f32.mrb[0].mxu0
      %v1749 = vadd.f32 0.0, %v1748
      %v1750 = vpop.f32.mrb[0].mxu0
      %1751 = vmatprep.mubr.f32.mxu0 0.0
      %1752 = vmatmul.mubr.f32.gmra.mrb[0].mxu0 %v1650
      %v1753 = vpop.f32.mrb[0].mxu0
      %v1754 = vadd.f32 0.0, %v1753
      %v1755 = vpop.f32.mrb[0].mxu0
      %1756 = vdwg.mxu0
      %v1757 = vadd.f32 %v1603, %v1719
      %v1758 = vadd.f32 %v1604, %v1724
      %v1759 = vadd.f32 %v1605, %v1729
      %v1760 = vadd.f32 %v1606, %v1734
      %v1761 = vadd.f32 %v1607, %v1739
      %v1762 = vadd.f32 %v1608, %v1744
      %v1763 = vadd.f32 %v1609, %v1749
      %v1764 = vadd.f32 %v1610, %v1754
      %v1765 = vld [vmem:[%s522 + $0x2] sm:$0xff]
      %v1766 = vld [vmem:[%s522 + $0xa] sm:$0xff]
      %v1767 = vld [vmem:[%s522 + $0x1a] sm:$0xff]
      %v1768 = vld [vmem:[%s522 + $0x22] sm:$0xff]
      %v1769 = vld [vmem:[%s522 + $0x32] sm:$0xff]
      %v1770 = vld [vmem:[%s522 + $0x3a] sm:$0xff]
      %v1771 = vld [vmem:[%s522 + $0x4a] sm:$0xff]
      %v1772 = vld [vmem:[%s522 + $0x52] sm:$0xff]
      %s1773 = scalar_lea.vmem %s6, 512
      %v1774 = vld [vmem:[%s1773] sm:$0xff]
      %v1775 = vld [vmem:[%s1773 + $0x8] sm:$0xff]
      %v1776 = vld [vmem:[%s1773 + $0x10] sm:$0xff]
      %v1777 = vld [vmem:[%s1773 + $0x18] sm:$0xff]
      %v1778 = vld [vmem:[%s1773 + $0x20] sm:$0xff]
      %v1779 = vld [vmem:[%s1773 + $0x28] sm:$0xff]
      %v1780 = vld [vmem:[%s1773 + $0x30] sm:$0xff]
      %v1781 = vld [vmem:[%s1773 + $0x38] sm:$0xff]
      %v1783 = vsel %vm514, %v1765, 0
      %v1786 = vsel %vm514, %v1766, 0
      %v1789 = vsel %vm514, %v1767, 0
      %v1792 = vsel %vm514, %v1768, 0
      %v1795 = vsel %vm514, %v1769, 0
      %v1798 = vsel %vm514, %v1770, 0
      %v1801 = vsel %vm514, %v1771, 0
      %v1804 = vsel %vm514, %v1772, 0
      %1806 = vmatprep.subr.mxu0 0.0
      %1807 = vmatpush1.msra.mxu0 %v1774
      %1808 = vmatprep.subr.mxu0 0.0
      %1809 = vmatpush1.msra.mxu0 %v1775
      %1810 = vmatprep.subr.mxu0 0.0
      %1811 = vmatpush1.msra.mxu0 %v1776
      %1812 = vmatprep.subr.mxu0 0.0
      %1813 = vmatpush1.msra.mxu0 %v1777
      %1814 = vmatprep.subr.mxu0 0.0
      %1815 = vmatpush1.msra.mxu0 %v1778
      %1816 = vmatprep.subr.mxu0 0.0
      %1817 = vmatpush1.msra.mxu0 %v1779
      %1818 = vmatprep.subr.mxu0 0.0
      %1819 = vmatpush1.msra.mxu0 %v1780
      %1820 = vmatprep.subr.mxu0 0.0
      %1821 = vmatpush1.msra.mxu0 %v1781
      %1822 = vmatprep.subr.mxu0 0.0
      %1823 = vmatpush1.msra.mxu0 0.0
      %1824 = vmatprep.subr.mxu0 0.0
      %1825 = vmatpush1.msra.mxu0 0.0
      %1826 = vmatprep.subr.mxu0 0.0
      %1827 = vmatpush1.msra.mxu0 0.0
      %1828 = vmatprep.subr.mxu0 0.0
      %1829 = vmatpush1.msra.mxu0 0.0
      %1830 = vmatprep.subr.mxu0 0.0
      %1831 = vmatpush1.msra.mxu0 0.0
      %1832 = vmatprep.subr.mxu0 0.0
      %1833 = vmatpush1.msra.mxu0 0.0
      %1834 = vmatprep.subr.mxu0 0.0
      %1835 = vmatpush1.msra.mxu0 0.0
      %1836 = vmatprep.subr.mxu0 0.0
      %1837 = vmatpush1.msra.mxu0 0.0
      %1838 = vmatprep.subr.mxu0 0.0
      %1839 = vmatpush1.msra.mxu0 0.0
      %1840 = vmatprep.subr.mxu0 0.0
      %1841 = vmatpush1.msra.mxu0 0.0
      %1842 = vmatprep.subr.mxu0 0.0
      %1843 = vmatpush1.msra.mxu0 0.0
      %1844 = vmatprep.subr.mxu0 0.0
      %1845 = vmatpush1.msra.mxu0 0.0
      %1846 = vmatprep.subr.mxu0 0.0
      %1847 = vmatpush1.msra.mxu0 0.0
      %1848 = vmatprep.subr.mxu0 0.0
      %1849 = vmatpush1.msra.mxu0 0.0
      %1850 = vmatprep.subr.mxu0 0.0
      %1851 = vmatpush1.msra.mxu0 0.0
      %1852 = vmatprep.subr.mxu0 0.0
      %1853 = vmatpush1.msra.mxu0 0.0
      %1854 = vmatprep.subr.mxu0 0.0
      %1855 = vmatpush1.msra.mxu0 0.0
      %1856 = vmatprep.subr.mxu0 0.0
      %1857 = vmatpush1.msra.mxu0 0.0
      %1858 = vmatprep.subr.mxu0 0.0
      %1859 = vmatpush1.msra.mxu0 0.0
      %1860 = vmatprep.subr.mxu0 0.0
      %1861 = vmatpush1.msra.mxu0 0.0
      %1862 = vmatprep.subr.mxu0 0.0
      %1863 = vmatpush1.msra.mxu0 0.0
      %1864 = vmatprep.subr.mxu0 0.0
      %1865 = vmatpush1.msra.mxu0 0.0
      %1866 = vmatprep.subr.mxu0 0.0
      %1867 = vmatpush1.msra.mxu0 0.0
      %1868 = vmatprep.subr.mxu0 0.0
      %1869 = vmatpush1.msra.mxu0 0.0
      %1870 = vmatprep.mubr.f32.mxu0 0.0
      %1871 = vmatmul.mubr.f32.gmra.mrb[0].mxu0 %v1783
      %v1872 = vpop.f32.mrb[0].mxu0
      %v1873 = vadd.f32 0.0, %v1872
      %v1874 = vpop.f32.mrb[0].mxu0
      %1875 = vmatprep.mubr.f32.mxu0 0.0
      %1876 = vmatmul.mubr.f32.gmra.mrb[0].mxu0 %v1786
      %v1877 = vpop.f32.mrb[0].mxu0
      %v1878 = vadd.f32 0.0, %v1877
      %v1879 = vpop.f32.mrb[0].mxu0
      %1880 = vmatprep.mubr.f32.mxu0 0.0
      %1881 = vmatmul.mubr.f32.gmra.mrb[0].mxu0 %v1789
      %v1882 = vpop.f32.mrb[0].mxu0
      %v1883 = vadd.f32 0.0, %v1882
      %v1884 = vpop.f32.mrb[0].mxu0
      %1885 = vmatprep.mubr.f32.mxu0 0.0
      %1886 = vmatmul.mubr.f32.gmra.mrb[0].mxu0 %v1792
      %v1887 = vpop.f32.mrb[0].mxu0
      %v1888 = vadd.f32 0.0, %v1887
      %v1889 = vpop.f32.mrb[0].mxu0
      %1890 = vmatprep.mubr.f32.mxu0 0.0
      %1891 = vmatmul.mubr.f32.gmra.mrb[0].mxu0 %v1795
      %v1892 = vpop.f32.mrb[0].mxu0
      %v1893 = vadd.f32 0.0, %v1892
      %v1894 = vpop.f32.mrb[0].mxu0
      %1895 = vmatprep.mubr.f32.mxu0 0.0
      %1896 = vmatmul.mubr.f32.gmra.mrb[0].mxu0 %v1798
      %v1897 = vpop.f32.mrb[0].mxu0
      %v1898 = vadd.f32 0.0, %v1897
      %v1899 = vpop.f32.mrb[0].mxu0
      %1900 = vmatprep.mubr.f32.mxu0 0.0
      %1901 = vmatmul.mubr.f32.gmra.mrb[0].mxu0 %v1801
      %v1902 = vpop.f32.mrb[0].mxu0
      %v1903 = vadd.f32 0.0, %v1902
      %v1904 = vpop.f32.mrb[0].mxu0
      %1905 = vmatprep.mubr.f32.mxu0 0.0
      %1906 = vmatmul.mubr.f32.gmra.mrb[0].mxu0 %v1804
      %v1907 = vpop.f32.mrb[0].mxu0
      %v1908 = vadd.f32 0.0, %v1907
      %v1909 = vpop.f32.mrb[0].mxu0
      %1910 = vdwg.mxu0
      %v1911 = vadd.f32 %v1757, %v1873
      %v1912 = vadd.f32 %v1758, %v1878
      %v1913 = vadd.f32 %v1759, %v1883
      %v1914 = vadd.f32 %v1760, %v1888
      %v1915 = vadd.f32 %v1761, %v1893
      %v1916 = vadd.f32 %v1762, %v1898
      %v1917 = vadd.f32 %v1763, %v1903
      %v1918 = vadd.f32 %v1764, %v1908
      %v1919 = vld [vmem:[%s5] sm:$0x1]
      %v1921 = vlaneseq
      %v1922 = vshrl.u32 %v1921, 7
      %v1923 = vsub.s32 0, %v1922
      %v1924 = vrot.slane %v1919, %v1923
      %v1926 = vadd.f32 %v1911, %v1924
      %v1927 = vadd.f32 %v1912, %v1924
      %v1928 = vadd.f32 %v1913, %v1924
      %v1929 = vadd.f32 %v1914, %v1924
      %v1930 = vadd.f32 %v1915, %v1924
      %v1931 = vadd.f32 %v1916, %v1924
      %v1932 = vadd.f32 %v1917, %v1924
      %v1933 = vadd.f32 %v1918, %v1924
      %1934 = vst [vmem:[%s485] sm:$0xff] %v1926
      %1935 = vst [vmem:[%s485 + $0x8] sm:$0xff] %v1927
      %1936 = vst [vmem:[%s485 + $0x10] sm:$0xff] %v1928
      %1937 = vst [vmem:[%s485 + $0x18] sm:$0xff] %v1929
      %1938 = vst [vmem:[%s485 + $0x20] sm:$0xff] %v1930
      %1939 = vst [vmem:[%s485 + $0x28] sm:$0xff] %v1931
      %1940 = vst [vmem:[%s485 + $0x30] sm:$0xff] %v1932
      %1941 = vst [vmem:[%s485 + $0x38] sm:$0xff] %v1933
      %v1942 = vadd.f32 %v1926, %v1927
      %v1943 = vadd.f32 %v1942, %v1928
      %v1944 = vadd.f32 %v1943, %v1929
      %v1945 = vadd.f32 %v1944, %v1930
      %v1946 = vadd.f32 %v1945, %v1931
      %v1947 = vadd.f32 %v1946, %v1932
      %v1948 = vadd.f32 %v1947, %v1933
      %v1949 = vrot.slane %v1948, 4
      %v1950 = vadd.f32 %v1948, %v1949
      %v1951 = vrot.slane %v1950, 2
      %v1952 = vadd.f32 %v1950, %v1951
      %v1953 = vrot.slane %v1952, 1
      %v1954 = vadd.f32 %v1952, %v1953
      %1955 = vst [vmem:[%s494] sm:$0x1] %v1954
      %v1956 = vmul.f32 %v1926, %v1926
      %v1957 = vmul.f32 %v1927, %v1927
      %v1958 = vmul.f32 %v1928, %v1928
      %v1959 = vmul.f32 %v1929, %v1929
      %v1960 = vmul.f32 %v1930, %v1930
      %v1961 = vmul.f32 %v1931, %v1931
      %v1962 = vmul.f32 %v1932, %v1932
      %v1963 = vmul.f32 %v1933, %v1933
      %v1964 = vadd.f32 %v1956, %v1957
      %v1965 = vadd.f32 %v1964, %v1958
      %v1966 = vadd.f32 %v1965, %v1959
      %v1967 = vadd.f32 %v1966, %v1960
      %v1968 = vadd.f32 %v1967, %v1961
      %v1969 = vadd.f32 %v1968, %v1962
      %v1970 = vadd.f32 %v1969, %v1963
      %v1971 = vrot.slane %v1970, 4
      %v1972 = vadd.f32 %v1970, %v1971
      %v1973 = vrot.slane %v1972, 2
      %v1974 = vadd.f32 %v1972, %v1973
      %v1975 = vrot.slane %v1974, 1
      %v1976 = vadd.f32 %v1974, %v1975
      %1977 = vst [vmem:[%s494 + $0x1] sm:$0x1] %v1976
      %s1978 = smul.u32 4, %s25
      %p1979 = scmp.lt.s32.totalorder %s24, 1
      %s1980 = scalar_select %p1979, %s24, 1
      %p1981 = scmp.lt.s32.totalorder %s1978, 15
      %s1982 = scalar_select %p1981, %s1978, 15
      %s1983 = smul.addr %s1982, 2
      %s1984 = smul.addr %s1980, 32
      %s1985 = sadd.s32 %s1983, %s1984
      %s1986 = smul.addr %s1985, 8
      %s1987 = scalar_lea.vmem %s7, %s1986
      %p1988 = scmp.lt.s32.totalorder %s24, 1
      %s1989 = scalar_select %p1988, %s24, 1
      %p1990 = scmp.lt.s32.totalorder %s25, 3
      %s1991 = scalar_select %p1990, %s25, 3
      %s1992 = smul.addr %s1989, 4
      %s1993 = sadd.s32 %s1991, %s1992
      %s1994 = smul.addr %s1993, 2
      %s1995 = scalar_lea.vmem %s8, %s1994
      // Predicated region
      $region49: #{std_conv_block_skip.2} parent=47 // pred_check
        %p1996 = pneg %p236
      $region50: #{std_conv_block_skip.2} parent=47 // pred_check_branch
        %1998 = sbr.rel (%p1996) target = $region52
      $region51: #{std_conv_block_skip.2} parent=47 // pred_region
        %s1999 = smul.u32 4, %s25
      $region52: #{std_conv_block_skip.2} parent=47 // pred_fallthru
        _
      // Predicated region
      $region53: #{std_conv_block_skip.2} parent=47 // pred_check
        %p2000 = pneg %p264
      $region54: #{std_conv_block_skip.2} parent=47 // pred_check_branch
        %2002 = sbr.rel (%p2000) target = $region56
      $region55: #{std_conv_block_skip.2} parent=47 // pred_region
        _
      $region56: #{std_conv_block_skip.2} parent=47 // pred_fallthru
        _
    $region48: #{std_conv_block_skip.2} parent=5 // pred_fallthru
      _
    %p2003 = scmp.le.s32.totalorder 2, %s15
    // Predicated region
    $region57: #{std_conv_block_skip.2} parent=5 // pred_check
      %p2004 = pneg %p2003
    $region58: #{std_conv_block_skip.2} parent=5 // pred_check_branch
      %2006 = sbr.rel (%p2004) target = $region60
    $region59: #{std_conv_block_skip.2} parent=5 // pred_region
      %s2007 = ssub.s32 %s15, 2
      // Predicated region
      $region61: #{std_conv_block_skip.2} parent=59 // pred_check
        %p2008 = pneg %p242
      $region62: #{std_conv_block_skip.2} parent=59 // pred_check_branch
        %2010 = sbr.rel (%p2008) target = $region64
      $region63: #{std_conv_block_skip.2} parent=59 // pred_region
        %s2011 = smul.u32 4, %s27
        %p2012 = scmp.lt.s32.totalorder %s26, 1
        %s2013 = scalar_select %p2012, %s26, 1
        %p2014 = scmp.lt.s32.totalorder %s2011, 15
        %s2015 = scalar_select %p2014, %s2011, 15
        %s2016 = smul.addr %s2015, 2
        %s2017 = smul.addr %s2013, 32
        %s2018 = sadd.s32 %s2016, %s2017
        %s2019 = smul.addr %s2018, 8
        %s2020 = scalar_lea.vmem %s7, %s2019
      $region64: #{std_conv_block_skip.2} parent=59 // pred_fallthru
        _
      // Predicated region
      $region65: #{std_conv_block_skip.2} parent=59 // pred_check
        %p2021 = pneg %p270
      $region66: #{std_conv_block_skip.2} parent=59 // pred_check_branch
        %2023 = sbr.rel (%p2021) target = $region68
      $region67: #{std_conv_block_skip.2} parent=59 // pred_region
        %p2024 = scmp.lt.s32.totalorder %s26, 1
        %s2025 = scalar_select %p2024, %s26, 1
        %p2026 = scmp.lt.s32.totalorder %s27, 3
        %s2027 = scalar_select %p2026, %s27, 3
        %s2028 = smul.addr %s2025, 4
        %s2029 = sadd.s32 %s2027, %s2028
        %s2030 = smul.addr %s2029, 2
        %s2031 = scalar_lea.vmem %s8, %s2030
      $region68: #{std_conv_block_skip.2} parent=59 // pred_fallthru
        _
    $region60: #{std_conv_block_skip.2} parent=5 // pred_fallthru
      _
  $region6: #{std_conv_block_skip.2} parent=0 // loop_footer
    %s19 = sadd.s32 1, %s15
  $region7: #{std_conv_block_skip.2} parent=0 // loop_footer_branch
    %14 = sbr.rel target = $region3
  $region8: #{std_conv_block_skip.2} parent=0 // loop_exit
    _

// kernel: std_conv_block_skip.3
$region0: #{std_conv_block_skip.3}
  #allocation0 [shape = 'u32[]', space=smem, size = 0x4, offset = 0x4, fixed_abs, tag = 'smem constant byte address 0x4 - core index']
  #allocation1 [shape = 'u32[144,128]{1,0:T(1,128)}', space=vmem, size = 0x12000, scoped, tag = 'internal scratch']
  #allocation2 [shape = 'f32[6,18,128]{2,1,0:T(8,128)}', space=vmem, size = 0x12000, scoped, tag = 'scratch operand']
  %s0 = inlined_call_operand.vmem [shape: f32[2,16,16,128], index: 0, kind: input, shape index: {}, may-alias: {0,1,2}]
  %s1 = inlined_call_operand.vmem [shape: f32[2,16,16,128], index: 1, kind: input, shape index: {}, may-alias: {0,1,2}]
  %s2 = inlined_call_operand.vmem [shape: f32[2,16,16,128], index: 2, kind: input, shape index: {}, may-alias: {0,1,2}]
  %s3 = inlined_call_operand.vmem [shape: f32[1,128], index: 3, kind: input, shape index: {}]
  %s4 = inlined_call_operand.vmem [shape: f32[1,128], index: 4, kind: input, shape index: {}]
  %s5 = inlined_call_operand.vmem [shape: f32[1,128], index: 5, kind: input, shape index: {}]
  %s6 = inlined_call_operand.vmem [shape: f32[9,128,128], index: 6, kind: input, shape index: {}]
  %s7 = inlined_call_operand.vmem [shape: f32[2,16,16,128], index: 7, kind: output, shape index: {}]
  %s8 = sld [smem:[#allocation0]]
  $region61: #{std_conv_block_skip.3} parent=0
    _
  %s10 = ssub.s32 1, %s8
  %s11 = scalar_select 0, %s10, %s8
  loop: start=0, step=1, limit=10
  $region2: #{std_conv_block_skip.3} parent=0 // loop_pre_header
    _
  $region3: #{std_conv_block_skip.3} parent=0 // loop_header
    %s13 = sphi 0, %s17
    %p14 = scmp.ge.s32.totalorder %s13, 10
    %s20 = sphi 0, %s32
    %s21 = sphi 0, %s28
    %s22 = sphi 0, %s20
    %s23 = sphi 0, %s21
    %s24 = sphi 0, %s22
    %s25 = sphi 0, %s23
    %s45 = sphi 0, %s47
    %s48 = sphi 0, %s45
    %s49 = sphi 0, %s48
    %s65 = sphi 0, %s49
    %s73 = sphi 0, %s75
    %s76 = sphi 0, %s73
    %s77 = sphi 0, %s76
    %s93 = sphi 0, %s77
    %s109 = sphi 0, %s111
    %s112 = sphi 0, %s109
    %s113 = sphi 0, %s112
    %s129 = sphi 0, %s113
    %s133 = sphi 0, %s133
    %s135 = sphi 0, %s133
    %s136 = sphi 0, %s135
    %s150 = sphi 0, %s136
    %s154 = sphi 0, %s154
    %s156 = sphi 0, %s154
    %s157 = sphi 0, %s156
    %s171 = sphi 0, %s157
    %s175 = sphi 0, %s175
    %s177 = sphi 0, %s175
    %s178 = sphi 0, %s177
    %s192 = sphi 0, %s178
    %s196 = sphi 0, %s196
    %s198 = sphi 0, %s196
    %s199 = sphi 0, %s198
    %s213 = sphi 0, %s199
    %s221 = sphi 0, %s223
    %s224 = sphi 0, %s221
    %s225 = sphi 0, %s224
    %s241 = sphi 0, %s225
  $region4: #{std_conv_block_skip.3} parent=0 // loop_header_branch
    %16 = sbr.rel (%p14) target = $region8
  $region5: #{std_conv_block_skip.3} parent=0 // loop_body
    %s18 = ssub.s32 %s13, 1
    %s19 = ssub.s32 %s13, 2
    %s26 = sadd.s32 1, %s21
    %p27 = scmp.ge.s32.totalorder %s26, 4
    %s28 = scalar_select %p27, 0, %s26
    %s29 = sadd.s32 1, %s20
    %s30 = scalar_select %p27, %s29, %s20
    %p31 = scmp.ge.s32.totalorder %s30, 2
    %s32 = scalar_select %p31, 0, %s30
    %s33 = smul.u32 %s21, 4
    %s34 = ssub.s32 %s33, 1
    %p35 = scmp.gt.s32.totalorder %s34, 0
    %s36 = scalar_select %p35, %s34, 0
    %s37 = smul.u32 %s28, 4
    %s38 = ssub.s32 %s37, 1
    %p39 = scmp.gt.s32.totalorder %s38, 0
    %s40 = scalar_select %p39, %s38, 0
    %s41 = ssub.s32 %s20, %s32
    %s42 = ssub.s32 %s36, %s40
    %s43 = sor.u32 %s41, %s42
    %p44 = scmp.eq.s32.totalorder %s43, 0
    %s46 = sadd.s32 %s45, 1
    %s47 = scalar_select %p44, %s45, %s46
    %p50 = pneg %p44
    %p51 = scmp.eq.s32.totalorder %s13, 7
    %p52 = por %p50, %p51
    %p53 = scmp.ne.s32.totalorder %s45, %s48
    %p54 = scmp.eq.s32.totalorder %s13, 0
    %p55 = por %p53, %p54
    %p56 = scmp.ne.s32.totalorder %s45, %s48
    %p57 = scmp.eq.s32.totalorder %s18, 7
    %p58 = por %p56, %p57
    %p59 = scmp.ne.s32.totalorder %s48, %s49
    %p60 = scmp.eq.s32.totalorder %s18, 0
    %p61 = por %p59, %p60
    %p62 = scmp.ne.s32.totalorder %s48, %s49
    %p63 = scmp.eq.s32.totalorder %s19, 7
    %p64 = por %p62, %p63
    %p66 = scmp.ne.s32.totalorder %s49, %s65
    %p67 = scmp.eq.s32.totalorder %s19, 0
    %p68 = por %p66, %p67
    %s69 = ssub.s32 %s20, %s32
    %s70 = ssub.s32 %s21, %s28
    %s71 = sor.u32 %s69, %s70
    %p72 = scmp.eq.s32.totalorder %s71, 0
    %s74 = sadd.s32 %s73, 1
    %s75 = scalar_select %p72, %s73, %s74
    %p78 = pneg %p72
    %p79 = scmp.eq.s32.totalorder %s13, 7
    %p80 = por %p78, %p79
    %p81 = scmp.ne.s32.totalorder %s73, %s76
    %p82 = scmp.eq.s32.totalorder %s13, 0
    %p83 = por %p81, %p82
    %p84 = scmp.ne.s32.totalorder %s73, %s76
    %p85 = scmp.eq.s32.totalorder %s18, 7
    %p86 = por %p84, %p85
    %p87 = scmp.ne.s32.totalorder %s76, %s77
    %p88 = scmp.eq.s32.totalorder %s18, 0
    %p89 = por %p87, %p88
    %p90 = scmp.ne.s32.totalorder %s76, %s77
    %p91 = scmp.eq.s32.totalorder %s19, 7
    %p92 = por %p90, %p91
    %p94 = scmp.ne.s32.totalorder %s77, %s93
    %p95 = scmp.eq.s32.totalorder %s19, 0
    %p96 = por %p94, %p95
    %s97 = smul.u32 %s21, 4
    %s98 = sadd.s32 %s97, 4
    %p99 = scmp.lt.s32.totalorder %s98, 15
    %s100 = scalar_select %p99, %s98, 15
    %s101 = smul.u32 %s28, 4
    %s102 = sadd.s32 %s101, 4
    %p103 = scmp.lt.s32.totalorder %s102, 15
    %s104 = scalar_select %p103, %s102, 15
    %s105 = ssub.s32 %s20, %s32
    %s106 = ssub.s32 %s100, %s104
    %s107 = sor.u32 %s105, %s106
    %p108 = scmp.eq.s32.totalorder %s107, 0
    %s110 = sadd.s32 %s109, 1
    %s111 = scalar_select %p108, %s109, %s110
    %p114 = pneg %p108
    %p115 = scmp.eq.s32.totalorder %s13, 7
    %p116 = por %p114, %p115
    %p117 = scmp.ne.s32.totalorder %s109, %s112
    %p118 = scmp.eq.s32.totalorder %s13, 0
    %p119 = por %p117, %p118
    %p120 = scmp.ne.s32.totalorder %s109, %s112
    %p121 = scmp.eq.s32.totalorder %s18, 7
    %p122 = por %p120, %p121
    %p123 = scmp.ne.s32.totalorder %s112, %s113
    %p124 = scmp.eq.s32.totalorder %s18, 0
    %p125 = por %p123, %p124
    %p126 = scmp.ne.s32.totalorder %s112, %s113
    %p127 = scmp.eq.s32.totalorder %s19, 7
    %p128 = por %p126, %p127
    %p130 = scmp.ne.s32.totalorder %s113, %s129
    %p131 = scmp.eq.s32.totalorder %s19, 0
    %p132 = por %p130, %p131
    %s134 = sadd.s32 %s133, 1
    %p137 = scmp.eq.s32.totalorder %s13, 7
    %p138 = scmp.ne.s32.totalorder %s133, %s135
    %p139 = scmp.eq.s32.totalorder %s13, 0
    %p140 = por %p138, %p139
    %p141 = scmp.ne.s32.totalorder %s133, %s135
    %p142 = scmp.eq.s32.totalorder %s18, 7
    %p143 = por %p141, %p142
    %p144 = scmp.ne.s32.totalorder %s135, %s136
    %p145 = scmp.eq.s32.totalorder %s18, 0
    %p146 = por %p144, %p145
    %p147 = scmp.ne.s32.totalorder %s135, %s136
    %p148 = scmp.eq.s32.totalorder %s19, 7
    %p149 = por %p147, %p148
    %p151 = scmp.ne.s32.totalorder %s136, %s150
    %p152 = scmp.eq.s32.totalorder %s19, 0
    %p153 = por %p151, %p152
    %s155 = sadd.s32 %s154, 1
    %p158 = scmp.eq.s32.totalorder %s13, 7
    %p159 = scmp.ne.s32.totalorder %s154, %s156
    %p160 = scmp.eq.s32.totalorder %s13, 0
    %p161 = por %p159, %p160
    %p162 = scmp.ne.s32.totalorder %s154, %s156
    %p163 = scmp.eq.s32.totalorder %s18, 7
    %p164 = por %p162, %p163
    %p165 = scmp.ne.s32.totalorder %s156, %s157
    %p166 = scmp.eq.s32.totalorder %s18, 0
    %p167 = por %p165, %p166
    %p168 = scmp.ne.s32.totalorder %s156, %s157
    %p169 = scmp.eq.s32.totalorder %s19, 7
    %p170 = por %p168, %p169
    %p172 = scmp.ne.s32.totalorder %s157, %s171
    %p173 = scmp.eq.s32.totalorder %s19, 0
    %p174 = por %p172, %p173
    %s176 = sadd.s32 %s175, 1
    %p179 = scmp.eq.s32.totalorder %s13, 7
    %p180 = scmp.ne.s32.totalorder %s175, %s177
    %p181 = scmp.eq.s32.totalorder %s13, 0
    %p182 = por %p180, %p181
    %p183 = scmp.ne.s32.totalorder %s175, %s177
    %p184 = scmp.eq.s32.totalorder %s18, 7
    %p185 = por %p183, %p184
    %p186 = scmp.ne.s32.totalorder %s177, %s178
    %p187 = scmp.eq.s32.totalorder %s18, 0
    %p188 = por %p186, %p187
    %p189 = scmp.ne.s32.totalorder %s177, %s178
    %p190 = scmp.eq.s32.totalorder %s19, 7
    %p191 = por %p189, %p190
    %p193 = scmp.ne.s32.totalorder %s178, %s192
    %p194 = scmp.eq.s32.totalorder %s19, 0
    %p195 = por %p193, %p194
    %s197 = sadd.s32 %s196, 1
    %p200 = scmp.eq.s32.totalorder %s13, 7
    %p201 = scmp.ne.s32.totalorder %s196, %s198
    %p202 = scmp.eq.s32.totalorder %s13, 0
    %p203 = por %p201, %p202
    %p204 = scmp.ne.s32.totalorder %s196, %s198
    %p205 = scmp.eq.s32.totalorder %s18, 7
    %p206 = por %p204, %p205
    %p207 = scmp.ne.s32.totalorder %s198, %s199
    %p208 = scmp.eq.s32.totalorder %s18, 0
    %p209 = por %p207, %p208
    %p210 = scmp.ne.s32.totalorder %s198, %s199
    %p211 = scmp.eq.s32.totalorder %s19, 7
    %p212 = por %p210, %p211
    %p214 = scmp.ne.s32.totalorder %s199, %s213
    %p215 = scmp.eq.s32.totalorder %s19, 0
    %p216 = por %p214, %p215
    %s217 = ssub.s32 %s20, %s32
    %s218 = ssub.s32 %s21, %s28
    %s219 = sor.u32 %s217, %s218
    %p220 = scmp.eq.s32.totalorder %s219, 0
    %s222 = sadd.s32 %s221, 1
    %s223 = scalar_select %p220, %s221, %s222
    %p226 = pneg %p220
    %p227 = scmp.eq.s32.totalorder %s13, 7
    %p228 = por %p226, %p227
    %p229 = scmp.ne.s32.totalorder %s221, %s224
    %p230 = scmp.eq.s32.totalorder %s13, 0
    %p231 = por %p229, %p230
    %p232 = scmp.ne.s32.totalorder %s221, %s224
    %p233 = scmp.eq.s32.totalorder %s18, 7
    %p234 = por %p232, %p233
    %p235 = scmp.ne.s32.totalorder %s224, %s225
    %p236 = scmp.eq.s32.totalorder %s18, 0
    %p237 = por %p235, %p236
    %p238 = scmp.ne.s32.totalorder %s224, %s225
    %p239 = scmp.eq.s32.totalorder %s19, 7
    %p240 = por %p238, %p239
    %p242 = scmp.ne.s32.totalorder %s225, %s241
    %p243 = scmp.eq.s32.totalorder %s19, 0
    %p244 = por %p242, %p243
    %p245 = scmp.le.s32.totalorder 1, %s13
    %p246 = scmp.lt.s32.totalorder %s13, 9
    %p247 = pnand %p245, %p246
    %p248 = pneg %p247
    // Predicated region
    $region9: #{std_conv_block_skip.3} parent=5 // pred_check
      _
    $region10: #{std_conv_block_skip.3} parent=5 // pred_check_branch
      %250 = sbr.rel (%p247) target = $region12
    $region11: #{std_conv_block_skip.3} parent=5 // pred_region
      %s251 = ssub.s32 %s13, 1
      // Predicated region
      $region13: #{std_conv_block_skip.3} parent=11 // pred_check
        %p252 = pneg %p146
      $region14: #{std_conv_block_skip.3} parent=11 // pred_check_branch
        %254 = sbr.rel (%p252) target = $region16
      $region15: #{std_conv_block_skip.3} parent=11 // pred_region
        _
      $region16: #{std_conv_block_skip.3} parent=11 // pred_fallthru
        _
      // Predicated region
      $region17: #{std_conv_block_skip.3} parent=11 // pred_check
        %p255 = pneg %p167
      $region18: #{std_conv_block_skip.3} parent=11 // pred_check_branch
        %257 = sbr.rel (%p255) target = $region20
      $region19: #{std_conv_block_skip.3} parent=11 // pred_region
        _
      $region20: #{std_conv_block_skip.3} parent=11 // pred_fallthru
        _
      // Predicated region
      $region21: #{std_conv_block_skip.3} parent=11 // pred_check
        %p258 = pneg %p188
      $region22: #{std_conv_block_skip.3} parent=11 // pred_check_branch
        %260 = sbr.rel (%p258) target = $region24
      $region23: #{std_conv_block_skip.3} parent=11 // pred_region
        _
      $region24: #{std_conv_block_skip.3} parent=11 // pred_fallthru
        _
      // Predicated region
      $region25: #{std_conv_block_skip.3} parent=11 // pred_check
        %p261 = pneg %p209
      $region26: #{std_conv_block_skip.3} parent=11 // pred_check_branch
        %263 = sbr.rel (%p261) target = $region28
      $region27: #{std_conv_block_skip.3} parent=11 // pred_region
        _
      $region28: #{std_conv_block_skip.3} parent=11 // pred_fallthru
        _
    $region12: #{std_conv_block_skip.3} parent=5 // pred_fallthru
      _
    %p264 = scmp.lt.s32.totalorder %s13, 8
    // Predicated region
    $region29: #{std_conv_block_skip.3} parent=5 // pred_check
      %p265 = pneg %p264
    $region30: #{std_conv_block_skip.3} parent=5 // pred_check_branch
      %267 = sbr.rel (%p265) target = $region32
    $region31: #{std_conv_block_skip.3} parent=5 // pred_region
      // Predicated region
      $region33: #{std_conv_block_skip.3} parent=31 // pred_check
        %p268 = pneg %p55
      $region34: #{std_conv_block_skip.3} parent=31 // pred_check_branch
        %270 = sbr.rel (%p268) target = $region36
      $region35: #{std_conv_block_skip.3} parent=31 // pred_region
        %s271 = smul.u32 %s21, 4
        %s272 = ssub.s32 %s271, 1
        %p273 = scmp.gt.s32.totalorder %s272, 0
        %s274 = scalar_select %p273, %s272, 0
        %p275 = scmp.lt.s32.totalorder %s20, 1
        %s276 = scalar_select %p275, %s20, 1
        %p277 = scmp.lt.s32.totalorder %s274, 15
        %s278 = scalar_select %p277, %s274, 15
        %s279 = smul.addr %s278, 2
        %s280 = smul.addr %s276, 32
        %s281 = sadd.s32 %s279, %s280
        %s282 = smul.addr %s281, 8
        %s283 = scalar_lea.vmem %s0, %s282
        %s284 = smul.u32 %s21, 4
        %s285 = ssub.s32 %s284, 1
        %p286 = scmp.gt.s32.totalorder %s285, 0
        %s287 = scalar_select %p286, %s285, 0
      $region36: #{std_conv_block_skip.3} parent=31 // pred_fallthru
        _
      // Predicated region
      $region37: #{std_conv_block_skip.3} parent=31 // pred_check
        %p288 = pneg %p83
      $region38: #{std_conv_block_skip.3} parent=31 // pred_check_branch
        %290 = sbr.rel (%p288) target = $region40
      $region39: #{std_conv_block_skip.3} parent=31 // pred_region
        %s291 = smul.u32 4, %s21
        %p292 = scmp.lt.s32.totalorder %s20, 1
        %s293 = scalar_select %p292, %s20, 1
        %p294 = scmp.lt.s32.totalorder %s291, 15
        %s295 = scalar_select %p294, %s291, 15
        %s296 = smul.addr %s295, 2
        %s297 = smul.addr %s293, 32
        %s298 = sadd.s32 %s296, %s297
        %s299 = smul.addr %s298, 8
        %s300 = scalar_lea.vmem %s1, %s299
        %s301 = smul.u32 4, %s21
      $region40: #{std_conv_block_skip.3} parent=31 // pred_fallthru
        _
      // Predicated region
      $region41: #{std_conv_block_skip.3} parent=31 // pred_check
        %p302 = pneg %p119
      $region42: #{std_conv_block_skip.3} parent=31 // pred_check_branch
        %304 = sbr.rel (%p302) target = $region44
      $region43: #{std_conv_block_skip.3} parent=31 // pred_region
        %s305 = smul.u32 %s21, 4
        %s306 = sadd.s32 %s305, 4
        %p307 = scmp.lt.s32.totalorder %s306, 15
        %s308 = scalar_select %p307, %s306, 15
        %p309 = scmp.lt.s32.totalorder %s20, 1
        %s310 = scalar_select %p309, %s20, 1
        %p311 = scmp.lt.s32.totalorder %s308, 15
        %s312 = scalar_select %p311, %s308, 15
        %s313 = smul.addr %s312, 2
        %s314 = smul.addr %s310, 32
        %s315 = sadd.s32 %s313, %s314
        %s316 = smul.addr %s315, 8
        %s317 = scalar_lea.vmem %s2, %s316
        %s318 = smul.u32 %s21, 4
        %s319 = sadd.s32 %s318, 4
        %p320 = scmp.lt.s32.totalorder %s319, 15
        %s321 = scalar_select %p320, %s319, 15
      $region44: #{std_conv_block_skip.3} parent=31 // pred_fallthru
        _
    $region32: #{std_conv_block_skip.3} parent=5 // pred_fallthru
      _
    %p322 = scmp.le.s32.totalorder 1, %s13
    %p323 = scmp.lt.s32.totalorder %s13, 9
    %p324 = pnand %p322, %p323
    %p325 = pneg %p324
    // Predicated region
    $region45: #{std_conv_block_skip.3} parent=5 // pred_check
      _
    $region46: #{std_conv_block_skip.3} parent=5 // pred_check_branch
      %327 = sbr.rel (%p324) target = $region48
    $region47: #{std_conv_block_skip.3} parent=5 // pred_region
      %s328 = ssub.s32 %s13, 1
      %s329 = smul.u32 %s23, 4
      %s330 = ssub.s32 %s329, 1
      %p331 = scmp.gt.s32.totalorder %s330, 0
      %s332 = scalar_select %p331, %s330, 0
      %p333 = scmp.lt.s32.totalorder %s22, 1
      %s334 = scalar_select %p333, %s22, 1
      %p335 = scmp.lt.s32.totalorder %s332, 15
      %s336 = scalar_select %p335, %s332, 15
      %s337 = smul.addr %s336, 2
      %s338 = smul.addr %s334, 32
      %s339 = sadd.s32 %s337, %s338
      %s340 = smul.addr %s339, 8
      %s341 = scalar_lea.vmem %s0, %s340
      %p342 = pneg %p61
      %p343 = pneg %p58
      %s344 = smul.u32 4, %s23
      %p345 = scmp.lt.s32.totalorder %s22, 1
      %s346 = scalar_select %p345, %s22, 1
      %p347 = scmp.lt.s32.totalorder %s344, 15
      %s348 = scalar_select %p347, %s344, 15
      %s349 = smul.addr %s348, 2
      %s350 = smul.addr %s346, 32
      %s351 = sadd.s32 %s349, %s350
      %s352 = smul.addr %s351, 8
      %s353 = scalar_lea.vmem %s1, %s352
      %p354 = pneg %p89
      %p355 = pneg %p86
      %s356 = smul.u32 %s23, 4
      %s357 = sadd.s32 %s356, 4
      %p358 = scmp.lt.s32.totalorder %s357, 15
      %s359 = scalar_select %p358, %s357, 15
      %p360 = scmp.lt.s32.totalorder %s22, 1
      %s361 = scalar_select %p360, %s22, 1
      %p362 = scmp.lt.s32.totalorder %s359, 15
      %s363 = scalar_select %p362, %s359, 15
      %s364 = smul.addr %s363, 2
      %s365 = smul.addr %s361, 32
      %s366 = sadd.s32 %s364, %s365
      %s367 = smul.addr %s366, 8
      %s368 = scalar_lea.vmem %s2, %s367
      %p369 = pneg %p125
      %p370 = pneg %p122
      %p371 = pneg %p146
      %p372 = pneg %p143
      %p373 = pneg %p167
      %p374 = pneg %p164
      %p375 = pneg %p188
      %p376 = pneg %p185
      %p377 = pneg %p209
      %p378 = pneg %p206
      %p379 = pneg %p237
      %p380 = pneg %p234
      %s381 = smul.u32 4, %s23
      %p382 = scmp.lt.s32.totalorder %s22, 1
      %s383 = scalar_select %p382, %s22, 1
      %p384 = scmp.lt.s32.totalorder %s381, 15
      %s385 = scalar_select %p384, %s381, 15
      %s386 = smul.addr %s385, 2
      %s387 = smul.addr %s383, 32
      %s388 = sadd.s32 %s386, %s387
      %s389 = smul.addr %s388, 8
      %s390 = scalar_lea.vmem %s7, %s389
      %s391 = smul.u32 %s23, 4
      %s392 = ssub.s32 %s391, 1
      %p393 = scmp.gt.s32.totalorder %s392, 0
      %s394 = scalar_select %p393, %s392, 0
      %p395 = scmp.lt.s32.totalorder %s22, 1
      %s396 = scalar_select %p395, %s22, 1
      %p397 = scmp.lt.s32.totalorder %s394, 15
      %s398 = scalar_select %p397, %s394, 15
      %s399 = smul.addr %s398, 2
      %s400 = smul.addr %s396, 32
      %s401 = sadd.s32 %s399, %s400
      %s402 = smul.addr %s401, 8
      %s403 = scalar_lea.vmem %s0, %s402
      %s404 = smul.u32 %s23, 4
      %s405 = ssub.s32 %s404, 1
      %p406 = scmp.gt.s32.totalorder %s405, 0
      %s407 = scalar_select %p406, %s405, 0
      %s408 = smul.u32 4, %s23
      %p409 = scmp.lt.s32.totalorder %s22, 1
      %s410 = scalar_select %p409, %s22, 1
      %p411 = scmp.lt.s32.totalorder %s408, 15
      %s412 = scalar_select %p411, %s408, 15
      %s413 = smul.addr %s412, 2
      %s414 = smul.addr %s410, 32
      %s415 = sadd.s32 %s413, %s414
      %s416 = smul.addr %s415, 8
      %s417 = scalar_lea.vmem %s1, %s416
      %s418 = smul.u32 4, %s23
      %s419 = smul.u32 %s23, 4
      %s420 = sadd.s32 %s419, 4
      %p421 = scmp.lt.s32.totalorder %s420, 15
      %s422 = scalar_select %p421, %s420, 15
      %p423 = scmp.lt.s32.totalorder %s22, 1
      %s424 = scalar_select %p423, %s22, 1
      %p425 = scmp.lt.s32.totalorder %s422, 15
      %s426 = scalar_select %p425, %s422, 15
      %s427 = smul.addr %s426, 2
      %s428 = smul.addr %s424, 32
      %s429 = sadd.s32 %s427, %s428
      %s430 = smul.addr %s429, 8
      %s431 = scalar_lea.vmem %s2, %s430
      %s432 = smul.u32 %s23, 4
      %s433 = sadd.s32 %s432, 4
      %p434 = scmp.lt.s32.totalorder %s433, 15
      %s435 = scalar_select %p434, %s433, 15
      %s436 = smul.u32 4, %s23
      %p437 = scmp.lt.s32.totalorder %s22, 1
      %s438 = scalar_select %p437, %s22, 1
      %p439 = scmp.lt.s32.totalorder %s436, 15
      %s440 = scalar_select %p439, %s436, 15
      %s441 = smul.addr %s440, 2
      %s442 = smul.addr %s438, 32
      %s443 = sadd.s32 %s441, %s442
      %s444 = smul.addr %s443, 8
      %s445 = scalar_lea.vmem %s7, %s444
      %s446 = smul.u32 4, %s23
      %v447 = vld [vmem:[%s3] sm:$0x1]
      %v448 = vld [vmem:[%s4] sm:$0x1]
      %v449 = vld [vmem:[%s417] sm:$0xff]
      %v450 = vld [vmem:[%s417 + $0x8] sm:$0xff]
      %v451 = vld [vmem:[%s417 + $0x10] sm:$0xff]
      %v452 = vld [vmem:[%s417 + $0x18] sm:$0xff]
      %v453 = vld [vmem:[%s417 + $0x20] sm:$0xff]
      %v454 = vld [vmem:[%s417 + $0x28] sm:$0xff]
      %v455 = vld [vmem:[%s417 + $0x30] sm:$0xff]
      %v456 = vld [vmem:[%s417 + $0x38] sm:$0xff]
      %v457 = vld [vmem:[%s403] sm:$0xff]
      %v458 = vld [vmem:[%s403 + $0x8] sm:$0xff]
      %v460 = vlaneseq
      %v461 = vshrl.u32 %v460, 7
      %v462 = vsub.s32 0, %v461
      %v463 = vrot.slane %v447, %v462
      %v465 = vmul.f32 %v457, %v463
      %v466 = vmul.f32 %v458, %v463
      %v468 = vlaneseq
      %v469 = vshrl.u32 %v468, 7
      %v470 = vsub.s32 0, %v469
      %v471 = vrot.slane %v448, %v470
      %v473 = vadd.f32 %v465, %v471
      %v474 = vadd.f32 %v466, %v471
      %v475 = vmax.f32 %v473, 0.0
      %v476 = vmax.f32 %v474, 0.0
      %p477 = scmp.gt.s32.totalorder %s23, 0
      %s478 = scalar_select %p477, 1, 0
      %v479 = vstv %s478
      %vm480 = vcmp.eq.s32.totalorder %v479, 1
      %v481 = vsel %vm480, %v475, 0.0
      %v482 = vsel %vm480, %v476, 0.0
      %483 = vst [vmem:[#allocation2] sm:$0x1] 0.0
      %484 = vst [vmem:[#allocation2 + $0x11] sm:$0x1] 0.0
      %485 = vst [vmem:[#allocation2 + $0x1] sm:$0xff] %v481
      %486 = vst [vmem:[#allocation2 + $0x9] sm:$0xff] %v482
      %v487 = vmul.f32 %v449, %v463
      %v488 = vmul.f32 %v450, %v463
      %v489 = vadd.f32 %v487, %v471
      %v490 = vadd.f32 %v488, %v471
      %v491 = vmax.f32 %v489, 0.0
      %v492 = vmax.f32 %v490, 0.0
      %s493 = scalar_lea.vmem [#allocation2], 24
      %494 = vst [vmem:[%s493] sm:$0x1] 0.0
      %495 = vst [vmem:[%s493 + $0x11] sm:$0x1] 0.0
      %496 = vst [vmem:[%s493 + $0x1] sm:$0xff] %v491
      %497 = vst [vmem:[%s493 + $0x9] sm:$0xff] %v492
      %v498 = vmul.f32 %v451, %v463
      %v499 = vmul.f32 %v452, %v463
      %v500 = vadd.f32 %v498, %v471
      %v501 = vadd.f32 %v499, %v471
      %v502 = vmax.f32 %v500, 0.0
      %v503 = vmax.f32 %v501, 0.0
      %s504 = scalar_lea.vmem [#allocation2], 48
      %505 = vst [vmem:[%s504] sm:$0x1] 0.0
      %506 = vst [vmem:[%s504 + $0x11] sm:$0x1] 0.0
      %507 = vst [vmem:[%s504 + $0x1] sm:$0xff] %v502
      %508 = vst [vmem:[%s504 + $0x9] sm:$0xff] %v503
      %v509 = vmul.f32 %v453, %v463
      %v510 = vmul.f32 %v454, %v463
      %v511 = vadd.f32 %v509, %v471
      %v512 = vadd.f32 %v510, %v471
      %v513 = vmax.f32 %v511, 0.0
      %v514 = vmax.f32 %v512, 0.0
      %s515 = scalar_lea.vmem [#allocation2], 72
      %516 = vst [vmem:[%s515] sm:$0x1] 0.0
      %517 = vst [vmem:[%s515 + $0x11] sm:$0x1] 0.0
      %518 = vst [vmem:[%s515 + $0x1] sm:$0xff] %v513
      %519 = vst [vmem:[%s515 + $0x9] sm:$0xff] %v514
      %v520 = vmul.f32 %v455, %v463
      %v521 = vmul.f32 %v456, %v463
      %v522 = vadd.f32 %v520, %v471
      %v523 = vadd.f32 %v521, %v471
      %v524 = vmax.f32 %v522, 0.0
      %v525 = vmax.f32 %v523, 0.0
      %s526 = scalar_lea.vmem [#allocation2], 96
      %527 = vst [vmem:[%s526] sm:$0x1] 0.0
      %528 = vst [vmem:[%s526 + $0x11] sm:$0x1] 0.0
      %529 = vst [vmem:[%s526 + $0x1] sm:$0xff] %v524
      %530 = vst [vmem:[%s526 + $0x9] sm:$0xff] %v525
      %v531 = vld [vmem:[%s431] sm:$0xff]
      %v532 = vld [vmem:[%s431 + $0x8] sm:$0xff]
      %v533 = vmul.f32 %v531, %v463
      %v534 = vmul.f32 %v532, %v463
      %v535 = vadd.f32 %v533, %v471
      %v536 = vadd.f32 %v534, %v471
      %v537 = vmax.f32 %v535, 0.0
      %v538 = vmax.f32 %v536, 0.0
      %p539 = scmp.lt.s32.totalorder %s23, 3
      %s540 = scalar_select %p539, 1, 0
      %v541 = vstv %s540
      %vm542 = vcmp.eq.s32.totalorder %v541, 1
      %v543 = vsel %vm542, %v537, 0.0
      %v544 = vsel %vm542, %v538, 0.0
      %s545 = scalar_lea.vmem [#allocation2], 120
      %546 = vst [vmem:[%s545] sm:$0x1] 0.0
      %547 = vst [vmem:[%s545 + $0x11] sm:$0x1] 0.0
      %548 = vst [vmem:[%s545 + $0x1] sm:$0xff] %v543
      %549 = vst [vmem:[%s545 + $0x9] sm:$0xff] %v544
      %v550 = vld [vmem:[#allocation2] sm:$0xff]
      %v551 = vld [vmem:[#allocation2 + $0x8] sm:$0xff]
      %v552 = vld [vmem:[#allocation2 + $0x18] sm:$0xff]
      %v553 = vld [vmem:[#allocation2 + $0x20] sm:$0xff]
      %v554 = vld [vmem:[#allocation2 + $0x30] sm:$0xff]
      %v555 = vld [vmem:[#allocation2 + $0x38] sm:$0xff]
      %v556 = vld [vmem:[#allocation2 + $0x48] sm:$0xff]
      %v557 = vld [vmem:[#allocation2 + $0x50] sm:$0xff]
      %v558 = vld [vmem:[%s6] sm:$0xff]
      %v559 = vld [vmem:[%s6 + $0x8] sm:$0xff]
      %v560 = vld [vmem:[%s6 + $0x10] sm:$0xff]
      %v561 = vld [vmem:[%s6 + $0x18] sm:$0xff]
      %v562 = vld [vmem:[%s6 + $0x20] sm:$0xff]
      %v563 = vld [vmem:[%s6 + $0x28] sm:$0xff]
      %v564 = vld [vmem:[%s6 + $0x30] sm:$0xff]
      %v565 = vld [vmem:[%s6 + $0x38] sm:$0xff]
      %v566 = vld [vmem:[%s6 + $0x40] sm:$0xff]
      %v567 = vld [vmem:[%s6 + $0x48] sm:$0xff]
      %v568 = vld [vmem:[%s6 + $0x50] sm:$0xff]
      %v569 = vld [vmem:[%s6 + $0x58] sm:$0xff]
      %v570 = vld [vmem:[%s6 + $0x60] sm:$0xff]
      %v571 = vld [vmem:[%s6 + $0x68] sm:$0xff]
      %v572 = vld [vmem:[%s6 + $0x70] sm:$0xff]
      %v573 = vld [vmem:[%s6 + $0x78] sm:$0xff]
      %v574 = vld [vmem:[#allocation2 + $0x1] sm:$0xff]
      %v575 = vld [vmem:[#allocation2 + $0x9] sm:$0xff]
      %v576 = vld [vmem:[#allocation2 + $0x19] sm:$0xff]
      %v577 = vld [vmem:[#allocation2 + $0x21] sm:$0xff]
      %v578 = vld [vmem:[#allocation2 + $0x31] sm:$0xff]
      %v579 = vld [vmem:[#allocation2 + $0x39] sm:$0xff]
      %v580 = vld [vmem:[#allocation2 + $0x49] sm:$0xff]
      %v581 = vld [vmem:[#allocation2 + $0x51] sm:$0xff]
      %s582 = scalar_lea.vmem %s6, 128
      %v583 = vld [vmem:[%s582] sm:$0xff]
      %v584 = vld [vmem:[%s582 + $0x8] sm:$0xff]
      %v585 = vld [vmem:[%s582 + $0x10] sm:$0xff]
      %v586 = vld [vmem:[%s582 + $0x18] sm:$0xff]
      %v587 = vld [vmem:[%s582 + $0x20] sm:$0xff]
      %v588 = vld [vmem:[%s582 + $0x28] sm:$0xff]
      %v589 = vld [vmem:[%s582 + $0x30] sm:$0xff]
      %v590 = vld [vmem:[%s582 + $0x38] sm:$0xff]
      %v591 = vld [vmem:[%s582 + $0x40] sm:$0xff]
      %v592 = vld [vmem:[%s582 + $0x48] sm:$0xff]
      %v593 = vld [vmem:[%s582 + $0x50] sm:$0xff]
      %v594 = vld [vmem:[%s582 + $0x58] sm:$0xff]
      %v595 = vld [vmem:[%s582 + $0x60] sm:$0xff]
      %v596 = vld [vmem:[%s582 + $0x68] sm:$0xff]
      %v597 = vld [vmem:[%s582 + $0x70] sm:$0xff]
      %v598 = vld [vmem:[%s582 + $0x78] sm:$0xff]
      %599 = vmatprep.subr.mxu0 0.0
      %600 = vmatpush1.msra.mxu0 %v583
      %601 = vmatprep.subr.mxu0 0.0
      %602 = vmatpush1.msra.mxu0 %v584
      %603 = vmatprep.subr.mxu0 0.0
      %604 = vmatpush1.msra.mxu0 %v585
      %605 = vmatprep.subr.mxu0 0.0
      %606 = vmatpush1.msra.mxu0 %v586
      %607 = vmatprep.subr.mxu0 0.0
      %608 = vmatpush1.msra.mxu0 %v587
      %609 = vmatprep.subr.mxu0 0.0
      %610 = vmatpush1.msra.mxu0 %v588
      %611 = vmatprep.subr.mxu0 0.0
      %612 = vmatpush1.msra.mxu0 %v589
      %613 = vmatprep.subr.mxu0 0.0
      %614 = vmatpush1.msra.mxu0 %v590
      %615 = vmatprep.subr.mxu0 0.0
      %616 = vmatpush1.msra.mxu0 %v591
      %617 = vmatprep.subr.mxu0 0.0
      %618 = vmatpush1.msra.mxu0 %v592
      %619 = vmatprep.subr.mxu0 0.0
      %620 = vmatpush1.msra.mxu0 %v593
      %621 = vmatprep.subr.mxu0 0.0
      %622 = vmatpush1.msra.mxu0 %v594
      %623 = vmatprep.subr.mxu0 0.0
      %624 = vmatpush1.msra.mxu0 %v595
      %625 = vmatprep.subr.mxu0 0.0
      %626 = vmatpush1.msra.mxu0 %v596
      %627 = vmatprep.subr.mxu0 0.0
      %628 = vmatpush1.msra.mxu0 %v597
      %629 = vmatprep.subr.mxu0 0.0
      %630 = vmatpush1.msra.mxu0 %v598
      %631 = vmatprep.subr.mxu0 0.0
      %632 = vmatpush1.msra.mxu0 0.0
      %633 = vmatprep.subr.mxu0 0.0
      %634 = vmatpush1.msra.mxu0 0.0
      %635 = vmatprep.subr.mxu0 0.0
      %636 = vmatpush1.msra.mxu0 0.0
      %637 = vmatprep.subr.mxu0 0.0
      %638 = vmatpush1.msra.mxu0 0.0
      %639 = vmatprep.subr.mxu0 0.0
      %640 = vmatpush1.msra.mxu0 0.0
      %641 = vmatprep.subr.mxu0 0.0
      %642 = vmatpush1.msra.mxu0 0.0
      %643 = vmatprep.subr.mxu0 0.0
      %644 = vmatpush1.msra.mxu0 0.0
      %645 = vmatprep.subr.mxu0 0.0
      %646 = vmatpush1.msra.mxu0 0.0
      %647 = vmatprep.subr.mxu0 0.0
      %648 = vmatpush1.msra.mxu0 0.0
      %649 = vmatprep.subr.mxu0 0.0
      %650 = vmatpush1.msra.mxu0 0.0
      %651 = vmatprep.subr.mxu0 0.0
      %652 = vmatpush1.msra.mxu0 0.0
      %653 = vmatprep.subr.mxu0 0.0
      %654 = vmatpush1.msra.mxu0 0.0
      %655 = vmatprep.subr.mxu0 0.0
      %656 = vmatpush1.msra.mxu0 0.0
      %657 = vmatprep.subr.mxu0 0.0
      %658 = vmatpush1.msra.mxu0 0.0
      %659 = vmatprep.subr.mxu0 0.0
      %660 = vmatpush1.msra.mxu0 0.0
      %661 = vmatprep.subr.mxu0 0.0
      %662 = vmatpush1.msra.mxu0 0.0
      %663 = vmatprep.mubr.f32.mxu0 0.0
      %664 = vmatmul.mubr.f32.gmra.mrb[0].mxu0 %v574
      %v665 = vpop.f32.mrb[0].mxu0
      %v666 = vadd.f32 0.0, %v665
      %v667 = vpop.f32.mrb[0].mxu0
      %668 = vmatprep.mubr.f32.mxu0 0.0
      %669 = vmatmul.mubr.f32.gmra.mrb[0].mxu0 %v575
      %v670 = vpop.f32.mrb[0].mxu0
      %v671 = vadd.f32 0.0, %v670
      %v672 = vpop.f32.mrb[0].mxu0
      %673 = vmatprep.mubr.f32.mxu0 0.0
      %674 = vmatmul.mubr.f32.gmra.mrb[0].mxu0 %v576
      %v675 = vpop.f32.mrb[0].mxu0
      %v676 = vadd.f32 0.0, %v675
      %v677 = vpop.f32.mrb[0].mxu0
      %678 = vmatprep.mubr.f32.mxu0 0.0
      %679 = vmatmul.mubr.f32.gmra.mrb[0].mxu0 %v577
      %v680 = vpop.f32.mrb[0].mxu0
      %v681 = vadd.f32 0.0, %v680
      %v682 = vpop.f32.mrb[0].mxu0
      %683 = vmatprep.mubr.f32.mxu0 0.0
      %684 = vmatmul.mubr.f32.gmra.mrb[0].mxu0 %v578
      %v685 = vpop.f32.mrb[0].mxu0
      %v686 = vadd.f32 0.0, %v685
      %v687 = vpop.f32.mrb[0].mxu0
      %688 = vmatprep.mubr.f32.mxu0 0.0
      %689 = vmatmul.mubr.f32.gmra.mrb[0].mxu0 %v579
      %v690 = vpop.f32.mrb[0].mxu0
      %v691 = vadd.f32 0.0, %v690
      %v692 = vpop.f32.mrb[0].mxu0
      %693 = vmatprep.mubr.f32.mxu0 0.0
      %694 = vmatmul.mubr.f32.gmra.mrb[0].mxu0 %v580
      %v695 = vpop.f32.mrb[0].mxu0
      %v696 = vadd.f32 0.0, %v695
      %v697 = vpop.f32.mrb[0].mxu0
      %698 = vmatprep.mubr.f32.mxu0 0.0
      %699 = vmatmul.mubr.f32.gmra.mrb[0].mxu0 %v581
      %v700 = vpop.f32.mrb[0].mxu0
      %v701 = vadd.f32 0.0, %v700
      %v702 = vpop.f32.mrb[0].mxu0
      %703 = vdwg.mxu0
      %704 = vmatprep.subr.mxu0 0.0
      %705 = vmatpush1.msra.mxu0 %v558
      %706 = vmatprep.subr.mxu0 0.0
      %707 = vmatpush1.msra.mxu0 %v559
      %708 = vmatprep.subr.mxu0 0.0
      %709 = vmatpush1.msra.mxu0 %v560
      %710 = vmatprep.subr.mxu0 0.0
      %711 = vmatpush1.msra.mxu0 %v561
      %712 = vmatprep.subr.mxu0 0.0
      %713 = vmatpush1.msra.mxu0 %v562
      %714 = vmatprep.subr.mxu0 0.0
      %715 = vmatpush1.msra.mxu0 %v563
      %716 = vmatprep.subr.mxu0 0.0
      %717 = vmatpush1.msra.mxu0 %v564
      %718 = vmatprep.subr.mxu0 0.0
      %719 = vmatpush1.msra.mxu0 %v565
      %720 = vmatprep.subr.mxu0 0.0
      %721 = vmatpush1.msra.mxu0 %v566
      %722 = vmatprep.subr.mxu0 0.0
      %723 = vmatpush1.msra.mxu0 %v567
      %724 = vmatprep.subr.mxu0 0.0
      %725 = vmatpush1.msra.mxu0 %v568
      %726 = vmatprep.subr.mxu0 0.0
      %727 = vmatpush1.msra.mxu0 %v569
      %728 = vmatprep.subr.mxu0 0.0
      %729 = vmatpush1.msra.mxu0 %v570
      %730 = vmatprep.subr.mxu0 0.0
      %731 = vmatpush1.msra.mxu0 %v571
      %732 = vmatprep.subr.mxu0 0.0
      %733 = vmatpush1.msra.mxu0 %v572
      %734 = vmatprep.subr.mxu0 0.0
      %735 = vmatpush1.msra.mxu0 %v573
      %736 = vmatprep.subr.mxu0 0.0
      %737 = vmatpush1.msra.mxu0 0.0
      %738 = vmatprep.subr.mxu0 0.0
      %739 = vmatpush1.msra.mxu0 0.0
      %740 = vmatprep.subr.mxu0 0.0
      %741 = vmatpush1.msra.mxu0 0.0
      %742 = vmatprep.subr.mxu0 0.0
      %743 = vmatpush1.msra.mxu0 0.0
      %744 = vmatprep.subr.mxu0 0.0
      %745 = vmatpush1.msra.mxu0 0.0
      %746 = vmatprep.subr.mxu0 0.0
      %747 = vmatpush1.msra.mxu0 0.0
      %748 = vmatprep.subr.mxu0 0.0
      %749 = vmatpush1.msra.mxu0 0.0
      %750 = vmatprep.subr.mxu0 0.0
      %751 = vmatpush1.msra.mxu0 0.0
      %752 = vmatprep.subr.mxu0 0.0
      %753 = vmatpush1.msra.mxu0 0.0
      %754 = vmatprep.subr.mxu0 0.0
      %755 = vmatpush1.msra.mxu0 0.0
      %756 = vmatprep.subr.mxu0 0.0
      %757 = vmatpush1.msra.mxu0 0.0
      %758 = vmatprep.subr.mxu0 0.0
      %759 = vmatpush1.msra.mxu0 0.0
      %760 = vmatprep.subr.mxu0 0.0
      %761 = vmatpush1.msra.mxu0 0.0
      %762 = vmatprep.subr.mxu0 0.0
      %763 = vmatpush1.msra.mxu0 0.0
      %764 = vmatprep.subr.mxu0 0.0
      %765 = vmatpush1.msra.mxu0 0.0
      %766 = vmatprep.subr.mxu0 0.0
      %767 = vmatpush1.msra.mxu0 0.0
      %768 = vmatprep.mubr.f32.mxu0 0.0
      %769 = vmatmul.mubr.f32.gmra.mrb[0].mxu0 %v550
      %v770 = vpop.f32.mrb[0].mxu0
      %v771 = vadd.f32 %v666, %v770
      %v772 = vpop.f32.mrb[0].mxu0
      %773 = vmatprep.mubr.f32.mxu0 0.0
      %774 = vmatmul.mubr.f32.gmra.mrb[0].mxu0 %v551
      %v775 = vpop.f32.mrb[0].mxu0
      %v776 = vadd.f32 %v671, %v775
      %v777 = vpop.f32.mrb[0].mxu0
      %778 = vmatprep.mubr.f32.mxu0 0.0
      %779 = vmatmul.mubr.f32.gmra.mrb[0].mxu0 %v552
      %v780 = vpop.f32.mrb[0].mxu0
      %v781 = vadd.f32 %v676, %v780
      %v782 = vpop.f32.mrb[0].mxu0
      %783 = vmatprep.mubr.f32.mxu0 0.0
      %784 = vmatmul.mubr.f32.gmra.mrb[0].mxu0 %v553
      %v785 = vpop.f32.mrb[0].mxu0
      %v786 = vadd.f32 %v681, %v785
      %v787 = vpop.f32.mrb[0].mxu0
      %788 = vmatprep.mubr.f32.mxu0 0.0
      %789 = vmatmul.mubr.f32.gmra.mrb[0].mxu0 %v554
      %v790 = vpop.f32.mrb[0].mxu0
      %v791 = vadd.f32 %v686, %v790
      %v792 = vpop.f32.mrb[0].mxu0
      %793 = vmatprep.mubr.f32.mxu0 0.0
      %794 = vmatmul.mubr.f32.gmra.mrb[0].mxu0 %v555
      %v795 = vpop.f32.mrb[0].mxu0
      %v796 = vadd.f32 %v691, %v795
      %v797 = vpop.f32.mrb[0].mxu0
      %798 = vmatprep.mubr.f32.mxu0 0.0
      %799 = vmatmul.mubr.f32.gmra.mrb[0].mxu0 %v556
      %v800 = vpop.f32.mrb[0].mxu0
      %v801 = vadd.f32 %v696, %v800
      %v802 = vpop.f32.mrb[0].mxu0
      %803 = vmatprep.mubr.f32.mxu0 0.0
      %804 = vmatmul.mubr.f32.gmra.mrb[0].mxu0 %v557
      %v805 = vpop.f32.mrb[0].mxu0
      %v806 = vadd.f32 %v701, %v805
      %v807 = vpop.f32.mrb[0].mxu0
      %808 = vdwg.mxu0
      %v809 = vld [vmem:[#allocation2 + $0x2] sm:$0xff]
      %v810 = vld [vmem:[#allocation2 + $0xa] sm:$0xff]
      %v811 = vld [vmem:[#allocation2 + $0x1a] sm:$0xff]
      %v812 = vld [vmem:[#allocation2 + $0x22] sm:$0xff]
      %v813 = vld [vmem:[#allocation2 + $0x32] sm:$0xff]
      %v814 = vld [vmem:[#allocation2 + $0x3a] sm:$0xff]
      %v815 = vld [vmem:[#allocation2 + $0x4a] sm:$0xff]
      %v816 = vld [vmem:[#allocation2 + $0x52] sm:$0xff]
      %s817 = scalar_lea.vmem %s6, 256
      %v818 = vld [vmem:[%s817] sm:$0xff]
      %v819 = vld [vmem:[%s817 + $0x8] sm:$0xff]
      %v820 = vld [vmem:[%s817 + $0x10] sm:$0xff]
      %v821 = vld [vmem:[%s817 + $0x18] sm:$0xff]
      %v822 = vld [vmem:[%s817 + $0x20] sm:$0xff]
      %v823 = vld [vmem:[%s817 + $0x28] sm:$0xff]
      %v824 = vld [vmem:[%s817 + $0x30] sm:$0xff]
      %v825 = vld [vmem:[%s817 + $0x38] sm:$0xff]
      %v826 = vld [vmem:[%s817 + $0x40] sm:$0xff]
      %v827 = vld [vmem:[%s817 + $0x48] sm:$0xff]
      %v828 = vld [vmem:[%s817 + $0x50] sm:$0xff]
      %v829 = vld [vmem:[%s817 + $0x58] sm:$0xff]
      %v830 = vld [vmem:[%s817 + $0x60] sm:$0xff]
      %v831 = vld [vmem:[%s817 + $0x68] sm:$0xff]
      %v832 = vld [vmem:[%s817 + $0x70] sm:$0xff]
      %v833 = vld [vmem:[%s817 + $0x78] sm:$0xff]
      %834 = vmatprep.subr.mxu0 0.0
      %835 = vmatpush1.msra.mxu0 %v818
      %836 = vmatprep.subr.mxu0 0.0
      %837 = vmatpush1.msra.mxu0 %v819
      %838 = vmatprep.subr.mxu0 0.0
      %839 = vmatpush1.msra.mxu0 %v820
      %840 = vmatprep.subr.mxu0 0.0
      %841 = vmatpush1.msra.mxu0 %v821
      %842 = vmatprep.subr.mxu0 0.0
      %843 = vmatpush1.msra.mxu0 %v822
      %844 = vmatprep.subr.mxu0 0.0
      %845 = vmatpush1.msra.mxu0 %v823
      %846 = vmatprep.subr.mxu0 0.0
      %847 = vmatpush1.msra.mxu0 %v824
      %848 = vmatprep.subr.mxu0 0.0
      %849 = vmatpush1.msra.mxu0 %v825
      %850 = vmatprep.subr.mxu0 0.0
      %851 = vmatpush1.msra.mxu0 %v826
      %852 = vmatprep.subr.mxu0 0.0
      %853 = vmatpush1.msra.mxu0 %v827
      %854 = vmatprep.subr.mxu0 0.0
      %855 = vmatpush1.msra.mxu0 %v828
      %856 = vmatprep.subr.mxu0 0.0
      %857 = vmatpush1.msra.mxu0 %v829
      %858 = vmatprep.subr.mxu0 0.0
      %859 = vmatpush1.msra.mxu0 %v830
      %860 = vmatprep.subr.mxu0 0.0
      %861 = vmatpush1.msra.mxu0 %v831
      %862 = vmatprep.subr.mxu0 0.0
      %863 = vmatpush1.msra.mxu0 %v832
      %864 = vmatprep.subr.mxu0 0.0
      %865 = vmatpush1.msra.mxu0 %v833
      %866 = vmatprep.subr.mxu0 0.0
      %867 = vmatpush1.msra.mxu0 0.0
      %868 = vmatprep.subr.mxu0 0.0
      %869 = vmatpush1.msra.mxu0 0.0
      %870 = vmatprep.subr.mxu0 0.0
      %871 = vmatpush1.msra.mxu0 0.0
      %872 = vmatprep.subr.mxu0 0.0
      %873 = vmatpush1.msra.mxu0 0.0
      %874 = vmatprep.subr.mxu0 0.0
      %875 = vmatpush1.msra.mxu0 0.0
      %876 = vmatprep.subr.mxu0 0.0
      %877 = vmatpush1.msra.mxu0 0.0
      %878 = vmatprep.subr.mxu0 0.0
      %879 = vmatpush1.msra.mxu0 0.0
      %880 = vmatprep.subr.mxu0 0.0
      %881 = vmatpush1.msra.mxu0 0.0
      %882 = vmatprep.subr.mxu0 0.0
      %883 = vmatpush1.msra.mxu0 0.0
      %884 = vmatprep.subr.mxu0 0.0
      %885 = vmatpush1.msra.mxu0 0.0
      %886 = vmatprep.subr.mxu0 0.0
      %887 = vmatpush1.msra.mxu0 0.0
      %888 = vmatprep.subr.mxu0 0.0
      %889 = vmatpush1.msra.mxu0 0.0
      %890 = vmatprep.subr.mxu0 0.0
      %891 = vmatpush1.msra.mxu0 0.0
      %892 = vmatprep.subr.mxu0 0.0
      %893 = vmatpush1.msra.mxu0 0.0
      %894 = vmatprep.subr.mxu0 0.0
      %895 = vmatpush1.msra.mxu0 0.0
      %896 = vmatprep.subr.mxu0 0.0
      %897 = vmatpush1.msra.mxu0 0.0
      %898 = vmatprep.mubr.f32.mxu0 0.0
      %899 = vmatmul.mubr.f32.gmra.mrb[0].mxu0 %v809
      %v900 = vpop.f32.mrb[0].mxu0
      %v901 = vadd.f32 0.0, %v900
      %v902 = vpop.f32.mrb[0].mxu0
      %903 = vmatprep.mubr.f32.mxu0 0.0
      %904 = vmatmul.mubr.f32.gmra.mrb[0].mxu0 %v810
      %v905 = vpop.f32.mrb[0].mxu0
      %v906 = vadd.f32 0.0, %v905
      %v907 = vpop.f32.mrb[0].mxu0
      %908 = vmatprep.mubr.f32.mxu0 0.0
      %909 = vmatmul.mubr.f32.gmra.mrb[0].mxu0 %v811
      %v910 = vpop.f32.mrb[0].mxu0
      %v911 = vadd.f32 0.0, %v910
      %v912 = vpop.f32.mrb[0].mxu0
      %913 = vmatprep.mubr.f32.mxu0 0.0
      %914 = vmatmul.mubr.f32.gmra.mrb[0].mxu0 %v812
      %v915 = vpop.f32.mrb[0].mxu0
      %v916 = vadd.f32 0.0, %v915
      %v917 = vpop.f32.mrb[0].mxu0
      %918 = vmatprep.mubr.f32.mxu0 0.0
      %919 = vmatmul.mubr.f32.gmra.mrb[0].mxu0 %v813
      %v920 = vpop.f32.mrb[0].mxu0
      %v921 = vadd.f32 0.0, %v920
      %v922 = vpop.f32.mrb[0].mxu0
      %923 = vmatprep.mubr.f32.mxu0 0.0
      %924 = vmatmul.mubr.f32.gmra.mrb[0].mxu0 %v814
      %v925 = vpop.f32.mrb[0].mxu0
      %v926 = vadd.f32 0.0, %v925
      %v927 = vpop.f32.mrb[0].mxu0
      %928 = vmatprep.mubr.f32.mxu0 0.0
      %929 = vmatmul.mubr.f32.gmra.mrb[0].mxu0 %v815
      %v930 = vpop.f32.mrb[0].mxu0
      %v931 = vadd.f32 0.0, %v930
      %v932 = vpop.f32.mrb[0].mxu0
      %933 = vmatprep.mubr.f32.mxu0 0.0
      %934 = vmatmul.mubr.f32.gmra.mrb[0].mxu0 %v816
      %v935 = vpop.f32.mrb[0].mxu0
      %v936 = vadd.f32 0.0, %v935
      %v937 = vpop.f32.mrb[0].mxu0
      %938 = vdwg.mxu0
      %v939 = vadd.f32 %v771, %v901
      %v940 = vadd.f32 %v776, %v906
      %v941 = vadd.f32 %v781, %v911
      %v942 = vadd.f32 %v786, %v916
      %v943 = vadd.f32 %v791, %v921
      %v944 = vadd.f32 %v796, %v926
      %v945 = vadd.f32 %v801, %v931
      %v946 = vadd.f32 %v806, %v936
      %v947 = vld [vmem:[%s493] sm:$0xff]
      %v948 = vld [vmem:[%s493 + $0x8] sm:$0xff]
      %v949 = vld [vmem:[%s493 + $0x18] sm:$0xff]
      %v950 = vld [vmem:[%s493 + $0x20] sm:$0xff]
      %v951 = vld [vmem:[%s493 + $0x30] sm:$0xff]
      %v952 = vld [vmem:[%s493 + $0x38] sm:$0xff]
      %v953 = vld [vmem:[%s493 + $0x48] sm:$0xff]
      %v954 = vld [vmem:[%s493 + $0x50] sm:$0xff]
      %s955 = scalar_lea.vmem %s6, 384
      %v956 = vld [vmem:[%s955] sm:$0xff]
      %v957 = vld [vmem:[%s955 + $0x8] sm:$0xff]
      %v958 = vld [vmem:[%s955 + $0x10] sm:$0xff]
      %v959 = vld [vmem:[%s955 + $0x18] sm:$0xff]
      %v960 = vld [vmem:[%s955 + $0x20] sm:$0xff]
      %v961 = vld [vmem:[%s955 + $0x28] sm:$0xff]
      %v962 = vld [vmem:[%s955 + $0x30] sm:$0xff]
      %v963 = vld [vmem:[%s955 + $0x38] sm:$0xff]
      %v964 = vld [vmem:[%s955 + $0x40] sm:$0xff]
      %v965 = vld [vmem:[%s955 + $0x48] sm:$0xff]
      %v966 = vld [vmem:[%s955 + $0x50] sm:$0xff]
      %v967 = vld [vmem:[%s955 + $0x58] sm:$0xff]
      %v968 = vld [vmem:[%s955 + $0x60] sm:$0xff]
      %v969 = vld [vmem:[%s955 + $0x68] sm:$0xff]
      %v970 = vld [vmem:[%s955 + $0x70] sm:$0xff]
      %v971 = vld [vmem:[%s955 + $0x78] sm:$0xff]
      %972 = vmatprep.subr.mxu0 0.0
      %973 = vmatpush1.msra.mxu0 %v956
      %974 = vmatprep.subr.mxu0 0.0
      %975 = vmatpush1.msra.mxu0 %v957
      %976 = vmatprep.subr.mxu0 0.0
      %977 = vmatpush1.msra.mxu0 %v958
      %978 = vmatprep.subr.mxu0 0.0
      %979 = vmatpush1.msra.mxu0 %v959
      %980 = vmatprep.subr.mxu0 0.0
      %981 = vmatpush1.msra.mxu0 %v960
      %982 = vmatprep.subr.mxu0 0.0
      %983 = vmatpush1.msra.mxu0 %v961
      %984 = vmatprep.subr.mxu0 0.0
      %985 = vmatpush1.msra.mxu0 %v962
      %986 = vmatprep.subr.mxu0 0.0
      %987 = vmatpush1.msra.mxu0 %v963
      %988 = vmatprep.subr.mxu0 0.0
      %989 = vmatpush1.msra.mxu0 %v964
      %990 = vmatprep.subr.mxu0 0.0
      %991 = vmatpush1.msra.mxu0 %v965
      %992 = vmatprep.subr.mxu0 0.0
      %993 = vmatpush1.msra.mxu0 %v966
      %994 = vmatprep.subr.mxu0 0.0
      %995 = vmatpush1.msra.mxu0 %v967
      %996 = vmatprep.subr.mxu0 0.0
      %997 = vmatpush1.msra.mxu0 %v968
      %998 = vmatprep.subr.mxu0 0.0
      %999 = vmatpush1.msra.mxu0 %v969
      %1000 = vmatprep.subr.mxu0 0.0
      %1001 = vmatpush1.msra.mxu0 %v970
      %1002 = vmatprep.subr.mxu0 0.0
      %1003 = vmatpush1.msra.mxu0 %v971
      %1004 = vmatprep.subr.mxu0 0.0
      %1005 = vmatpush1.msra.mxu0 0.0
      %1006 = vmatprep.subr.mxu0 0.0
      %1007 = vmatpush1.msra.mxu0 0.0
      %1008 = vmatprep.subr.mxu0 0.0
      %1009 = vmatpush1.msra.mxu0 0.0
      %1010 = vmatprep.subr.mxu0 0.0
      %1011 = vmatpush1.msra.mxu0 0.0
      %1012 = vmatprep.subr.mxu0 0.0
      %1013 = vmatpush1.msra.mxu0 0.0
      %1014 = vmatprep.subr.mxu0 0.0
      %1015 = vmatpush1.msra.mxu0 0.0
      %1016 = vmatprep.subr.mxu0 0.0
      %1017 = vmatpush1.msra.mxu0 0.0
      %1018 = vmatprep.subr.mxu0 0.0
      %1019 = vmatpush1.msra.mxu0 0.0
      %1020 = vmatprep.subr.mxu0 0.0
      %1021 = vmatpush1.msra.mxu0 0.0
      %1022 = vmatprep.subr.mxu0 0.0
      %1023 = vmatpush1.msra.mxu0 0.0
      %1024 = vmatprep.subr.mxu0 0.0
      %1025 = vmatpush1.msra.mxu0 0.0
      %1026 = vmatprep.subr.mxu0 0.0
      %1027 = vmatpush1.msra.mxu0 0.0
      %1028 = vmatprep.subr.mxu0 0.0
      %1029 = vmatpush1.msra.mxu0 0.0
      %1030 = vmatprep.subr.mxu0 0.0
      %1031 = vmatpush1.msra.mxu0 0.0
      %1032 = vmatprep.subr.mxu0 0.0
      %1033 = vmatpush1.msra.mxu0 0.0
      %1034 = vmatprep.subr.mxu0 0.0
      %1035 = vmatpush1.msra.mxu0 0.0
      %1036 = vmatprep.mubr.f32.mxu0 0.0
      %1037 = vmatmul.mubr.f32.gmra.mrb[0].mxu0 %v947
      %v1038 = vpop.f32.mrb[0].mxu0
      %v1039 = vadd.f32 0.0, %v1038
      %v1040 = vpop.f32.mrb[0].mxu0
      %1041 = vmatprep.mubr.f32.mxu0 0.0
      %1042 = vmatmul.mubr.f32.gmra.mrb[0].mxu0 %v948
      %v1043 = vpop.f32.mrb[0].mxu0
      %v1044 = vadd.f32 0.0, %v1043
      %v1045 = vpop.f32.mrb[0].mxu0
      %1046 = vmatprep.mubr.f32.mxu0 0.0
      %1047 = vmatmul.mubr.f32.gmra.mrb[0].mxu0 %v949
      %v1048 = vpop.f32.mrb[0].mxu0
      %v1049 = vadd.f32 0.0, %v1048
      %v1050 = vpop.f32.mrb[0].mxu0
      %1051 = vmatprep.mubr.f32.mxu0 0.0
      %1052 = vmatmul.mubr.f32.gmra.mrb[0].mxu0 %v950
      %v1053 = vpop.f32.mrb[0].mxu0
      %v1054 = vadd.f32 0.0, %v1053
      %v1055 = vpop.f32.mrb[0].mxu0
      %1056 = vmatprep.mubr.f32.mxu0 0.0
      %1057 = vmatmul.mubr.f32.gmra.mrb[0].mxu0 %v951
      %v1058 = vpop.f32.mrb[0].mxu0
      %v1059 = vadd.f32 0.0, %v1058
      %v1060 = vpop.f32.mrb[0].mxu0
      %1061 = vmatprep.mubr.f32.mxu0 0.0
      %1062 = vmatmul.mubr.f32.gmra.mrb[0].mxu0 %v952
      %v1063 = vpop.f32.mrb[0].mxu0
      %v1064 = vadd.f32 0.0, %v1063
      %v1065 = vpop.f32.mrb[0].mxu0
      %1066 = vmatprep.mubr.f32.mxu0 0.0
      %1067 = vmatmul.mubr.f32.gmra.mrb[0].mxu0 %v953
      %v1068 = vpop.f32.mrb[0].mxu0
      %v1069 = vadd.f32 0.0, %v1068
      %v1070 = vpop.f32.mrb[0].mxu0
      %1071 = vmatprep.mubr.f32.mxu0 0.0
      %1072 = vmatmul.mubr.f32.gmra.mrb[0].mxu0 %v954
      %v1073 = vpop.f32.mrb[0].mxu0
      %v1074 = vadd.f32 0.0, %v1073
      %v1075 = vpop.f32.mrb[0].mxu0
      %1076 = vdwg.mxu0
      %v1077 = vadd.f32 %v939, %v1039
      %v1078 = vadd.f32 %v940, %v1044
      %v1079 = vadd.f32 %v941, %v1049
      %v1080 = vadd.f32 %v942, %v1054
      %v1081 = vadd.f32 %v943, %v1059
      %v1082 = vadd.f32 %v944, %v1064
      %v1083 = vadd.f32 %v945, %v1069
      %v1084 = vadd.f32 %v946, %v1074
      %v1085 = vld [vmem:[%s493 + $0x1] sm:$0xff]
      %v1086 = vld [vmem:[%s493 + $0x9] sm:$0xff]
      %v1087 = vld [vmem:[%s493 + $0x19] sm:$0xff]
      %v1088 = vld [vmem:[%s493 + $0x21] sm:$0xff]
      %v1089 = vld [vmem:[%s493 + $0x31] sm:$0xff]
      %v1090 = vld [vmem:[%s493 + $0x39] sm:$0xff]
      %v1091 = vld [vmem:[%s493 + $0x49] sm:$0xff]
      %v1092 = vld [vmem:[%s493 + $0x51] sm:$0xff]
      %s1093 = scalar_lea.vmem %s6, 512
      %v1094 = vld [vmem:[%s1093] sm:$0xff]
      %v1095 = vld [vmem:[%s1093 + $0x8] sm:$0xff]
      %v1096 = vld [vmem:[%s1093 + $0x10] sm:$0xff]
      %v1097 = vld [vmem:[%s1093 + $0x18] sm:$0xff]
      %v1098 = vld [vmem:[%s1093 + $0x20] sm:$0xff]
      %v1099 = vld [vmem:[%s1093 + $0x28] sm:$0xff]
      %v1100 = vld [vmem:[%s1093 + $0x30] sm:$0xff]
      %v1101 = vld [vmem:[%s1093 + $0x38] sm:$0xff]
      %v1102 = vld [vmem:[%s1093 + $0x40] sm:$0xff]
      %v1103 = vld [vmem:[%s1093 + $0x48] sm:$0xff]
      %v1104 = vld [vmem:[%s1093 + $0x50] sm:$0xff]
      %v1105 = vld [vmem:[%s1093 + $0x58] sm:$0xff]
      %v1106 = vld [vmem:[%s1093 + $0x60] sm:$0xff]
      %v1107 = vld [vmem:[%s1093 + $0x68] sm:$0xff]
      %v1108 = vld [vmem:[%s1093 + $0x70] sm:$0xff]
      %v1109 = vld [vmem:[%s1093 + $0x78] sm:$0xff]
      %1110 = vmatprep.subr.mxu0 0.0
      %1111 = vmatpush1.msra.mxu0 %v1094
      %1112 = vmatprep.subr.mxu0 0.0
      %1113 = vmatpush1.msra.mxu0 %v1095
      %1114 = vmatprep.subr.mxu0 0.0
      %1115 = vmatpush1.msra.mxu0 %v1096
      %1116 = vmatprep.subr.mxu0 0.0
      %1117 = vmatpush1.msra.mxu0 %v1097
      %1118 = vmatprep.subr.mxu0 0.0
      %1119 = vmatpush1.msra.mxu0 %v1098
      %1120 = vmatprep.subr.mxu0 0.0
      %1121 = vmatpush1.msra.mxu0 %v1099
      %1122 = vmatprep.subr.mxu0 0.0
      %1123 = vmatpush1.msra.mxu0 %v1100
      %1124 = vmatprep.subr.mxu0 0.0
      %1125 = vmatpush1.msra.mxu0 %v1101
      %1126 = vmatprep.subr.mxu0 0.0
      %1127 = vmatpush1.msra.mxu0 %v1102
      %1128 = vmatprep.subr.mxu0 0.0
      %1129 = vmatpush1.msra.mxu0 %v1103
      %1130 = vmatprep.subr.mxu0 0.0
      %1131 = vmatpush1.msra.mxu0 %v1104
      %1132 = vmatprep.subr.mxu0 0.0
      %1133 = vmatpush1.msra.mxu0 %v1105
      %1134 = vmatprep.subr.mxu0 0.0
      %1135 = vmatpush1.msra.mxu0 %v1106
      %1136 = vmatprep.subr.mxu0 0.0
      %1137 = vmatpush1.msra.mxu0 %v1107
      %1138 = vmatprep.subr.mxu0 0.0
      %1139 = vmatpush1.msra.mxu0 %v1108
      %1140 = vmatprep.subr.mxu0 0.0
      %1141 = vmatpush1.msra.mxu0 %v1109
      %1142 = vmatprep.subr.mxu0 0.0
      %1143 = vmatpush1.msra.mxu0 0.0
      %1144 = vmatprep.subr.mxu0 0.0
      %1145 = vmatpush1.msra.mxu0 0.0
      %1146 = vmatprep.subr.mxu0 0.0
      %1147 = vmatpush1.msra.mxu0 0.0
      %1148 = vmatprep.subr.mxu0 0.0
      %1149 = vmatpush1.msra.mxu0 0.0
      %1150 = vmatprep.subr.mxu0 0.0
      %1151 = vmatpush1.msra.mxu0 0.0
      %1152 = vmatprep.subr.mxu0 0.0
      %1153 = vmatpush1.msra.mxu0 0.0
      %1154 = vmatprep.subr.mxu0 0.0
      %1155 = vmatpush1.msra.mxu0 0.0
      %1156 = vmatprep.subr.mxu0 0.0
      %1157 = vmatpush1.msra.mxu0 0.0
      %1158 = vmatprep.subr.mxu0 0.0
      %1159 = vmatpush1.msra.mxu0 0.0
      %1160 = vmatprep.subr.mxu0 0.0
      %1161 = vmatpush1.msra.mxu0 0.0
      %1162 = vmatprep.subr.mxu0 0.0
      %1163 = vmatpush1.msra.mxu0 0.0
      %1164 = vmatprep.subr.mxu0 0.0
      %1165 = vmatpush1.msra.mxu0 0.0
      %1166 = vmatprep.subr.mxu0 0.0
      %1167 = vmatpush1.msra.mxu0 0.0
      %1168 = vmatprep.subr.mxu0 0.0
      %1169 = vmatpush1.msra.mxu0 0.0
      %1170 = vmatprep.subr.mxu0 0.0
      %1171 = vmatpush1.msra.mxu0 0.0
      %1172 = vmatprep.subr.mxu0 0.0
      %1173 = vmatpush1.msra.mxu0 0.0
      %1174 = vmatprep.mubr.f32.mxu0 0.0
      %1175 = vmatmul.mubr.f32.gmra.mrb[0].mxu0 %v1085
      %v1176 = vpop.f32.mrb[0].mxu0
      %v1177 = vadd.f32 0.0, %v1176
      %v1178 = vpop.f32.mrb[0].mxu0
      %1179 = vmatprep.mubr.f32.mxu0 0.0
      %1180 = vmatmul.mubr.f32.gmra.mrb[0].mxu0 %v1086
      %v1181 = vpop.f32.mrb[0].mxu0
      %v1182 = vadd.f32 0.0, %v1181
      %v1183 = vpop.f32.mrb[0].mxu0
      %1184 = vmatprep.mubr.f32.mxu0 0.0
      %1185 = vmatmul.mubr.f32.gmra.mrb[0].mxu0 %v1087
      %v1186 = vpop.f32.mrb[0].mxu0
      %v1187 = vadd.f32 0.0, %v1186
      %v1188 = vpop.f32.mrb[0].mxu0
      %1189 = vmatprep.mubr.f32.mxu0 0.0
      %1190 = vmatmul.mubr.f32.gmra.mrb[0].mxu0 %v1088
      %v1191 = vpop.f32.mrb[0].mxu0
      %v1192 = vadd.f32 0.0, %v1191
      %v1193 = vpop.f32.mrb[0].mxu0
      %1194 = vmatprep.mubr.f32.mxu0 0.0
      %1195 = vmatmul.mubr.f32.gmra.mrb[0].mxu0 %v1089
      %v1196 = vpop.f32.mrb[0].mxu0
      %v1197 = vadd.f32 0.0, %v1196
      %v1198 = vpop.f32.mrb[0].mxu0
      %1199 = vmatprep.mubr.f32.mxu0 0.0
      %1200 = vmatmul.mubr.f32.gmra.mrb[0].mxu0 %v1090
      %v1201 = vpop.f32.mrb[0].mxu0
      %v1202 = vadd.f32 0.0, %v1201
      %v1203 = vpop.f32.mrb[0].mxu0
      %1204 = vmatprep.mubr.f32.mxu0 0.0
      %1205 = vmatmul.mubr.f32.gmra.mrb[0].mxu0 %v1091
      %v1206 = vpop.f32.mrb[0].mxu0
      %v1207 = vadd.f32 0.0, %v1206
      %v1208 = vpop.f32.mrb[0].mxu0
      %1209 = vmatprep.mubr.f32.mxu0 0.0
      %1210 = vmatmul.mubr.f32.gmra.mrb[0].mxu0 %v1092
      %v1211 = vpop.f32.mrb[0].mxu0
      %v1212 = vadd.f32 0.0, %v1211
      %v1213 = vpop.f32.mrb[0].mxu0
      %1214 = vdwg.mxu0
      %v1215 = vadd.f32 %v1077, %v1177
      %v1216 = vadd.f32 %v1078, %v1182
      %v1217 = vadd.f32 %v1079, %v1187
      %v1218 = vadd.f32 %v1080, %v1192
      %v1219 = vadd.f32 %v1081, %v1197
      %v1220 = vadd.f32 %v1082, %v1202
      %v1221 = vadd.f32 %v1083, %v1207
      %v1222 = vadd.f32 %v1084, %v1212
      %v1223 = vld [vmem:[%s493 + $0x2] sm:$0xff]
      %v1224 = vld [vmem:[%s493 + $0xa] sm:$0xff]
      %v1225 = vld [vmem:[%s493 + $0x1a] sm:$0xff]
      %v1226 = vld [vmem:[%s493 + $0x22] sm:$0xff]
      %v1227 = vld [vmem:[%s493 + $0x32] sm:$0xff]
      %v1228 = vld [vmem:[%s493 + $0x3a] sm:$0xff]
      %v1229 = vld [vmem:[%s493 + $0x4a] sm:$0xff]
      %v1230 = vld [vmem:[%s493 + $0x52] sm:$0xff]
      %s1231 = scalar_lea.vmem %s6, 640
      %v1232 = vld [vmem:[%s1231] sm:$0xff]
      %v1233 = vld [vmem:[%s1231 + $0x8] sm:$0xff]
      %v1234 = vld [vmem:[%s1231 + $0x10] sm:$0xff]
      %v1235 = vld [vmem:[%s1231 + $0x18] sm:$0xff]
      %v1236 = vld [vmem:[%s1231 + $0x20] sm:$0xff]
      %v1237 = vld [vmem:[%s1231 + $0x28] sm:$0xff]
      %v1238 = vld [vmem:[%s1231 + $0x30] sm:$0xff]
      %v1239 = vld [vmem:[%s1231 + $0x38] sm:$0xff]
      %v1240 = vld [vmem:[%s1231 + $0x40] sm:$0xff]
      %v1241 = vld [vmem:[%s1231 + $0x48] sm:$0xff]
      %v1242 = vld [vmem:[%s1231 + $0x50] sm:$0xff]
      %v1243 = vld [vmem:[%s1231 + $0x58] sm:$0xff]
      %v1244 = vld [vmem:[%s1231 + $0x60] sm:$0xff]
      %v1245 = vld [vmem:[%s1231 + $0x68] sm:$0xff]
      %v1246 = vld [vmem:[%s1231 + $0x70] sm:$0xff]
      %v1247 = vld [vmem:[%s1231 + $0x78] sm:$0xff]
      %1248 = vmatprep.subr.mxu0 0.0
      %1249 = vmatpush1.msra.mxu0 %v1232
      %1250 = vmatprep.subr.mxu0 0.0
      %1251 = vmatpush1.msra.mxu0 %v1233
      %1252 = vmatprep.subr.mxu0 0.0
      %1253 = vmatpush1.msra.mxu0 %v1234
      %1254 = vmatprep.subr.mxu0 0.0
      %1255 = vmatpush1.msra.mxu0 %v1235
      %1256 = vmatprep.subr.mxu0 0.0
      %1257 = vmatpush1.msra.mxu0 %v1236
      %1258 = vmatprep.subr.mxu0 0.0
      %1259 = vmatpush1.msra.mxu0 %v1237
      %1260 = vmatprep.subr.mxu0 0.0
      %1261 = vmatpush1.msra.mxu0 %v1238
      %1262 = vmatprep.subr.mxu0 0.0
      %1263 = vmatpush1.msra.mxu0 %v1239
      %1264 = vmatprep.subr.mxu0 0.0
      %1265 = vmatpush1.msra.mxu0 %v1240
      %1266 = vmatprep.subr.mxu0 0.0
      %1267 = vmatpush1.msra.mxu0 %v1241
      %1268 = vmatprep.subr.mxu0 0.0
      %1269 = vmatpush1.msra.mxu0 %v1242
      %1270 = vmatprep.subr.mxu0 0.0
      %1271 = vmatpush1.msra.mxu0 %v1243
      %1272 = vmatprep.subr.mxu0 0.0
      %1273 = vmatpush1.msra.mxu0 %v1244
      %1274 = vmatprep.subr.mxu0 0.0
      %1275 = vmatpush1.msra.mxu0 %v1245
      %1276 = vmatprep.subr.mxu0 0.0
      %1277 = vmatpush1.msra.mxu0 %v1246
      %1278 = vmatprep.subr.mxu0 0.0
      %1279 = vmatpush1.msra.mxu0 %v1247
      %1280 = vmatprep.subr.mxu0 0.0
      %1281 = vmatpush1.msra.mxu0 0.0
      %1282 = vmatprep.subr.mxu0 0.0
      %1283 = vmatpush1.msra.mxu0 0.0
      %1284 = vmatprep.subr.mxu0 0.0
      %1285 = vmatpush1.msra.mxu0 0.0
      %1286 = vmatprep.subr.mxu0 0.0
      %1287 = vmatpush1.msra.mxu0 0.0
      %1288 = vmatprep.subr.mxu0 0.0
      %1289 = vmatpush1.msra.mxu0 0.0
      %1290 = vmatprep.subr.mxu0 0.0
      %1291 = vmatpush1.msra.mxu0 0.0
      %1292 = vmatprep.subr.mxu0 0.0
      %1293 = vmatpush1.msra.mxu0 0.0
      %1294 = vmatprep.subr.mxu0 0.0
      %1295 = vmatpush1.msra.mxu0 0.0
      %1296 = vmatprep.subr.mxu0 0.0
      %1297 = vmatpush1.msra.mxu0 0.0
      %1298 = vmatprep.subr.mxu0 0.0
      %1299 = vmatpush1.msra.mxu0 0.0
      %1300 = vmatprep.subr.mxu0 0.0
      %1301 = vmatpush1.msra.mxu0 0.0
      %1302 = vmatprep.subr.mxu0 0.0
      %1303 = vmatpush1.msra.mxu0 0.0
      %1304 = vmatprep.subr.mxu0 0.0
      %1305 = vmatpush1.msra.mxu0 0.0
      %1306 = vmatprep.subr.mxu0 0.0
      %1307 = vmatpush1.msra.mxu0 0.0
      %1308 = vmatprep.subr.mxu0 0.0
      %1309 = vmatpush1.msra.mxu0 0.0
      %1310 = vmatprep.subr.mxu0 0.0
      %1311 = vmatpush1.msra.mxu0 0.0
      %1312 = vmatprep.mubr.f32.mxu0 0.0
      %1313 = vmatmul.mubr.f32.gmra.mrb[0].mxu0 %v1223
      %v1314 = vpop.f32.mrb[0].mxu0
      %v1315 = vadd.f32 0.0, %v1314
      %v1316 = vpop.f32.mrb[0].mxu0
      %1317 = vmatprep.mubr.f32.mxu0 0.0
      %1318 = vmatmul.mubr.f32.gmra.mrb[0].mxu0 %v1224
      %v1319 = vpop.f32.mrb[0].mxu0
      %v1320 = vadd.f32 0.0, %v1319
      %v1321 = vpop.f32.mrb[0].mxu0
      %1322 = vmatprep.mubr.f32.mxu0 0.0
      %1323 = vmatmul.mubr.f32.gmra.mrb[0].mxu0 %v1225
      %v1324 = vpop.f32.mrb[0].mxu0
      %v1325 = vadd.f32 0.0, %v1324
      %v1326 = vpop.f32.mrb[0].mxu0
      %1327 = vmatprep.mubr.f32.mxu0 0.0
      %1328 = vmatmul.mubr.f32.gmra.mrb[0].mxu0 %v1226
      %v1329 = vpop.f32.mrb[0].mxu0
      %v1330 = vadd.f32 0.0, %v1329
      %v1331 = vpop.f32.mrb[0].mxu0
      %1332 = vmatprep.mubr.f32.mxu0 0.0
      %1333 = vmatmul.mubr.f32.gmra.mrb[0].mxu0 %v1227
      %v1334 = vpop.f32.mrb[0].mxu0
      %v1335 = vadd.f32 0.0, %v1334
      %v1336 = vpop.f32.mrb[0].mxu0
      %1337 = vmatprep.mubr.f32.mxu0 0.0
      %1338 = vmatmul.mubr.f32.gmra.mrb[0].mxu0 %v1228
      %v1339 = vpop.f32.mrb[0].mxu0
      %v1340 = vadd.f32 0.0, %v1339
      %v1341 = vpop.f32.mrb[0].mxu0
      %1342 = vmatprep.mubr.f32.mxu0 0.0
      %1343 = vmatmul.mubr.f32.gmra.mrb[0].mxu0 %v1229
      %v1344 = vpop.f32.mrb[0].mxu0
      %v1345 = vadd.f32 0.0, %v1344
      %v1346 = vpop.f32.mrb[0].mxu0
      %1347 = vmatprep.mubr.f32.mxu0 0.0
      %1348 = vmatmul.mubr.f32.gmra.mrb[0].mxu0 %v1230
      %v1349 = vpop.f32.mrb[0].mxu0
      %v1350 = vadd.f32 0.0, %v1349
      %v1351 = vpop.f32.mrb[0].mxu0
      %1352 = vdwg.mxu0
      %v1353 = vadd.f32 %v1215, %v1315
      %v1354 = vadd.f32 %v1216, %v1320
      %v1355 = vadd.f32 %v1217, %v1325
      %v1356 = vadd.f32 %v1218, %v1330
      %v1357 = vadd.f32 %v1219, %v1335
      %v1358 = vadd.f32 %v1220, %v1340
      %v1359 = vadd.f32 %v1221, %v1345
      %v1360 = vadd.f32 %v1222, %v1350
      %v1361 = vld [vmem:[%s504] sm:$0xff]
      %v1362 = vld [vmem:[%s504 + $0x8] sm:$0xff]
      %v1363 = vld [vmem:[%s504 + $0x18] sm:$0xff]
      %v1364 = vld [vmem:[%s504 + $0x20] sm:$0xff]
      %v1365 = vld [vmem:[%s504 + $0x30] sm:$0xff]
      %v1366 = vld [vmem:[%s504 + $0x38] sm:$0xff]
      %v1367 = vld [vmem:[%s504 + $0x48] sm:$0xff]
      %v1368 = vld [vmem:[%s504 + $0x50] sm:$0xff]
      %s1369 = scalar_lea.vmem %s6, 768
      %v1370 = vld [vmem:[%s1369] sm:$0xff]
      %v1371 = vld [vmem:[%s1369 + $0x8] sm:$0xff]
      %v1372 = vld [vmem:[%s1369 + $0x10] sm:$0xff]
      %v1373 = vld [vmem:[%s1369 + $0x18] sm:$0xff]
      %v1374 = vld [vmem:[%s1369 + $0x20] sm:$0xff]
      %v1375 = vld [vmem:[%s1369 + $0x28] sm:$0xff]
      %v1376 = vld [vmem:[%s1369 + $0x30] sm:$0xff]
      %v1377 = vld [vmem:[%s1369 + $0x38] sm:$0xff]
      %v1378 = vld [vmem:[%s1369 + $0x40] sm:$0xff]
      %v1379 = vld [vmem:[%s1369 + $0x48] sm:$0xff]
      %v1380 = vld [vmem:[%s1369 + $0x50] sm:$0xff]
      %v1381 = vld [vmem:[%s1369 + $0x58] sm:$0xff]
      %v1382 = vld [vmem:[%s1369 + $0x60] sm:$0xff]
      %v1383 = vld [vmem:[%s1369 + $0x68] sm:$0xff]
      %v1384 = vld [vmem:[%s1369 + $0x70] sm:$0xff]
      %v1385 = vld [vmem:[%s1369 + $0x78] sm:$0xff]
      %1386 = vmatprep.subr.mxu0 0.0
      %1387 = vmatpush1.msra.mxu0 %v1370
      %1388 = vmatprep.subr.mxu0 0.0
      %1389 = vmatpush1.msra.mxu0 %v1371
      %1390 = vmatprep.subr.mxu0 0.0
      %1391 = vmatpush1.msra.mxu0 %v1372
      %1392 = vmatprep.subr.mxu0 0.0
      %1393 = vmatpush1.msra.mxu0 %v1373
      %1394 = vmatprep.subr.mxu0 0.0
      %1395 = vmatpush1.msra.mxu0 %v1374
      %1396 = vmatprep.subr.mxu0 0.0
      %1397 = vmatpush1.msra.mxu0 %v1375
      %1398 = vmatprep.subr.mxu0 0.0
      %1399 = vmatpush1.msra.mxu0 %v1376
      %1400 = vmatprep.subr.mxu0 0.0
      %1401 = vmatpush1.msra.mxu0 %v1377
      %1402 = vmatprep.subr.mxu0 0.0
      %1403 = vmatpush1.msra.mxu0 %v1378
      %1404 = vmatprep.subr.mxu0 0.0
      %1405 = vmatpush1.msra.mxu0 %v1379
      %1406 = vmatprep.subr.mxu0 0.0
      %1407 = vmatpush1.msra.mxu0 %v1380
      %1408 = vmatprep.subr.mxu0 0.0
      %1409 = vmatpush1.msra.mxu0 %v1381
      %1410 = vmatprep.subr.mxu0 0.0
      %1411 = vmatpush1.msra.mxu0 %v1382
      %1412 = vmatprep.subr.mxu0 0.0
      %1413 = vmatpush1.msra.mxu0 %v1383
      %1414 = vmatprep.subr.mxu0 0.0
      %1415 = vmatpush1.msra.mxu0 %v1384
      %1416 = vmatprep.subr.mxu0 0.0
      %1417 = vmatpush1.msra.mxu0 %v1385
      %1418 = vmatprep.subr.mxu0 0.0
      %1419 = vmatpush1.msra.mxu0 0.0
      %1420 = vmatprep.subr.mxu0 0.0
      %1421 = vmatpush1.msra.mxu0 0.0
      %1422 = vmatprep.subr.mxu0 0.0
      %1423 = vmatpush1.msra.mxu0 0.0
      %1424 = vmatprep.subr.mxu0 0.0
      %1425 = vmatpush1.msra.mxu0 0.0
      %1426 = vmatprep.subr.mxu0 0.0
      %1427 = vmatpush1.msra.mxu0 0.0
      %1428 = vmatprep.subr.mxu0 0.0
      %1429 = vmatpush1.msra.mxu0 0.0
      %1430 = vmatprep.subr.mxu0 0.0
      %1431 = vmatpush1.msra.mxu0 0.0
      %1432 = vmatprep.subr.mxu0 0.0
      %1433 = vmatpush1.msra.mxu0 0.0
      %1434 = vmatprep.subr.mxu0 0.0
      %1435 = vmatpush1.msra.mxu0 0.0
      %1436 = vmatprep.subr.mxu0 0.0
      %1437 = vmatpush1.msra.mxu0 0.0
      %1438 = vmatprep.subr.mxu0 0.0
      %1439 = vmatpush1.msra.mxu0 0.0
      %1440 = vmatprep.subr.mxu0 0.0
      %1441 = vmatpush1.msra.mxu0 0.0
      %1442 = vmatprep.subr.mxu0 0.0
      %1443 = vmatpush1.msra.mxu0 0.0
      %1444 = vmatprep.subr.mxu0 0.0
      %1445 = vmatpush1.msra.mxu0 0.0
      %1446 = vmatprep.subr.mxu0 0.0
      %1447 = vmatpush1.msra.mxu0 0.0
      %1448 = vmatprep.subr.mxu0 0.0
      %1449 = vmatpush1.msra.mxu0 0.0
      %1450 = vmatprep.mubr.f32.mxu0 0.0
      %1451 = vmatmul.mubr.f32.gmra.mrb[0].mxu0 %v1361
      %v1452 = vpop.f32.mrb[0].mxu0
      %v1453 = vadd.f32 0.0, %v1452
      %v1454 = vpop.f32.mrb[0].mxu0
      %1455 = vmatprep.mubr.f32.mxu0 0.0
      %1456 = vmatmul.mubr.f32.gmra.mrb[0].mxu0 %v1362
      %v1457 = vpop.f32.mrb[0].mxu0
      %v1458 = vadd.f32 0.0, %v1457
      %v1459 = vpop.f32.mrb[0].mxu0
      %1460 = vmatprep.mubr.f32.mxu0 0.0
      %1461 = vmatmul.mubr.f32.gmra.mrb[0].mxu0 %v1363
      %v1462 = vpop.f32.mrb[0].mxu0
      %v1463 = vadd.f32 0.0, %v1462
      %v1464 = vpop.f32.mrb[0].mxu0
      %1465 = vmatprep.mubr.f32.mxu0 0.0
      %1466 = vmatmul.mubr.f32.gmra.mrb[0].mxu0 %v1364
      %v1467 = vpop.f32.mrb[0].mxu0
      %v1468 = vadd.f32 0.0, %v1467
      %v1469 = vpop.f32.mrb[0].mxu0
      %1470 = vmatprep.mubr.f32.mxu0 0.0
      %1471 = vmatmul.mubr.f32.gmra.mrb[0].mxu0 %v1365
      %v1472 = vpop.f32.mrb[0].mxu0
      %v1473 = vadd.f32 0.0, %v1472
      %v1474 = vpop.f32.mrb[0].mxu0
      %1475 = vmatprep.mubr.f32.mxu0 0.0
      %1476 = vmatmul.mubr.f32.gmra.mrb[0].mxu0 %v1366
      %v1477 = vpop.f32.mrb[0].mxu0
      %v1478 = vadd.f32 0.0, %v1477
      %v1479 = vpop.f32.mrb[0].mxu0
      %1480 = vmatprep.mubr.f32.mxu0 0.0
      %1481 = vmatmul.mubr.f32.gmra.mrb[0].mxu0 %v1367
      %v1482 = vpop.f32.mrb[0].mxu0
      %v1483 = vadd.f32 0.0, %v1482
      %v1484 = vpop.f32.mrb[0].mxu0
      %1485 = vmatprep.mubr.f32.mxu0 0.0
      %1486 = vmatmul.mubr.f32.gmra.mrb[0].mxu0 %v1368
      %v1487 = vpop.f32.mrb[0].mxu0
      %v1488 = vadd.f32 0.0, %v1487
      %v1489 = vpop.f32.mrb[0].mxu0
      %1490 = vdwg.mxu0
      %v1491 = vadd.f32 %v1353, %v1453
      %v1492 = vadd.f32 %v1354, %v1458
      %v1493 = vadd.f32 %v1355, %v1463
      %v1494 = vadd.f32 %v1356, %v1468
      %v1495 = vadd.f32 %v1357, %v1473
      %v1496 = vadd.f32 %v1358, %v1478
      %v1497 = vadd.f32 %v1359, %v1483
      %v1498 = vadd.f32 %v1360, %v1488
      %v1499 = vld [vmem:[%s504 + $0x1] sm:$0xff]
      %v1500 = vld [vmem:[%s504 + $0x9] sm:$0xff]
      %v1501 = vld [vmem:[%s504 + $0x19] sm:$0xff]
      %v1502 = vld [vmem:[%s504 + $0x21] sm:$0xff]
      %v1503 = vld [vmem:[%s504 + $0x31] sm:$0xff]
      %v1504 = vld [vmem:[%s504 + $0x39] sm:$0xff]
      %v1505 = vld [vmem:[%s504 + $0x49] sm:$0xff]
      %v1506 = vld [vmem:[%s504 + $0x51] sm:$0xff]
      %s1507 = scalar_lea.vmem %s6, 896
      %v1508 = vld [vmem:[%s1507] sm:$0xff]
      %v1509 = vld [vmem:[%s1507 + $0x8] sm:$0xff]
      %v1510 = vld [vmem:[%s1507 + $0x10] sm:$0xff]
      %v1511 = vld [vmem:[%s1507 + $0x18] sm:$0xff]
      %v1512 = vld [vmem:[%s1507 + $0x20] sm:$0xff]
      %v1513 = vld [vmem:[%s1507 + $0x28] sm:$0xff]
      %v1514 = vld [vmem:[%s1507 + $0x30] sm:$0xff]
      %v1515 = vld [vmem:[%s1507 + $0x38] sm:$0xff]
      %v1516 = vld [vmem:[%s1507 + $0x40] sm:$0xff]
      %v1517 = vld [vmem:[%s1507 + $0x48] sm:$0xff]
      %v1518 = vld [vmem:[%s1507 + $0x50] sm:$0xff]
      %v1519 = vld [vmem:[%s1507 + $0x58] sm:$0xff]
      %v1520 = vld [vmem:[%s1507 + $0x60] sm:$0xff]
      %v1521 = vld [vmem:[%s1507 + $0x68] sm:$0xff]
      %v1522 = vld [vmem:[%s1507 + $0x70] sm:$0xff]
      %v1523 = vld [vmem:[%s1507 + $0x78] sm:$0xff]
      %1524 = vmatprep.subr.mxu0 0.0
      %1525 = vmatpush1.msra.mxu0 %v1508
      %1526 = vmatprep.subr.mxu0 0.0
      %1527 = vmatpush1.msra.mxu0 %v1509
      %1528 = vmatprep.subr.mxu0 0.0
      %1529 = vmatpush1.msra.mxu0 %v1510
      %1530 = vmatprep.subr.mxu0 0.0
      %1531 = vmatpush1.msra.mxu0 %v1511
      %1532 = vmatprep.subr.mxu0 0.0
      %1533 = vmatpush1.msra.mxu0 %v1512
      %1534 = vmatprep.subr.mxu0 0.0
      %1535 = vmatpush1.msra.mxu0 %v1513
      %1536 = vmatprep.subr.mxu0 0.0
      %1537 = vmatpush1.msra.mxu0 %v1514
      %1538 = vmatprep.subr.mxu0 0.0
      %1539 = vmatpush1.msra.mxu0 %v1515
      %1540 = vmatprep.subr.mxu0 0.0
      %1541 = vmatpush1.msra.mxu0 %v1516
      %1542 = vmatprep.subr.mxu0 0.0
      %1543 = vmatpush1.msra.mxu0 %v1517
      %1544 = vmatprep.subr.mxu0 0.0
      %1545 = vmatpush1.msra.mxu0 %v1518
      %1546 = vmatprep.subr.mxu0 0.0
      %1547 = vmatpush1.msra.mxu0 %v1519
      %1548 = vmatprep.subr.mxu0 0.0
      %1549 = vmatpush1.msra.mxu0 %v1520
      %1550 = vmatprep.subr.mxu0 0.0
      %1551 = vmatpush1.msra.mxu0 %v1521
      %1552 = vmatprep.subr.mxu0 0.0
      %1553 = vmatpush1.msra.mxu0 %v1522
      %1554 = vmatprep.subr.mxu0 0.0
      %1555 = vmatpush1.msra.mxu0 %v1523
      %1556 = vmatprep.subr.mxu0 0.0
      %1557 = vmatpush1.msra.mxu0 0.0
      %1558 = vmatprep.subr.mxu0 0.0
      %1559 = vmatpush1.msra.mxu0 0.0
      %1560 = vmatprep.subr.mxu0 0.0
      %1561 = vmatpush1.msra.mxu0 0.0
      %1562 = vmatprep.subr.mxu0 0.0
      %1563 = vmatpush1.msra.mxu0 0.0
      %1564 = vmatprep.subr.mxu0 0.0
      %1565 = vmatpush1.msra.mxu0 0.0
      %1566 = vmatprep.subr.mxu0 0.0
      %1567 = vmatpush1.msra.mxu0 0.0
      %1568 = vmatprep.subr.mxu0 0.0
      %1569 = vmatpush1.msra.mxu0 0.0
      %1570 = vmatprep.subr.mxu0 0.0
      %1571 = vmatpush1.msra.mxu0 0.0
      %1572 = vmatprep.subr.mxu0 0.0
      %1573 = vmatpush1.msra.mxu0 0.0
      %1574 = vmatprep.subr.mxu0 0.0
      %1575 = vmatpush1.msra.mxu0 0.0
      %1576 = vmatprep.subr.mxu0 0.0
      %1577 = vmatpush1.msra.mxu0 0.0
      %1578 = vmatprep.subr.mxu0 0.0
      %1579 = vmatpush1.msra.mxu0 0.0
      %1580 = vmatprep.subr.mxu0 0.0
      %1581 = vmatpush1.msra.mxu0 0.0
      %1582 = vmatprep.subr.mxu0 0.0
      %1583 = vmatpush1.msra.mxu0 0.0
      %1584 = vmatprep.subr.mxu0 0.0
      %1585 = vmatpush1.msra.mxu0 0.0
      %1586 = vmatprep.subr.mxu0 0.0
      %1587 = vmatpush1.msra.mxu0 0.0
      %1588 = vmatprep.mubr.f32.mxu0 0.0
      %1589 = vmatmul.mubr.f32.gmra.mrb[0].mxu0 %v1499
      %v1590 = vpop.f32.mrb[0].mxu0
      %v1591 = vadd.f32 0.0, %v1590
      %v1592 = vpop.f32.mrb[0].mxu0
      %1593 = vmatprep.mubr.f32.mxu0 0.0
      %1594 = vmatmul.mubr.f32.gmra.mrb[0].mxu0 %v1500
      %v1595 = vpop.f32.mrb[0].mxu0
      %v1596 = vadd.f32 0.0, %v1595
      %v1597 = vpop.f32.mrb[0].mxu0
      %1598 = vmatprep.mubr.f32.mxu0 0.0
      %1599 = vmatmul.mubr.f32.gmra.mrb[0].mxu0 %v1501
      %v1600 = vpop.f32.mrb[0].mxu0
      %v1601 = vadd.f32 0.0, %v1600
      %v1602 = vpop.f32.mrb[0].mxu0
      %1603 = vmatprep.mubr.f32.mxu0 0.0
      %1604 = vmatmul.mubr.f32.gmra.mrb[0].mxu0 %v1502
      %v1605 = vpop.f32.mrb[0].mxu0
      %v1606 = vadd.f32 0.0, %v1605
      %v1607 = vpop.f32.mrb[0].mxu0
      %1608 = vmatprep.mubr.f32.mxu0 0.0
      %1609 = vmatmul.mubr.f32.gmra.mrb[0].mxu0 %v1503
      %v1610 = vpop.f32.mrb[0].mxu0
      %v1611 = vadd.f32 0.0, %v1610
      %v1612 = vpop.f32.mrb[0].mxu0
      %1613 = vmatprep.mubr.f32.mxu0 0.0
      %1614 = vmatmul.mubr.f32.gmra.mrb[0].mxu0 %v1504
      %v1615 = vpop.f32.mrb[0].mxu0
      %v1616 = vadd.f32 0.0, %v1615
      %v1617 = vpop.f32.mrb[0].mxu0
      %1618 = vmatprep.mubr.f32.mxu0 0.0
      %1619 = vmatmul.mubr.f32.gmra.mrb[0].mxu0 %v1505
      %v1620 = vpop.f32.mrb[0].mxu0
      %v1621 = vadd.f32 0.0, %v1620
      %v1622 = vpop.f32.mrb[0].mxu0
      %1623 = vmatprep.mubr.f32.mxu0 0.0
      %1624 = vmatmul.mubr.f32.gmra.mrb[0].mxu0 %v1506
      %v1625 = vpop.f32.mrb[0].mxu0
      %v1626 = vadd.f32 0.0, %v1625
      %v1627 = vpop.f32.mrb[0].mxu0
      %1628 = vdwg.mxu0
      %v1629 = vadd.f32 %v1491, %v1591
      %v1630 = vadd.f32 %v1492, %v1596
      %v1631 = vadd.f32 %v1493, %v1601
      %v1632 = vadd.f32 %v1494, %v1606
      %v1633 = vadd.f32 %v1495, %v1611
      %v1634 = vadd.f32 %v1496, %v1616
      %v1635 = vadd.f32 %v1497, %v1621
      %v1636 = vadd.f32 %v1498, %v1626
      %v1637 = vld [vmem:[%s504 + $0x2] sm:$0xff]
      %v1638 = vld [vmem:[%s504 + $0xa] sm:$0xff]
      %v1639 = vld [vmem:[%s504 + $0x1a] sm:$0xff]
      %v1640 = vld [vmem:[%s504 + $0x22] sm:$0xff]
      %v1641 = vld [vmem:[%s504 + $0x32] sm:$0xff]
      %v1642 = vld [vmem:[%s504 + $0x3a] sm:$0xff]
      %v1643 = vld [vmem:[%s504 + $0x4a] sm:$0xff]
      %v1644 = vld [vmem:[%s504 + $0x52] sm:$0xff]
      %s1645 = scalar_lea.vmem %s6, 1024
      %v1646 = vld [vmem:[%s1645] sm:$0xff]
      %v1647 = vld [vmem:[%s1645 + $0x8] sm:$0xff]
      %v1648 = vld [vmem:[%s1645 + $0x10] sm:$0xff]
      %v1649 = vld [vmem:[%s1645 + $0x18] sm:$0xff]
      %v1650 = vld [vmem:[%s1645 + $0x20] sm:$0xff]
      %v1651 = vld [vmem:[%s1645 + $0x28] sm:$0xff]
      %v1652 = vld [vmem:[%s1645 + $0x30] sm:$0xff]
      %v1653 = vld [vmem:[%s1645 + $0x38] sm:$0xff]
      %v1654 = vld [vmem:[%s1645 + $0x40] sm:$0xff]
      %v1655 = vld [vmem:[%s1645 + $0x48] sm:$0xff]
      %v1656 = vld [vmem:[%s1645 + $0x50] sm:$0xff]
      %v1657 = vld [vmem:[%s1645 + $0x58] sm:$0xff]
      %v1658 = vld [vmem:[%s1645 + $0x60] sm:$0xff]
      %v1659 = vld [vmem:[%s1645 + $0x68] sm:$0xff]
      %v1660 = vld [vmem:[%s1645 + $0x70] sm:$0xff]
      %v1661 = vld [vmem:[%s1645 + $0x78] sm:$0xff]
      %1662 = vmatprep.subr.mxu0 0.0
      %1663 = vmatpush1.msra.mxu0 %v1646
      %1664 = vmatprep.subr.mxu0 0.0
      %1665 = vmatpush1.msra.mxu0 %v1647
      %1666 = vmatprep.subr.mxu0 0.0
      %1667 = vmatpush1.msra.mxu0 %v1648
      %1668 = vmatprep.subr.mxu0 0.0
      %1669 = vmatpush1.msra.mxu0 %v1649
      %1670 = vmatprep.subr.mxu0 0.0
      %1671 = vmatpush1.msra.mxu0 %v1650
      %1672 = vmatprep.subr.mxu0 0.0
      %1673 = vmatpush1.msra.mxu0 %v1651
      %1674 = vmatprep.subr.mxu0 0.0
      %1675 = vmatpush1.msra.mxu0 %v1652
      %1676 = vmatprep.subr.mxu0 0.0
      %1677 = vmatpush1.msra.mxu0 %v1653
      %1678 = vmatprep.subr.mxu0 0.0
      %1679 = vmatpush1.msra.mxu0 %v1654
      %1680 = vmatprep.subr.mxu0 0.0
      %1681 = vmatpush1.msra.mxu0 %v1655
      %1682 = vmatprep.subr.mxu0 0.0
      %1683 = vmatpush1.msra.mxu0 %v1656
      %1684 = vmatprep.subr.mxu0 0.0
      %1685 = vmatpush1.msra.mxu0 %v1657
      %1686 = vmatprep.subr.mxu0 0.0
      %1687 = vmatpush1.msra.mxu0 %v1658
      %1688 = vmatprep.subr.mxu0 0.0
      %1689 = vmatpush1.msra.mxu0 %v1659
      %1690 = vmatprep.subr.mxu0 0.0
      %1691 = vmatpush1.msra.mxu0 %v1660
      %1692 = vmatprep.subr.mxu0 0.0
      %1693 = vmatpush1.msra.mxu0 %v1661
      %1694 = vmatprep.subr.mxu0 0.0
      %1695 = vmatpush1.msra.mxu0 0.0
      %1696 = vmatprep.subr.mxu0 0.0
      %1697 = vmatpush1.msra.mxu0 0.0
      %1698 = vmatprep.subr.mxu0 0.0
      %1699 = vmatpush1.msra.mxu0 0.0
      %1700 = vmatprep.subr.mxu0 0.0
      %1701 = vmatpush1.msra.mxu0 0.0
      %1702 = vmatprep.subr.mxu0 0.0
      %1703 = vmatpush1.msra.mxu0 0.0
      %1704 = vmatprep.subr.mxu0 0.0
      %1705 = vmatpush1.msra.mxu0 0.0
      %1706 = vmatprep.subr.mxu0 0.0
      %1707 = vmatpush1.msra.mxu0 0.0
      %1708 = vmatprep.subr.mxu0 0.0
      %1709 = vmatpush1.msra.mxu0 0.0
      %1710 = vmatprep.subr.mxu0 0.0
      %1711 = vmatpush1.msra.mxu0 0.0
      %1712 = vmatprep.subr.mxu0 0.0
      %1713 = vmatpush1.msra.mxu0 0.0
      %1714 = vmatprep.subr.mxu0 0.0
      %1715 = vmatpush1.msra.mxu0 0.0
      %1716 = vmatprep.subr.mxu0 0.0
      %1717 = vmatpush1.msra.mxu0 0.0
      %1718 = vmatprep.subr.mxu0 0.0
      %1719 = vmatpush1.msra.mxu0 0.0
      %1720 = vmatprep.subr.mxu0 0.0
      %1721 = vmatpush1.msra.mxu0 0.0
      %1722 = vmatprep.subr.mxu0 0.0
      %1723 = vmatpush1.msra.mxu0 0.0
      %1724 = vmatprep.subr.mxu0 0.0
      %1725 = vmatpush1.msra.mxu0 0.0
      %1726 = vmatprep.mubr.f32.mxu0 0.0
      %1727 = vmatmul.mubr.f32.gmra.mrb[0].mxu0 %v1637
      %v1728 = vpop.f32.mrb[0].mxu0
      %v1729 = vadd.f32 0.0, %v1728
      %v1730 = vpop.f32.mrb[0].mxu0
      %1731 = vmatprep.mubr.f32.mxu0 0.0
      %1732 = vmatmul.mubr.f32.gmra.mrb[0].mxu0 %v1638
      %v1733 = vpop.f32.mrb[0].mxu0
      %v1734 = vadd.f32 0.0, %v1733
      %v1735 = vpop.f32.mrb[0].mxu0
      %1736 = vmatprep.mubr.f32.mxu0 0.0
      %1737 = vmatmul.mubr.f32.gmra.mrb[0].mxu0 %v1639
      %v1738 = vpop.f32.mrb[0].mxu0
      %v1739 = vadd.f32 0.0, %v1738
      %v1740 = vpop.f32.mrb[0].mxu0
      %1741 = vmatprep.mubr.f32.mxu0 0.0
      %1742 = vmatmul.mubr.f32.gmra.mrb[0].mxu0 %v1640
      %v1743 = vpop.f32.mrb[0].mxu0
      %v1744 = vadd.f32 0.0, %v1743
      %v1745 = vpop.f32.mrb[0].mxu0
      %1746 = vmatprep.mubr.f32.mxu0 0.0
      %1747 = vmatmul.mubr.f32.gmra.mrb[0].mxu0 %v1641
      %v1748 = vpop.f32.mrb[0].mxu0
      %v1749 = vadd.f32 0.0, %v1748
      %v1750 = vpop.f32.mrb[0].mxu0
      %1751 = vmatprep.mubr.f32.mxu0 0.0
      %1752 = vmatmul.mubr.f32.gmra.mrb[0].mxu0 %v1642
      %v1753 = vpop.f32.mrb[0].mxu0
      %v1754 = vadd.f32 0.0, %v1753
      %v1755 = vpop.f32.mrb[0].mxu0
      %1756 = vmatprep.mubr.f32.mxu0 0.0
      %1757 = vmatmul.mubr.f32.gmra.mrb[0].mxu0 %v1643
      %v1758 = vpop.f32.mrb[0].mxu0
      %v1759 = vadd.f32 0.0, %v1758
      %v1760 = vpop.f32.mrb[0].mxu0
      %1761 = vmatprep.mubr.f32.mxu0 0.0
      %1762 = vmatmul.mubr.f32.gmra.mrb[0].mxu0 %v1644
      %v1763 = vpop.f32.mrb[0].mxu0
      %v1764 = vadd.f32 0.0, %v1763
      %v1765 = vpop.f32.mrb[0].mxu0
      %1766 = vdwg.mxu0
      %v1767 = vadd.f32 %v1629, %v1729
      %v1768 = vadd.f32 %v1630, %v1734
      %v1769 = vadd.f32 %v1631, %v1739
      %v1770 = vadd.f32 %v1632, %v1744
      %v1771 = vadd.f32 %v1633, %v1749
      %v1772 = vadd.f32 %v1634, %v1754
      %v1773 = vadd.f32 %v1635, %v1759
      %v1774 = vadd.f32 %v1636, %v1764
      %v1775 = vld [vmem:[%s5] sm:$0x1]
      %v1777 = vlaneseq
      %v1778 = vshrl.u32 %v1777, 7
      %v1779 = vsub.s32 0, %v1778
      %v1780 = vrot.slane %v1775, %v1779
      %v1782 = vadd.f32 %v1767, %v1780
      %v1783 = vadd.f32 %v1768, %v1780
      %v1784 = vadd.f32 %v1769, %v1780
      %v1785 = vadd.f32 %v1770, %v1780
      %v1786 = vadd.f32 %v1771, %v1780
      %v1787 = vadd.f32 %v1772, %v1780
      %v1788 = vadd.f32 %v1773, %v1780
      %v1789 = vadd.f32 %v1774, %v1780
      %1790 = vst [vmem:[%s445] sm:$0xff] %v1782
      %1791 = vst [vmem:[%s445 + $0x8] sm:$0xff] %v1783
      %1792 = vst [vmem:[%s445 + $0x10] sm:$0xff] %v1784
      %1793 = vst [vmem:[%s445 + $0x18] sm:$0xff] %v1785
      %1794 = vst [vmem:[%s445 + $0x20] sm:$0xff] %v1786
      %1795 = vst [vmem:[%s445 + $0x28] sm:$0xff] %v1787
      %1796 = vst [vmem:[%s445 + $0x30] sm:$0xff] %v1788
      %1797 = vst [vmem:[%s445 + $0x38] sm:$0xff] %v1789
      %s1798 = smul.u32 4, %s23
      %p1799 = scmp.lt.s32.totalorder %s22, 1
      %s1800 = scalar_select %p1799, %s22, 1
      %p1801 = scmp.lt.s32.totalorder %s1798, 15
      %s1802 = scalar_select %p1801, %s1798, 15
      %s1803 = smul.addr %s1802, 2
      %s1804 = smul.addr %s1800, 32
      %s1805 = sadd.s32 %s1803, %s1804
      %s1806 = smul.addr %s1805, 8
      %s1807 = scalar_lea.vmem %s7, %s1806
      // Predicated region
      $region49: #{std_conv_block_skip.3} parent=47 // pred_check
        %p1808 = pneg %p234
      $region50: #{std_conv_block_skip.3} parent=47 // pred_check_branch
        %1810 = sbr.rel (%p1808) target = $region52
      $region51: #{std_conv_block_skip.3} parent=47 // pred_region
        %s1811 = smul.u32 4, %s23
      $region52: #{std_conv_block_skip.3} parent=47 // pred_fallthru
        _
    $region48: #{std_conv_block_skip.3} parent=5 // pred_fallthru
      _
    %p1812 = scmp.le.s32.totalorder 2, %s13
    // Predicated region
    $region53: #{std_conv_block_skip.3} parent=5 // pred_check
      %p1813 = pneg %p1812
    $region54: #{std_conv_block_skip.3} parent=5 // pred_check_branch
      %1815 = sbr.rel (%p1813) target = $region56
    $region55: #{std_conv_block_skip.3} parent=5 // pred_region
      %s1816 = ssub.s32 %s13, 2
      // Predicated region
      $region57: #{std_conv_block_skip.3} parent=55 // pred_check
        %p1817 = pneg %p240
      $region58: #{std_conv_block_skip.3} parent=55 // pred_check_branch
        %1819 = sbr.rel (%p1817) target = $region60
      $region59: #{std_conv_block_skip.3} parent=55 // pred_region
        %s1820 = smul.u32 4, %s25
        %p1821 = scmp.lt.s32.totalorder %s24, 1
        %s1822 = scalar_select %p1821, %s24, 1
        %p1823 = scmp.lt.s32.totalorder %s1820, 15
        %s1824 = scalar_select %p1823, %s1820, 15
        %s1825 = smul.addr %s1824, 2
        %s1826 = smul.addr %s1822, 32
        %s1827 = sadd.s32 %s1825, %s1826
        %s1828 = smul.addr %s1827, 8
        %s1829 = scalar_lea.vmem %s7, %s1828
      $region60: #{std_conv_block_skip.3} parent=55 // pred_fallthru
        _
    $region56: #{std_conv_block_skip.3} parent=5 // pred_fallthru
      _
  $region6: #{std_conv_block_skip.3} parent=0 // loop_footer
    %s17 = sadd.s32 1, %s13
  $region7: #{std_conv_block_skip.3} parent=0 // loop_footer_branch
    %12 = sbr.rel target = $region3
  $region8: #{std_conv_block_skip.3} parent=0 // loop_exit
    _

</llo_original>
